<compile_context>
chip_gen: v7x
topology: tpu7x:2x2x1
jax: 0.10.0
libtpu: 0.0.40
codegen_flags: <defaults>
</compile_context>

<pallas_src>
import functools
import math

import jax
import jax.numpy as jnp
from jax.experimental import pallas as pl
from jax.experimental.pallas import tpu as pltpu

LN_EPS = 1e-6  # nn.LayerNorm(eps=1e-6) in the reference module


def _gelu(x):
    # TODO(synk): torch.nn.functional.gelu defaults to the exact erf form; the
    # tanh approximation is used here (erf is not guaranteed to lower in
    # Mosaic).  Max abs deviation ~1e-3.
    c = math.sqrt(2.0 / math.pi)
    return 0.5 * x * (1.0 + jnp.tanh(c * (x + 0.044715 * x * x * x)))


def _layer_norm(x, gamma, beta):
    mu = jnp.mean(x, axis=-1, keepdims=True)
    xc = x - mu
    var = jnp.mean(xc * xc, axis=-1, keepdims=True)
    return xc * jax.lax.rsqrt(var + LN_EPS) * gamma + beta


def _block_kernel(x_ref,
                  g1_ref, be1_ref,
                  wq_ref, bq_ref, wk_ref, bk_ref, wv_ref, bv_ref,
                  wo_ref, bo_ref,
                  g2_ref, be2_ref,
                  w1_ref, b1_ref, w2_ref, b2_ref,
                  y_ref, p_ref,
                  *, num_heads, head_dim):
    x = x_ref[0]                                     # (S, H) f32

    # ---- attention_norm ----
    xn = _layer_norm(x, g1_ref[...], be1_ref[...])

    # ---- Q, K, V projections (MXU) ----
    q = jnp.dot(xn, wq_ref[...], preferred_element_type=jnp.float32) + bq_ref[...]
    k = jnp.dot(xn, wk_ref[...], preferred_element_type=jnp.float32) + bk_ref[...]
    v = jnp.dot(xn, wv_ref[...], preferred_element_type=jnp.float32) + bv_ref[...]

    scale = 1.0 / math.sqrt(head_dim)
    ctx_parts = []
    for h in range(num_heads):                       # static unroll over heads
        lo, hi = h * head_dim, (h + 1) * head_dim
        qh, kh, vh = q[:, lo:hi], k[:, lo:hi], v[:, lo:hi]
        # scores = qh @ kh^T  (NT dot, contraction on head_dim)
        s = jax.lax.dot_general(qh, kh, (((1,), (1,)), ((), ())),
                                preferred_element_type=jnp.float32) * scale
        m = jnp.max(s, axis=-1, keepdims=True)
        e = jnp.exp(s - m)
        probs = e / jnp.sum(e, axis=-1, keepdims=True)
        p_ref[0, h] = probs                          # attention weights output
        # TODO(synk): attn_dropout is identity at inference.
        ctx_parts.append(jnp.dot(probs, vh, preferred_element_type=jnp.float32))
    ctx = jnp.concatenate(ctx_parts, axis=-1)        # (S, H)

    attn_out = (jnp.dot(ctx, wo_ref[...], preferred_element_type=jnp.float32)
                + bo_ref[...])
    # TODO(synk): proj_dropout is identity at inference.
    x1 = x + attn_out                                # residual 1

    # ---- ffn_norm + Mlp (fc1 -> GELU -> fc2) ----
    xn2 = _layer_norm(x1, g2_ref[...], be2_ref[...])
    h1 = jnp.dot(xn2, w1_ref[...], preferred_element_type=jnp.float32) + b1_ref[...]
    h1 = _gelu(h1)
    # TODO(synk): mlp dropout is identity at inference.
    mlp = jnp.dot(h1, w2_ref[...], preferred_element_type=jnp.float32) + b2_ref[...]
    y_ref[0] = (x1 + mlp).astype(y_ref.dtype)        # residual 2


def block_forward(params, x, config, vis=True):
    """x: (B, S, H) f32.  Returns (y, attention_weights_or_None)."""
    B, S, H = x.shape
    nH = config["num_heads"]
    dh = H // nH
    M = config["mlp_dim"]

    def full(shape):
        return pl.BlockSpec(shape, lambda b, _s=shape: (0,) * len(_s))

    row_h = pl.BlockSpec((1, H), lambda b: (0, 0))
    row_m = pl.BlockSpec((1, M), lambda b: (0, 0))

    in_specs = [
        pl.BlockSpec((1, S, H), lambda b: (b, 0, 0)),   # x
        row_h, row_h,                                   # ln1 gamma, beta
        full((H, H)), row_h,                            # Wq, bq
        full((H, H)), row_h,                            # Wk, bk
        full((H, H)), row_h,                            # Wv, bv
        full((H, H)), row_h,                            # Wo, bo
        row_h, row_h,                                   # ln2 gamma, beta
        full((H, M)), row_m,                            # fc1 W, b
        full((M, H)), row_h,                            # fc2 W, b
    ]
    out_specs = (
        pl.BlockSpec((1, S, H), lambda b: (b, 0, 0)),
        pl.BlockSpec((1, nH, S, S), lambda b: (b, 0, 0, 0)),
    )
    out_shape = (
        jax.ShapeDtypeStruct((B, S, H), jnp.float32),
        jax.ShapeDtypeStruct((B, nH, S, S), jnp.float32),
    )

    y, w = pl.pallas_call(
        functools.partial(_block_kernel, num_heads=nH, head_dim=dh),
        grid=(B,),
        in_specs=in_specs,
        out_specs=out_specs,
        out_shape=out_shape,
        compiler_params=pltpu.CompilerParams(dimension_semantics=("parallel",)),
    )(x,
      params["ln1_g"], params["ln1_b"],
      params["wq"], params["bq"], params["wk"], params["bk"],
      params["wv"], params["bv"], params["wo"], params["bo"],
      params["ln2_g"], params["ln2_b"],
      params["w1"], params["b1"], params["w2"], params["b2"])
    return y, (w if vis else None)


# ------------------------------ parameter init --------------------------------
# Weights are stored as (in, out) == torch_linear.weight.T ; transpose PyTorch
# checkpoints before loading or results will be silently wrong.

def _linear_params(key, fan_in, fan_out, *, xavier=False, bias_std=None):
    kw, kb = jax.random.split(key)
    if xavier:
        bound = math.sqrt(6.0 / (fan_in + fan_out))       # xavier_uniform_
    else:
        bound = 1.0 / math.sqrt(fan_in)                   # torch Linear default-ish
    w = jax.random.uniform(kw, (fan_in, fan_out), jnp.float32, -bound, bound)
    if bias_std is None:
        bb = 1.0 / math.sqrt(fan_in)
        b = jax.random.uniform(kb, (1, fan_out), jnp.float32, -bb, bb)
    else:
        b = bias_std * jax.random.normal(kb, (1, fan_out), jnp.float32)
    return w, b


if __name__ == "__main__":
    config = dict(
        hidden_size=128,
        num_heads=4,
        mlp_dim=512,
        attention_dropout_rate=0.0,  # identity at inference
        dropout_rate=0.1,            # identity at inference
    )
    B, S = 2, 128
    H, M = config["hidden_size"], config["mlp_dim"]

    key = jax.random.PRNGKey(0)
    ks = jax.random.split(key, 8)
    wq, bq = _linear_params(ks[0], H, H)
    wk, bk = _linear_params(ks[1], H, H)
    wv, bv = _linear_params(ks[2], H, H)
    wo, bo = _linear_params(ks[3], H, H)
    w1, b1 = _linear_params(ks[4], H, M, xavier=True, bias_std=1e-6)
    w2, b2 = _linear_params(ks[5], M, H, xavier=True, bias_std=1e-6)
    params = dict(
        ln1_g=jnp.ones((1, H), jnp.float32), ln1_b=jnp.zeros((1, H), jnp.float32),
        ln2_g=jnp.ones((1, H), jnp.float32), ln2_b=jnp.zeros((1, H), jnp.float32),
        wq=wq, bq=bq, wk=wk, bk=bk, wv=wv, bv=bv, wo=wo, bo=bo,
        w1=w1, b1=b1, w2=w2, b2=b2,
    )

    x = jax.random.normal(ks[6], (B, S, H), jnp.float32)

    y, weights = block_forward(params, x, config, vis=True)
    jax.block_until_ready(y)
    jax.block_until_ready(weights)
    assert y.shape == (B, S, H)
    assert weights.shape == (B, config["num_heads"], S, S)
    print("KERNEL_OK")
</pallas_src>

<mosaic_0001>
module attributes {stable_mosaic.version = 11 : i64} {
  func.func @_block_kernel(%arg0: i32, %arg1: memref<1x128x128xf32, #tpu.memory_space<vmem>>, %arg2: memref<1x128xf32, #tpu.memory_space<vmem>>, %arg3: memref<1x128xf32, #tpu.memory_space<vmem>>, %arg4: memref<128x128xf32, #tpu.memory_space<vmem>>, %arg5: memref<1x128xf32, #tpu.memory_space<vmem>>, %arg6: memref<128x128xf32, #tpu.memory_space<vmem>>, %arg7: memref<1x128xf32, #tpu.memory_space<vmem>>, %arg8: memref<128x128xf32, #tpu.memory_space<vmem>>, %arg9: memref<1x128xf32, #tpu.memory_space<vmem>>, %arg10: memref<128x128xf32, #tpu.memory_space<vmem>>, %arg11: memref<1x128xf32, #tpu.memory_space<vmem>>, %arg12: memref<1x128xf32, #tpu.memory_space<vmem>>, %arg13: memref<1x128xf32, #tpu.memory_space<vmem>>, %arg14: memref<128x512xf32, #tpu.memory_space<vmem>>, %arg15: memref<1x512xf32, #tpu.memory_space<vmem>>, %arg16: memref<512x128xf32, #tpu.memory_space<vmem>>, %arg17: memref<1x128xf32, #tpu.memory_space<vmem>>, %arg18: memref<1x128x128xf32, #tpu.memory_space<vmem>>, %arg19: memref<1x4x128x128xf32, #tpu.memory_space<vmem>>) attributes {dimension_semantics = [#tpu.dimension_semantics<parallel>], iteration_bounds = array<i64: 2>, scalar_prefetch = 0 : i64, scratch_operands = 0 : i64, tpu.core_type = #tpu.core_type<tc>, window_params = [{transform_indices = @transform_0, window_bounds = array<i64: 1, 128, 128>}, {pipeline_mode = #tpu.pipeline_mode<synchronous>, transform_indices = @transform_1, window_bounds = array<i64: 1, 128>}, {pipeline_mode = #tpu.pipeline_mode<synchronous>, transform_indices = @transform_2, window_bounds = array<i64: 1, 128>}, {pipeline_mode = #tpu.pipeline_mode<synchronous>, transform_indices = @transform_3, window_bounds = array<i64: 128, 128>}, {pipeline_mode = #tpu.pipeline_mode<synchronous>, transform_indices = @transform_4, window_bounds = array<i64: 1, 128>}, {pipeline_mode = #tpu.pipeline_mode<synchronous>, transform_indices = @transform_5, window_bounds = array<i64: 128, 128>}, {pipeline_mode = #tpu.pipeline_mode<synchronous>, transform_indices = @transform_6, window_bounds = array<i64: 1, 128>}, {pipeline_mode = #tpu.pipeline_mode<synchronous>, transform_indices = @transform_7, window_bounds = array<i64: 128, 128>}, {pipeline_mode = #tpu.pipeline_mode<synchronous>, transform_indices = @transform_8, window_bounds = array<i64: 1, 128>}, {pipeline_mode = #tpu.pipeline_mode<synchronous>, transform_indices = @transform_9, window_bounds = array<i64: 128, 128>}, {pipeline_mode = #tpu.pipeline_mode<synchronous>, transform_indices = @transform_10, window_bounds = array<i64: 1, 128>}, {pipeline_mode = #tpu.pipeline_mode<synchronous>, transform_indices = @transform_11, window_bounds = array<i64: 1, 128>}, {pipeline_mode = #tpu.pipeline_mode<synchronous>, transform_indices = @transform_12, window_bounds = array<i64: 1, 128>}, {pipeline_mode = #tpu.pipeline_mode<synchronous>, transform_indices = @transform_13, window_bounds = array<i64: 128, 512>}, {pipeline_mode = #tpu.pipeline_mode<synchronous>, transform_indices = @transform_14, window_bounds = array<i64: 1, 512>}, {pipeline_mode = #tpu.pipeline_mode<synchronous>, transform_indices = @transform_15, window_bounds = array<i64: 512, 128>}, {pipeline_mode = #tpu.pipeline_mode<synchronous>, transform_indices = @transform_16, window_bounds = array<i64: 1, 128>}, {transform_indices = @transform_17, window_bounds = array<i64: 1, 128, 128>}, {transform_indices = @transform_18, window_bounds = array<i64: 1, 4, 128, 128>}]} {
    %c0 = arith.constant 0 : index
    %c0_0 = arith.constant 0 : index
    %c0_1 = arith.constant 0 : index
    %0 = vector.load %arg1[%c0, %c0_0, %c0_1] : memref<1x128x128xf32, #tpu.memory_space<vmem>>, vector<1x128x128xf32>
    %1 = vector.shape_cast %0 : vector<1x128x128xf32> to vector<128x128xf32>
    %c0_2 = arith.constant 0 : index
    %c0_3 = arith.constant 0 : index
    %2 = vector.load %arg2[%c0_2, %c0_3] : memref<1x128xf32, #tpu.memory_space<vmem>>, vector<1x128xf32>
    %c0_4 = arith.constant 0 : index
    %c0_5 = arith.constant 0 : index
    %3 = vector.load %arg3[%c0_4, %c0_5] : memref<1x128xf32, #tpu.memory_space<vmem>>, vector<1x128xf32>
    %cst = arith.constant dense<0.000000e+00> : vector<128xf32>
    %4 = vector.multi_reduction <add>, %1, %cst [1] : vector<128x128xf32> to vector<128xf32>
    %5 = vector.shape_cast %4 : vector<128xf32> to vector<128x1xf32>
    %cst_6 = arith.constant 1.280000e+02 : f32
    %6 = vector.broadcast %cst_6 : f32 to vector<128x1xf32>
    %7 = arith.divf %5, %6 : vector<128x1xf32>
    %8 = vector.broadcast %7 : vector<128x1xf32> to vector<128x128xf32>
    %9 = arith.subf %1, %8 : vector<128x128xf32>
    %10 = arith.mulf %9, %9 : vector<128x128xf32>
    %cst_7 = arith.constant dense<0.000000e+00> : vector<128xf32>
    %11 = vector.multi_reduction <add>, %10, %cst_7 [1] : vector<128x128xf32> to vector<128xf32>
    %12 = vector.shape_cast %11 : vector<128xf32> to vector<128x1xf32>
    %cst_8 = arith.constant 1.280000e+02 : f32
    %13 = vector.broadcast %cst_8 : f32 to vector<128x1xf32>
    %14 = arith.divf %12, %13 : vector<128x1xf32>
    %cst_9 = arith.constant 9.99999997E-7 : f32
    %15 = vector.broadcast %cst_9 : f32 to vector<128x1xf32>
    %16 = arith.addf %14, %15 : vector<128x1xf32>
    %17 = math.rsqrt %16 : vector<128x1xf32>
    %18 = vector.broadcast %17 : vector<128x1xf32> to vector<128x128xf32>
    %19 = arith.mulf %9, %18 : vector<128x128xf32>
    %20 = vector.broadcast %2 : vector<1x128xf32> to vector<128x128xf32>
    %21 = arith.mulf %19, %20 : vector<128x128xf32>
    %22 = vector.broadcast %3 : vector<1x128xf32> to vector<128x128xf32>
    %23 = arith.addf %21, %22 : vector<128x128xf32>
    %c0_10 = arith.constant 0 : index
    %c0_11 = arith.constant 0 : index
    %24 = vector.load %arg4[%c0_10, %c0_11] : memref<128x128xf32, #tpu.memory_space<vmem>>, vector<128x128xf32>
    %cst_12 = arith.constant dense<0.000000e+00> : vector<128x128xf32>
    %25 = tpu.matmul %23, %24, %cst_12 {dimension_numbers = #tpu.dot_dimension_numbers<[1], [0], [0], [1], [0, 0, 1, 1], [], []>} : vector<128x128xf32>, vector<128x128xf32>, vector<128x128xf32> -> vector<128x128xf32>
    %c0_13 = arith.constant 0 : index
    %c0_14 = arith.constant 0 : index
    %26 = vector.load %arg5[%c0_13, %c0_14] : memref<1x128xf32, #tpu.memory_space<vmem>>, vector<1x128xf32>
    %27 = vector.broadcast %26 : vector<1x128xf32> to vector<128x128xf32>
    %28 = arith.addf %25, %27 : vector<128x128xf32>
    %c0_15 = arith.constant 0 : index
    %c0_16 = arith.constant 0 : index
    %29 = vector.load %arg6[%c0_15, %c0_16] : memref<128x128xf32, #tpu.memory_space<vmem>>, vector<128x128xf32>
    %cst_17 = arith.constant dense<0.000000e+00> : vector<128x128xf32>
    %30 = tpu.matmul %23, %29, %cst_17 {dimension_numbers = #tpu.dot_dimension_numbers<[1], [0], [0], [1], [0, 0, 1, 1], [], []>} : vector<128x128xf32>, vector<128x128xf32>, vector<128x128xf32> -> vector<128x128xf32>
    %c0_18 = arith.constant 0 : index
    %c0_19 = arith.constant 0 : index
    %31 = vector.load %arg7[%c0_18, %c0_19] : memref<1x128xf32, #tpu.memory_space<vmem>>, vector<1x128xf32>
    %32 = vector.broadcast %31 : vector<1x128xf32> to vector<128x128xf32>
    %33 = arith.addf %30, %32 : vector<128x128xf32>
    %c0_20 = arith.constant 0 : index
    %c0_21 = arith.constant 0 : index
    %34 = vector.load %arg8[%c0_20, %c0_21] : memref<128x128xf32, #tpu.memory_space<vmem>>, vector<128x128xf32>
    %cst_22 = arith.constant dense<0.000000e+00> : vector<128x128xf32>
    %35 = tpu.matmul %23, %34, %cst_22 {dimension_numbers = #tpu.dot_dimension_numbers<[1], [0], [0], [1], [0, 0, 1, 1], [], []>} : vector<128x128xf32>, vector<128x128xf32>, vector<128x128xf32> -> vector<128x128xf32>
    %c0_23 = arith.constant 0 : index
    %c0_24 = arith.constant 0 : index
    %36 = vector.load %arg9[%c0_23, %c0_24] : memref<1x128xf32, #tpu.memory_space<vmem>>, vector<1x128xf32>
    %37 = vector.broadcast %36 : vector<1x128xf32> to vector<128x128xf32>
    %38 = arith.addf %35, %37 : vector<128x128xf32>
    %39 = vector.extract_strided_slice %28 {offsets = [0, 0], sizes = [128, 32], strides = [1, 1]} : vector<128x128xf32> to vector<128x32xf32>
    %40 = vector.extract_strided_slice %33 {offsets = [0, 0], sizes = [128, 32], strides = [1, 1]} : vector<128x128xf32> to vector<128x32xf32>
    %41 = vector.extract_strided_slice %38 {offsets = [0, 0], sizes = [128, 32], strides = [1, 1]} : vector<128x128xf32> to vector<128x32xf32>
    %cst_25 = arith.constant dense<0.000000e+00> : vector<128x128xf32>
    %42 = tpu.matmul %39, %40, %cst_25 {dimension_numbers = #tpu.dot_dimension_numbers<[1], [1], [0], [0], [0, 0, 1, 0], [], []>} : vector<128x32xf32>, vector<128x32xf32>, vector<128x128xf32> -> vector<128x128xf32>
    %cst_26 = arith.constant 0.176776692 : f32
    %43 = vector.broadcast %cst_26 : f32 to vector<128x128xf32>
    %44 = arith.mulf %42, %43 : vector<128x128xf32>
    %cst_27 = arith.constant dense<0xFF800000> : vector<128xf32>
    %45 = vector.multi_reduction <maximumf>, %44, %cst_27 [1] : vector<128x128xf32> to vector<128xf32>
    %46 = vector.shape_cast %45 : vector<128xf32> to vector<128x1xf32>
    %47 = vector.broadcast %46 : vector<128x1xf32> to vector<128x128xf32>
    %48 = arith.subf %44, %47 : vector<128x128xf32>
    %49 = math.exp %48 : vector<128x128xf32>
    %cst_28 = arith.constant dense<0.000000e+00> : vector<128xf32>
    %50 = vector.multi_reduction <add>, %49, %cst_28 [1] : vector<128x128xf32> to vector<128xf32>
    %51 = vector.shape_cast %50 : vector<128xf32> to vector<128x1xf32>
    %52 = vector.broadcast %51 : vector<128x1xf32> to vector<128x128xf32>
    %53 = arith.divf %49, %52 : vector<128x128xf32>
    %c0_29 = arith.constant 0 : index
    %c0_30 = arith.constant 0 : index
    %c0_31 = arith.constant 0 : index
    %c0_32 = arith.constant 0 : index
    %54 = vector.load %arg19[%c0_29, %c0_30, %c0_31, %c0_32] : memref<1x4x128x128xf32, #tpu.memory_space<vmem>>, vector<1x1x128x128xf32>
    %55 = vector.shape_cast %54 : vector<1x1x128x128xf32> to vector<128x128xf32>
    %56 = vector.shape_cast %53 : vector<128x128xf32> to vector<1x1x128x128xf32>
    tpu.vector_store %arg19[%c0_29, %c0_30, %c0_31, %c0_32], %56 {strides = array<i32>} : memref<1x4x128x128xf32, #tpu.memory_space<vmem>>, vector<1x1x128x128xf32>,
    %cst_33 = arith.constant dense<0.000000e+00> : vector<128x32xf32>
    %57 = tpu.matmul %53, %41, %cst_33 {dimension_numbers = #tpu.dot_dimension_numbers<[1], [0], [0], [1], [0, 0, 1, 1], [], []>} : vector<128x128xf32>, vector<128x32xf32>, vector<128x32xf32> -> vector<128x32xf32>
    %58 = vector.extract_strided_slice %28 {offsets = [0, 32], sizes = [128, 32], strides = [1, 1]} : vector<128x128xf32> to vector<128x32xf32>
    %59 = vector.extract_strided_slice %33 {offsets = [0, 32], sizes = [128, 32], strides = [1, 1]} : vector<128x128xf32> to vector<128x32xf32>
    %60 = vector.extract_strided_slice %38 {offsets = [0, 32], sizes = [128, 32], strides = [1, 1]} : vector<128x128xf32> to vector<128x32xf32>
    %cst_34 = arith.constant dense<0.000000e+00> : vector<128x128xf32>
    %61 = tpu.matmul %58, %59, %cst_34 {dimension_numbers = #tpu.dot_dimension_numbers<[1], [1], [0], [0], [0, 0, 1, 0], [], []>} : vector<128x32xf32>, vector<128x32xf32>, vector<128x128xf32> -> vector<128x128xf32>
    %cst_35 = arith.constant 0.176776692 : f32
    %62 = vector.broadcast %cst_35 : f32 to vector<128x128xf32>
    %63 = arith.mulf %61, %62 : vector<128x128xf32>
    %cst_36 = arith.constant dense<0xFF800000> : vector<128xf32>
    %64 = vector.multi_reduction <maximumf>, %63, %cst_36 [1] : vector<128x128xf32> to vector<128xf32>
    %65 = vector.shape_cast %64 : vector<128xf32> to vector<128x1xf32>
    %66 = vector.broadcast %65 : vector<128x1xf32> to vector<128x128xf32>
    %67 = arith.subf %63, %66 : vector<128x128xf32>
    %68 = math.exp %67 : vector<128x128xf32>
    %cst_37 = arith.constant dense<0.000000e+00> : vector<128xf32>
    %69 = vector.multi_reduction <add>, %68, %cst_37 [1] : vector<128x128xf32> to vector<128xf32>
    %70 = vector.shape_cast %69 : vector<128xf32> to vector<128x1xf32>
    %71 = vector.broadcast %70 : vector<128x1xf32> to vector<128x128xf32>
    %72 = arith.divf %68, %71 : vector<128x128xf32>
    %c0_38 = arith.constant 0 : index
    %c1 = arith.constant 1 : index
    %c0_39 = arith.constant 0 : index
    %c0_40 = arith.constant 0 : index
    %73 = vector.load %arg19[%c0_38, %c1, %c0_39, %c0_40] : memref<1x4x128x128xf32, #tpu.memory_space<vmem>>, vector<1x1x128x128xf32>
    %74 = vector.shape_cast %73 : vector<1x1x128x128xf32> to vector<128x128xf32>
    %75 = vector.shape_cast %72 : vector<128x128xf32> to vector<1x1x128x128xf32>
    tpu.vector_store %arg19[%c0_38, %c1, %c0_39, %c0_40], %75 {strides = array<i32>} : memref<1x4x128x128xf32, #tpu.memory_space<vmem>>, vector<1x1x128x128xf32>,
    %cst_41 = arith.constant dense<0.000000e+00> : vector<128x32xf32>
    %76 = tpu.matmul %72, %60, %cst_41 {dimension_numbers = #tpu.dot_dimension_numbers<[1], [0], [0], [1], [0, 0, 1, 1], [], []>} : vector<128x128xf32>, vector<128x32xf32>, vector<128x32xf32> -> vector<128x32xf32>
    %77 = vector.extract_strided_slice %28 {offsets = [0, 64], sizes = [128, 32], strides = [1, 1]} : vector<128x128xf32> to vector<128x32xf32>
    %78 = vector.extract_strided_slice %33 {offsets = [0, 64], sizes = [128, 32], strides = [1, 1]} : vector<128x128xf32> to vector<128x32xf32>
    %79 = vector.extract_strided_slice %38 {offsets = [0, 64], sizes = [128, 32], strides = [1, 1]} : vector<128x128xf32> to vector<128x32xf32>
    %cst_42 = arith.constant dense<0.000000e+00> : vector<128x128xf32>
    %80 = tpu.matmul %77, %78, %cst_42 {dimension_numbers = #tpu.dot_dimension_numbers<[1], [1], [0], [0], [0, 0, 1, 0], [], []>} : vector<128x32xf32>, vector<128x32xf32>, vector<128x128xf32> -> vector<128x128xf32>
    %cst_43 = arith.constant 0.176776692 : f32
    %81 = vector.broadcast %cst_43 : f32 to vector<128x128xf32>
    %82 = arith.mulf %80, %81 : vector<128x128xf32>
    %cst_44 = arith.constant dense<0xFF800000> : vector<128xf32>
    %83 = vector.multi_reduction <maximumf>, %82, %cst_44 [1] : vector<128x128xf32> to vector<128xf32>
    %84 = vector.shape_cast %83 : vector<128xf32> to vector<128x1xf32>
    %85 = vector.broadcast %84 : vector<128x1xf32> to vector<128x128xf32>
    %86 = arith.subf %82, %85 : vector<128x128xf32>
    %87 = math.exp %86 : vector<128x128xf32>
    %cst_45 = arith.constant dense<0.000000e+00> : vector<128xf32>
    %88 = vector.multi_reduction <add>, %87, %cst_45 [1] : vector<128x128xf32> to vector<128xf32>
    %89 = vector.shape_cast %88 : vector<128xf32> to vector<128x1xf32>
    %90 = vector.broadcast %89 : vector<128x1xf32> to vector<128x128xf32>
    %91 = arith.divf %87, %90 : vector<128x128xf32>
    %c0_46 = arith.constant 0 : index
    %c2 = arith.constant 2 : index
    %c0_47 = arith.constant 0 : index
    %c0_48 = arith.constant 0 : index
    %92 = vector.load %arg19[%c0_46, %c2, %c0_47, %c0_48] : memref<1x4x128x128xf32, #tpu.memory_space<vmem>>, vector<1x1x128x128xf32>
    %93 = vector.shape_cast %92 : vector<1x1x128x128xf32> to vector<128x128xf32>
    %94 = vector.shape_cast %91 : vector<128x128xf32> to vector<1x1x128x128xf32>
    tpu.vector_store %arg19[%c0_46, %c2, %c0_47, %c0_48], %94 {strides = array<i32>} : memref<1x4x128x128xf32, #tpu.memory_space<vmem>>, vector<1x1x128x128xf32>,
    %cst_49 = arith.constant dense<0.000000e+00> : vector<128x32xf32>
    %95 = tpu.matmul %91, %79, %cst_49 {dimension_numbers = #tpu.dot_dimension_numbers<[1], [0], [0], [1], [0, 0, 1, 1], [], []>} : vector<128x128xf32>, vector<128x32xf32>, vector<128x32xf32> -> vector<128x32xf32>
    %96 = vector.extract_strided_slice %28 {offsets = [0, 96], sizes = [128, 32], strides = [1, 1]} : vector<128x128xf32> to vector<128x32xf32>
    %97 = vector.extract_strided_slice %33 {offsets = [0, 96], sizes = [128, 32], strides = [1, 1]} : vector<128x128xf32> to vector<128x32xf32>
    %98 = vector.extract_strided_slice %38 {offsets = [0, 96], sizes = [128, 32], strides = [1, 1]} : vector<128x128xf32> to vector<128x32xf32>
    %cst_50 = arith.constant dense<0.000000e+00> : vector<128x128xf32>
    %99 = tpu.matmul %96, %97, %cst_50 {dimension_numbers = #tpu.dot_dimension_numbers<[1], [1], [0], [0], [0, 0, 1, 0], [], []>} : vector<128x32xf32>, vector<128x32xf32>, vector<128x128xf32> -> vector<128x128xf32>
    %cst_51 = arith.constant 0.176776692 : f32
    %100 = vector.broadcast %cst_51 : f32 to vector<128x128xf32>
    %101 = arith.mulf %99, %100 : vector<128x128xf32>
    %cst_52 = arith.constant dense<0xFF800000> : vector<128xf32>
    %102 = vector.multi_reduction <maximumf>, %101, %cst_52 [1] : vector<128x128xf32> to vector<128xf32>
    %103 = vector.shape_cast %102 : vector<128xf32> to vector<128x1xf32>
    %104 = vector.broadcast %103 : vector<128x1xf32> to vector<128x128xf32>
    %105 = arith.subf %101, %104 : vector<128x128xf32>
    %106 = math.exp %105 : vector<128x128xf32>
    %cst_53 = arith.constant dense<0.000000e+00> : vector<128xf32>
    %107 = vector.multi_reduction <add>, %106, %cst_53 [1] : vector<128x128xf32> to vector<128xf32>
    %108 = vector.shape_cast %107 : vector<128xf32> to vector<128x1xf32>
    %109 = vector.broadcast %108 : vector<128x1xf32> to vector<128x128xf32>
    %110 = arith.divf %106, %109 : vector<128x128xf32>
    %c0_54 = arith.constant 0 : index
    %c3 = arith.constant 3 : index
    %c0_55 = arith.constant 0 : index
    %c0_56 = arith.constant 0 : index
    %111 = vector.load %arg19[%c0_54, %c3, %c0_55, %c0_56] : memref<1x4x128x128xf32, #tpu.memory_space<vmem>>, vector<1x1x128x128xf32>
    %112 = vector.shape_cast %111 : vector<1x1x128x128xf32> to vector<128x128xf32>
    %113 = vector.shape_cast %110 : vector<128x128xf32> to vector<1x1x128x128xf32>
    tpu.vector_store %arg19[%c0_54, %c3, %c0_55, %c0_56], %113 {strides = array<i32>} : memref<1x4x128x128xf32, #tpu.memory_space<vmem>>, vector<1x1x128x128xf32>,
    %cst_57 = arith.constant dense<0.000000e+00> : vector<128x32xf32>
    %114 = tpu.matmul %110, %98, %cst_57 {dimension_numbers = #tpu.dot_dimension_numbers<[1], [0], [0], [1], [0, 0, 1, 1], [], []>} : vector<128x128xf32>, vector<128x32xf32>, vector<128x32xf32> -> vector<128x32xf32>
    %115 = tpu.concatenate %57, %76, %95, %114 in 1 : vector<128x32xf32>, vector<128x32xf32>, vector<128x32xf32>, vector<128x32xf32> -> vector<128x128xf32>
    %c0_58 = arith.constant 0 : index
    %c0_59 = arith.constant 0 : index
    %116 = vector.load %arg10[%c0_58, %c0_59] : memref<128x128xf32, #tpu.memory_space<vmem>>, vector<128x128xf32>
    %cst_60 = arith.constant dense<0.000000e+00> : vector<128x128xf32>
    %117 = tpu.matmul %115, %116, %cst_60 {dimension_numbers = #tpu.dot_dimension_numbers<[1], [0], [0], [1], [0, 0, 1, 1], [], []>} : vector<128x128xf32>, vector<128x128xf32>, vector<128x128xf32> -> vector<128x128xf32>
    %c0_61 = arith.constant 0 : index
    %c0_62 = arith.constant 0 : index
    %118 = vector.load %arg11[%c0_61, %c0_62] : memref<1x128xf32, #tpu.memory_space<vmem>>, vector<1x128xf32>
    %119 = vector.broadcast %118 : vector<1x128xf32> to vector<128x128xf32>
    %120 = arith.addf %117, %119 : vector<128x128xf32>
    %121 = arith.addf %1, %120 : vector<128x128xf32>
    %c0_63 = arith.constant 0 : index
    %c0_64 = arith.constant 0 : index
    %122 = vector.load %arg12[%c0_63, %c0_64] : memref<1x128xf32, #tpu.memory_space<vmem>>, vector<1x128xf32>
    %c0_65 = arith.constant 0 : index
    %c0_66 = arith.constant 0 : index
    %123 = vector.load %arg13[%c0_65, %c0_66] : memref<1x128xf32, #tpu.memory_space<vmem>>, vector<1x128xf32>
    %cst_67 = arith.constant dense<0.000000e+00> : vector<128xf32>
    %124 = vector.multi_reduction <add>, %121, %cst_67 [1] : vector<128x128xf32> to vector<128xf32>
    %125 = vector.shape_cast %124 : vector<128xf32> to vector<128x1xf32>
    %cst_68 = arith.constant 1.280000e+02 : f32
    %126 = vector.broadcast %cst_68 : f32 to vector<128x1xf32>
    %127 = arith.divf %125, %126 : vector<128x1xf32>
    %128 = vector.broadcast %127 : vector<128x1xf32> to vector<128x128xf32>
    %129 = arith.subf %121, %128 : vector<128x128xf32>
    %130 = arith.mulf %129, %129 : vector<128x128xf32>
    %cst_69 = arith.constant dense<0.000000e+00> : vector<128xf32>
    %131 = vector.multi_reduction <add>, %130, %cst_69 [1] : vector<128x128xf32> to vector<128xf32>
    %132 = vector.shape_cast %131 : vector<128xf32> to vector<128x1xf32>
    %cst_70 = arith.constant 1.280000e+02 : f32
    %133 = vector.broadcast %cst_70 : f32 to vector<128x1xf32>
    %134 = arith.divf %132, %133 : vector<128x1xf32>
    %cst_71 = arith.constant 9.99999997E-7 : f32
    %135 = vector.broadcast %cst_71 : f32 to vector<128x1xf32>
    %136 = arith.addf %134, %135 : vector<128x1xf32>
    %137 = math.rsqrt %136 : vector<128x1xf32>
    %138 = vector.broadcast %137 : vector<128x1xf32> to vector<128x128xf32>
    %139 = arith.mulf %129, %138 : vector<128x128xf32>
    %140 = vector.broadcast %122 : vector<1x128xf32> to vector<128x128xf32>
    %141 = arith.mulf %139, %140 : vector<128x128xf32>
    %142 = vector.broadcast %123 : vector<1x128xf32> to vector<128x128xf32>
    %143 = arith.addf %141, %142 : vector<128x128xf32>
    %c0_72 = arith.constant 0 : index
    %c0_73 = arith.constant 0 : index
    %144 = vector.load %arg14[%c0_72, %c0_73] : memref<128x512xf32, #tpu.memory_space<vmem>>, vector<128x512xf32>
    %cst_74 = arith.constant dense<0.000000e+00> : vector<128x512xf32>
    %145 = tpu.matmul %143, %144, %cst_74 {dimension_numbers = #tpu.dot_dimension_numbers<[1], [0], [0], [1], [0, 0, 1, 1], [], []>} : vector<128x128xf32>, vector<128x512xf32>, vector<128x512xf32> -> vector<128x512xf32>
    %c0_75 = arith.constant 0 : index
    %c0_76 = arith.constant 0 : index
    %146 = vector.load %arg15[%c0_75, %c0_76] : memref<1x512xf32, #tpu.memory_space<vmem>>, vector<1x512xf32>
    %147 = vector.broadcast %146 : vector<1x512xf32> to vector<128x512xf32>
    %148 = arith.addf %145, %147 : vector<128x512xf32>
    %cst_77 = arith.constant 5.000000e-01 : f32
    %149 = vector.broadcast %cst_77 : f32 to vector<128x512xf32>
    %150 = arith.mulf %149, %148 : vector<128x512xf32>
    %cst_78 = arith.constant 4.471500e-02 : f32
    %151 = vector.broadcast %cst_78 : f32 to vector<128x512xf32>
    %152 = arith.mulf %151, %148 : vector<128x512xf32>
    %153 = arith.mulf %152, %148 : vector<128x512xf32>
    %154 = arith.mulf %153, %148 : vector<128x512xf32>
    %155 = arith.addf %148, %154 : vector<128x512xf32>
    %cst_79 = arith.constant 0.797884583 : f32
    %156 = vector.broadcast %cst_79 : f32 to vector<128x512xf32>
    %157 = arith.mulf %156, %155 : vector<128x512xf32>
    %158 = math.tanh %157 : vector<128x512xf32>
    %cst_80 = arith.constant 1.000000e+00 : f32
    %159 = vector.broadcast %cst_80 : f32 to vector<128x512xf32>
    %160 = arith.addf %159, %158 : vector<128x512xf32>
    %161 = arith.mulf %150, %160 : vector<128x512xf32>
    %c0_81 = arith.constant 0 : index
    %c0_82 = arith.constant 0 : index
    %162 = vector.load %arg16[%c0_81, %c0_82] : memref<512x128xf32, #tpu.memory_space<vmem>>, vector<512x128xf32>
    %cst_83 = arith.constant dense<0.000000e+00> : vector<128x128xf32>
    %163 = tpu.matmul %161, %162, %cst_83 {dimension_numbers = #tpu.dot_dimension_numbers<[1], [0], [0], [1], [0, 0, 1, 1], [], []>} : vector<128x512xf32>, vector<512x128xf32>, vector<128x128xf32> -> vector<128x128xf32>
    %c0_84 = arith.constant 0 : index
    %c0_85 = arith.constant 0 : index
    %164 = vector.load %arg17[%c0_84, %c0_85] : memref<1x128xf32, #tpu.memory_space<vmem>>, vector<1x128xf32>
    %165 = vector.broadcast %164 : vector<1x128xf32> to vector<128x128xf32>
    %166 = arith.addf %163, %165 : vector<128x128xf32>
    %167 = arith.addf %121, %166 : vector<128x128xf32>
    %c0_86 = arith.constant 0 : index
    %c0_87 = arith.constant 0 : index
    %c0_88 = arith.constant 0 : index
    %168 = vector.load %arg18[%c0_86, %c0_87, %c0_88] : memref<1x128x128xf32, #tpu.memory_space<vmem>>, vector<1x128x128xf32>
    %169 = vector.shape_cast %168 : vector<1x128x128xf32> to vector<128x128xf32>
    %170 = vector.shape_cast %167 : vector<128x128xf32> to vector<1x128x128xf32>
    tpu.vector_store %arg18[%c0_86, %c0_87, %c0_88], %170 {strides = array<i32>} : memref<1x128x128xf32, #tpu.memory_space<vmem>>, vector<1x128x128xf32>,
    return
  }
  func.func @transform_0(%arg0: i32) -> (i32, i32, i32) {
    %c0_i32 = arith.constant 0 : i32
    %c0_i32_0 = arith.constant 0 : i32
    %c0_i32_1 = arith.constant 0 : i32
    return %arg0, %c0_i32, %c0_i32_0 : i32, i32, i32
  }
  func.func @transform_1(%arg0: i32) -> (i32, i32) {
    %c0_i32 = arith.constant 0 : i32
    %c0_i32_0 = arith.constant 0 : i32
    %c0_i32_1 = arith.constant 0 : i32
    return %c0_i32, %c0_i32_0 : i32, i32
  }
  func.func @transform_2(%arg0: i32) -> (i32, i32) {
    %c0_i32 = arith.constant 0 : i32
    %c0_i32_0 = arith.constant 0 : i32
    %c0_i32_1 = arith.constant 0 : i32
    return %c0_i32, %c0_i32_0 : i32, i32
  }
  func.func @transform_3(%arg0: i32) -> (i32, i32) {
    %c0_i32 = arith.constant 0 : i32
    %c0_i32_0 = arith.constant 0 : i32
    %c0_i32_1 = arith.constant 0 : i32
    return %c0_i32, %c0_i32_0 : i32, i32
  }
  func.func @transform_4(%arg0: i32) -> (i32, i32) {
    %c0_i32 = arith.constant 0 : i32
    %c0_i32_0 = arith.constant 0 : i32
    %c0_i32_1 = arith.constant 0 : i32
    return %c0_i32, %c0_i32_0 : i32, i32
  }
  func.func @transform_5(%arg0: i32) -> (i32, i32) {
    %c0_i32 = arith.constant 0 : i32
    %c0_i32_0 = arith.constant 0 : i32
    %c0_i32_1 = arith.constant 0 : i32
    return %c0_i32, %c0_i32_0 : i32, i32
  }
  func.func @transform_6(%arg0: i32) -> (i32, i32) {
    %c0_i32 = arith.constant 0 : i32
    %c0_i32_0 = arith.constant 0 : i32
    %c0_i32_1 = arith.constant 0 : i32
    return %c0_i32, %c0_i32_0 : i32, i32
  }
  func.func @transform_7(%arg0: i32) -> (i32, i32) {
    %c0_i32 = arith.constant 0 : i32
    %c0_i32_0 = arith.constant 0 : i32
    %c0_i32_1 = arith.constant 0 : i32
    return %c0_i32, %c0_i32_0 : i32, i32
  }
  func.func @transform_8(%arg0: i32) -> (i32, i32) {
    %c0_i32 = arith.constant 0 : i32
    %c0_i32_0 = arith.constant 0 : i32
    %c0_i32_1 = arith.constant 0 : i32
    return %c0_i32, %c0_i32_0 : i32, i32
  }
  func.func @transform_9(%arg0: i32) -> (i32, i32) {
    %c0_i32 = arith.constant 0 : i32
    %c0_i32_0 = arith.constant 0 : i32
    %c0_i32_1 = arith.constant 0 : i32
    return %c0_i32, %c0_i32_0 : i32, i32
  }
  func.func @transform_10(%arg0: i32) -> (i32, i32) {
    %c0_i32 = arith.constant 0 : i32
    %c0_i32_0 = arith.constant 0 : i32
    %c0_i32_1 = arith.constant 0 : i32
    return %c0_i32, %c0_i32_0 : i32, i32
  }
  func.func @transform_11(%arg0: i32) -> (i32, i32) {
    %c0_i32 = arith.constant 0 : i32
    %c0_i32_0 = arith.constant 0 : i32
    %c0_i32_1 = arith.constant 0 : i32
    return %c0_i32, %c0_i32_0 : i32, i32
  }
  func.func @transform_12(%arg0: i32) -> (i32, i32) {
    %c0_i32 = arith.constant 0 : i32
    %c0_i32_0 = arith.constant 0 : i32
    %c0_i32_1 = arith.constant 0 : i32
    return %c0_i32, %c0_i32_0 : i32, i32
  }
  func.func @transform_13(%arg0: i32) -> (i32, i32) {
    %c0_i32 = arith.constant 0 : i32
    %c0_i32_0 = arith.constant 0 : i32
    %c0_i32_1 = arith.constant 0 : i32
    return %c0_i32, %c0_i32_0 : i32, i32
  }
  func.func @transform_14(%arg0: i32) -> (i32, i32) {
    %c0_i32 = arith.constant 0 : i32
    %c0_i32_0 = arith.constant 0 : i32
    %c0_i32_1 = arith.constant 0 : i32
    return %c0_i32, %c0_i32_0 : i32, i32
  }
  func.func @transform_15(%arg0: i32) -> (i32, i32) {
    %c0_i32 = arith.constant 0 : i32
    %c0_i32_0 = arith.constant 0 : i32
    %c0_i32_1 = arith.constant 0 : i32
    return %c0_i32, %c0_i32_0 : i32, i32
  }
  func.func @transform_16(%arg0: i32) -> (i32, i32) {
    %c0_i32 = arith.constant 0 : i32
    %c0_i32_0 = arith.constant 0 : i32
    %c0_i32_1 = arith.constant 0 : i32
    return %c0_i32, %c0_i32_0 : i32, i32
  }
  func.func @transform_17(%arg0: i32) -> (i32, i32, i32) {
    %c0_i32 = arith.constant 0 : i32
    %c0_i32_0 = arith.constant 0 : i32
    %c0_i32_1 = arith.constant 0 : i32
    return %arg0, %c0_i32, %c0_i32_0 : i32, i32, i32
  }
  func.func @transform_18(%arg0: i32) -> (i32, i32, i32, i32) {
    %c0_i32 = arith.constant 0 : i32
    %c0_i32_0 = arith.constant 0 : i32
    %c0_i32_1 = arith.constant 0 : i32
    %c0_i32_2 = arith.constant 0 : i32
    return %arg0, %c0_i32, %c0_i32_0, %c0_i32_1 : i32, i32, i32, i32
  }
}

</mosaic_0001>

<llo_original>
// kernel: tpu_custom_call.1
$region0: #{tpu_custom_call.1}
  #allocation0 [shape = 'u32[]', space=smem, size = 0x4, offset = 0x4, fixed_abs, tag = 'smem constant byte address 0x4 - core index']
  #allocation1 [shape = 'u32[144,128]{1,0:T(1,128)}', space=vmem, size = 0x12000, scoped, tag = 'internal scratch']
  %s0 = inlined_call_operand.hbm [shape: f32[2,128,128], index: 0, kind: input, shape index: {}]
  %s1 = inlined_call_operand.vmem [shape: f32[1,128], index: 1, kind: input, shape index: {}]
  %s2 = inlined_call_operand.vmem [shape: f32[1,128], index: 2, kind: input, shape index: {}]
  %s3 = inlined_call_operand.hbm [shape: f32[128,128], index: 3, kind: input, shape index: {}]
  %s4 = inlined_call_operand.vmem [shape: f32[1,128], index: 4, kind: input, shape index: {}]
  %s5 = inlined_call_operand.hbm [shape: f32[128,128], index: 5, kind: input, shape index: {}]
  %s6 = inlined_call_operand.vmem [shape: f32[1,128], index: 6, kind: input, shape index: {}]
  %s7 = inlined_call_operand.hbm [shape: f32[128,128], index: 7, kind: input, shape index: {}]
  %s8 = inlined_call_operand.vmem [shape: f32[1,128], index: 8, kind: input, shape index: {}]
  %s9 = inlined_call_operand.hbm [shape: f32[128,128], index: 9, kind: input, shape index: {}]
  %s10 = inlined_call_operand.vmem [shape: f32[1,128], index: 10, kind: input, shape index: {}]
  %s11 = inlined_call_operand.vmem [shape: f32[1,128], index: 11, kind: input, shape index: {}]
  %s12 = inlined_call_operand.vmem [shape: f32[1,128], index: 12, kind: input, shape index: {}]
  %s13 = inlined_call_operand.hbm [shape: f32[128,512], index: 13, kind: input, shape index: {}]
  %s14 = inlined_call_operand.vmem [shape: f32[1,512], index: 14, kind: input, shape index: {}]
  %s15 = inlined_call_operand.hbm [shape: f32[512,128], index: 15, kind: input, shape index: {}]
  %s16 = inlined_call_operand.vmem [shape: f32[1,128], index: 16, kind: input, shape index: {}]
  %s17 = inlined_call_operand.hbm [shape: f32[2,128,128], index: 17, kind: output, shape index: {0}]
  %s18 = inlined_call_operand.hbm [shape: f32[2,4,128,128], index: 18, kind: output, shape index: {1}]
  %19 = xla_tuple %s17, %s18
  %s20 = sld [smem:[#allocation0]]
  $region137: #{tpu_custom_call.1} parent=0
    _
  %s22 = ssub.s32 1, %s20
  %s23 = scalar_select 0, %s22, %s20
  $region1: #{tpu_custom_call.1} parent=0
    #allocation2 [shape = 'u8[131072]{0}', space=vmem, size = 0x20000, scoped, tag = 'input window, operand 0']
    #allocation3 [shape = 's32[2]{0}', space=sflag, size = 0x8, scoped, tag = 'scoped memory for tpu_custom_call.1']
    #allocation4 [shape = 's32[2]{0}', space=sflag, size = 0x8, scoped, tag = 'scoped memory for tpu_custom_call.1']
    #allocation5 [shape = 'u8[65536]{0}', space=vmem, size = 0x10000, scoped, tag = 'input window, operand 3, single buffered']
    #allocation6 [shape = 's32[1]{0}', space=sflag, size = 0x4, scoped, tag = 'scoped memory for tpu_custom_call.1']
    #allocation7 [shape = 'u8[65536]{0}', space=vmem, size = 0x10000, scoped, tag = 'input window, operand 5, single buffered']
    #allocation8 [shape = 'u8[65536]{0}', space=vmem, size = 0x10000, scoped, tag = 'input window, operand 7, single buffered']
    #allocation9 [shape = 's32[1]{0}', space=sflag, size = 0x4, scoped, tag = 'scoped memory for tpu_custom_call.1']
    #allocation10 [shape = 'u8[65536]{0}', space=vmem, size = 0x10000, scoped, tag = 'input window, operand 9, single buffered']
    #allocation11 [shape = 'u8[262144]{0}', space=vmem, size = 0x40000, scoped, tag = 'input window, operand 13, single buffered']
    #allocation12 [shape = 's32[1]{0}', space=sflag, size = 0x4, scoped, tag = 'scoped memory for tpu_custom_call.1']
    #allocation13 [shape = 'u8[262144]{0}', space=vmem, size = 0x40000, scoped, tag = 'input window, operand 15, single buffered']
    #allocation14 [shape = 'u8[131072]{0}', space=vmem, size = 0x20000, scoped, tag = 'output window, operand 0']
    #allocation15 [shape = 'u8[524288]{0}', space=vmem, size = 0x80000, scoped, tag = 'output window, operand 1']
    #allocation16 [shape = 's32[2]{0}', space=sflag, size = 0x8, scoped, tag = 'scoped memory for tpu_custom_call.1']
    %24 = vsyncpa [#allocation3], 0
    %s25 = scalar_lea.sflag [#allocation3], 1
    %26 = vsyncpa %s25, 0
    %27 = vsyncpa [#allocation6], 0
    %28 = vsyncpa [#allocation9], 0
    %29 = vsyncpa [#allocation12], 0
    %30 = vsyncpa [#allocation4], 0
    %s31 = scalar_lea.sflag [#allocation4], 1
    %32 = vsyncpa %s31, 0
    %33 = vsyncpa [#allocation16], 0
    %s34 = scalar_lea.sflag [#allocation16], 1
    %35 = vsyncpa %s34, 0
    loop: start=0, step=1, limit=4
    $region2: #{tpu_custom_call.1} parent=1 // loop_pre_header
      _
    $region3: #{tpu_custom_call.1} parent=1 // loop_header
      %s37 = sphi 0, %s41
      %p38 = scmp.ge.s32.totalorder %s37, 4
      %s47 = sphi 0, %s49
      %s50 = sphi 0, %s47
      %s51 = sphi 0, %s50
      %s67 = sphi 0, %s51
      %s71 = sphi 0, %s71
      %s73 = sphi 0, %s71
      %s74 = sphi 0, %s73
      %s88 = sphi 0, %s74
      %s92 = sphi 0, %s92
      %s94 = sphi 0, %s92
      %s95 = sphi 0, %s94
      %s109 = sphi 0, %s95
      %s113 = sphi 0, %s113
      %s115 = sphi 0, %s113
      %s116 = sphi 0, %s115
      %s130 = sphi 0, %s116
      %s134 = sphi 0, %s134
      %s136 = sphi 0, %s134
      %s137 = sphi 0, %s136
      %s151 = sphi 0, %s137
      %s155 = sphi 0, %s155
      %s157 = sphi 0, %s155
      %s158 = sphi 0, %s157
      %s172 = sphi 0, %s158
      %s176 = sphi 0, %s176
      %s178 = sphi 0, %s176
      %s179 = sphi 0, %s178
      %s193 = sphi 0, %s179
      %s197 = sphi 0, %s197
      %s199 = sphi 0, %s197
      %s200 = sphi 0, %s199
      %s214 = sphi 0, %s200
      %s218 = sphi 0, %s218
      %s220 = sphi 0, %s218
      %s221 = sphi 0, %s220
      %s235 = sphi 0, %s221
      %s239 = sphi 0, %s239
      %s241 = sphi 0, %s239
      %s242 = sphi 0, %s241
      %s256 = sphi 0, %s242
      %s260 = sphi 0, %s260
      %s262 = sphi 0, %s260
      %s263 = sphi 0, %s262
      %s277 = sphi 0, %s263
      %s281 = sphi 0, %s281
      %s283 = sphi 0, %s281
      %s284 = sphi 0, %s283
      %s298 = sphi 0, %s284
      %s302 = sphi 0, %s302
      %s304 = sphi 0, %s302
      %s305 = sphi 0, %s304
      %s319 = sphi 0, %s305
      %s323 = sphi 0, %s323
      %s325 = sphi 0, %s323
      %s326 = sphi 0, %s325
      %s340 = sphi 0, %s326
      %s344 = sphi 0, %s344
      %s346 = sphi 0, %s344
      %s347 = sphi 0, %s346
      %s361 = sphi 0, %s347
      %s365 = sphi 0, %s365
      %s367 = sphi 0, %s365
      %s368 = sphi 0, %s367
      %s382 = sphi 0, %s368
      %s386 = sphi 0, %s386
      %s388 = sphi 0, %s386
      %s389 = sphi 0, %s388
      %s403 = sphi 0, %s389
      %s409 = sphi 0, %s411
      %s412 = sphi 0, %s409
      %s413 = sphi 0, %s412
      %s429 = sphi 0, %s413
      %s435 = sphi 0, %s437
      %s438 = sphi 0, %s435
      %s439 = sphi 0, %s438
      %s455 = sphi 0, %s439
    $region4: #{tpu_custom_call.1} parent=1 // loop_header_branch
      %40 = sbr.rel (%p38) target = $region8
    $region5: #{tpu_custom_call.1} parent=1 // loop_body
      %s42 = ssub.s32 %s37, 1
      %s43 = ssub.s32 %s37, 2
      %s44 = sadd.s32 %s37, 1
      %s45 = ssub.s32 %s37, %s44
      %p46 = scmp.eq.s32.totalorder %s45, 0
      %s48 = sadd.s32 %s47, 1
      %s49 = scalar_select %p46, %s47, %s48
      %p52 = pneg %p46
      %p53 = scmp.eq.s32.totalorder %s37, 1
      %p54 = por %p52, %p53
      %p55 = scmp.ne.s32.totalorder %s47, %s50
      %p56 = scmp.eq.s32.totalorder %s37, 0
      %p57 = por %p55, %p56
      %p58 = scmp.ne.s32.totalorder %s47, %s50
      %p59 = scmp.eq.s32.totalorder %s42, 1
      %p60 = por %p58, %p59
      %p61 = scmp.ne.s32.totalorder %s50, %s51
      %p62 = scmp.eq.s32.totalorder %s42, 0
      %p63 = por %p61, %p62
      %p64 = scmp.ne.s32.totalorder %s50, %s51
      %p65 = scmp.eq.s32.totalorder %s43, 1
      %p66 = por %p64, %p65
      %p68 = scmp.ne.s32.totalorder %s51, %s67
      %p69 = scmp.eq.s32.totalorder %s43, 0
      %p70 = por %p68, %p69
      %s72 = sadd.s32 %s71, 1
      %p75 = scmp.eq.s32.totalorder %s37, 1
      %p76 = scmp.ne.s32.totalorder %s71, %s73
      %p77 = scmp.eq.s32.totalorder %s37, 0
      %p78 = por %p76, %p77
      %p79 = scmp.ne.s32.totalorder %s71, %s73
      %p80 = scmp.eq.s32.totalorder %s42, 1
      %p81 = por %p79, %p80
      %p82 = scmp.ne.s32.totalorder %s73, %s74
      %p83 = scmp.eq.s32.totalorder %s42, 0
      %p84 = por %p82, %p83
      %p85 = scmp.ne.s32.totalorder %s73, %s74
      %p86 = scmp.eq.s32.totalorder %s43, 1
      %p87 = por %p85, %p86
      %p89 = scmp.ne.s32.totalorder %s74, %s88
      %p90 = scmp.eq.s32.totalorder %s43, 0
      %p91 = por %p89, %p90
      %s93 = sadd.s32 %s92, 1
      %p96 = scmp.eq.s32.totalorder %s37, 1
      %p97 = scmp.ne.s32.totalorder %s92, %s94
      %p98 = scmp.eq.s32.totalorder %s37, 0
      %p99 = por %p97, %p98
      %p100 = scmp.ne.s32.totalorder %s92, %s94
      %p101 = scmp.eq.s32.totalorder %s42, 1
      %p102 = por %p100, %p101
      %p103 = scmp.ne.s32.totalorder %s94, %s95
      %p104 = scmp.eq.s32.totalorder %s42, 0
      %p105 = por %p103, %p104
      %p106 = scmp.ne.s32.totalorder %s94, %s95
      %p107 = scmp.eq.s32.totalorder %s43, 1
      %p108 = por %p106, %p107
      %p110 = scmp.ne.s32.totalorder %s95, %s109
      %p111 = scmp.eq.s32.totalorder %s43, 0
      %p112 = por %p110, %p111
      %s114 = sadd.s32 %s113, 1
      %p117 = scmp.eq.s32.totalorder %s37, 1
      %p118 = scmp.ne.s32.totalorder %s113, %s115
      %p119 = scmp.eq.s32.totalorder %s37, 0
      %p120 = por %p118, %p119
      %p121 = scmp.ne.s32.totalorder %s113, %s115
      %p122 = scmp.eq.s32.totalorder %s42, 1
      %p123 = por %p121, %p122
      %p124 = scmp.ne.s32.totalorder %s115, %s116
      %p125 = scmp.eq.s32.totalorder %s42, 0
      %p126 = por %p124, %p125
      %p127 = scmp.ne.s32.totalorder %s115, %s116
      %p128 = scmp.eq.s32.totalorder %s43, 1
      %p129 = por %p127, %p128
      %p131 = scmp.ne.s32.totalorder %s116, %s130
      %p132 = scmp.eq.s32.totalorder %s43, 0
      %p133 = por %p131, %p132
      %s135 = sadd.s32 %s134, 1
      %p138 = scmp.eq.s32.totalorder %s37, 1
      %p139 = scmp.ne.s32.totalorder %s134, %s136
      %p140 = scmp.eq.s32.totalorder %s37, 0
      %p141 = por %p139, %p140
      %p142 = scmp.ne.s32.totalorder %s134, %s136
      %p143 = scmp.eq.s32.totalorder %s42, 1
      %p144 = por %p142, %p143
      %p145 = scmp.ne.s32.totalorder %s136, %s137
      %p146 = scmp.eq.s32.totalorder %s42, 0
      %p147 = por %p145, %p146
      %p148 = scmp.ne.s32.totalorder %s136, %s137
      %p149 = scmp.eq.s32.totalorder %s43, 1
      %p150 = por %p148, %p149
      %p152 = scmp.ne.s32.totalorder %s137, %s151
      %p153 = scmp.eq.s32.totalorder %s43, 0
      %p154 = por %p152, %p153
      %s156 = sadd.s32 %s155, 1
      %p159 = scmp.eq.s32.totalorder %s37, 1
      %p160 = scmp.ne.s32.totalorder %s155, %s157
      %p161 = scmp.eq.s32.totalorder %s37, 0
      %p162 = por %p160, %p161
      %p163 = scmp.ne.s32.totalorder %s155, %s157
      %p164 = scmp.eq.s32.totalorder %s42, 1
      %p165 = por %p163, %p164
      %p166 = scmp.ne.s32.totalorder %s157, %s158
      %p167 = scmp.eq.s32.totalorder %s42, 0
      %p168 = por %p166, %p167
      %p169 = scmp.ne.s32.totalorder %s157, %s158
      %p170 = scmp.eq.s32.totalorder %s43, 1
      %p171 = por %p169, %p170
      %p173 = scmp.ne.s32.totalorder %s158, %s172
      %p174 = scmp.eq.s32.totalorder %s43, 0
      %p175 = por %p173, %p174
      %s177 = sadd.s32 %s176, 1
      %p180 = scmp.eq.s32.totalorder %s37, 1
      %p181 = scmp.ne.s32.totalorder %s176, %s178
      %p182 = scmp.eq.s32.totalorder %s37, 0
      %p183 = por %p181, %p182
      %p184 = scmp.ne.s32.totalorder %s176, %s178
      %p185 = scmp.eq.s32.totalorder %s42, 1
      %p186 = por %p184, %p185
      %p187 = scmp.ne.s32.totalorder %s178, %s179
      %p188 = scmp.eq.s32.totalorder %s42, 0
      %p189 = por %p187, %p188
      %p190 = scmp.ne.s32.totalorder %s178, %s179
      %p191 = scmp.eq.s32.totalorder %s43, 1
      %p192 = por %p190, %p191
      %p194 = scmp.ne.s32.totalorder %s179, %s193
      %p195 = scmp.eq.s32.totalorder %s43, 0
      %p196 = por %p194, %p195
      %s198 = sadd.s32 %s197, 1
      %p201 = scmp.eq.s32.totalorder %s37, 1
      %p202 = scmp.ne.s32.totalorder %s197, %s199
      %p203 = scmp.eq.s32.totalorder %s37, 0
      %p204 = por %p202, %p203
      %p205 = scmp.ne.s32.totalorder %s197, %s199
      %p206 = scmp.eq.s32.totalorder %s42, 1
      %p207 = por %p205, %p206
      %p208 = scmp.ne.s32.totalorder %s199, %s200
      %p209 = scmp.eq.s32.totalorder %s42, 0
      %p210 = por %p208, %p209
      %p211 = scmp.ne.s32.totalorder %s199, %s200
      %p212 = scmp.eq.s32.totalorder %s43, 1
      %p213 = por %p211, %p212
      %p215 = scmp.ne.s32.totalorder %s200, %s214
      %p216 = scmp.eq.s32.totalorder %s43, 0
      %p217 = por %p215, %p216
      %s219 = sadd.s32 %s218, 1
      %p222 = scmp.eq.s32.totalorder %s37, 1
      %p223 = scmp.ne.s32.totalorder %s218, %s220
      %p224 = scmp.eq.s32.totalorder %s37, 0
      %p225 = por %p223, %p224
      %p226 = scmp.ne.s32.totalorder %s218, %s220
      %p227 = scmp.eq.s32.totalorder %s42, 1
      %p228 = por %p226, %p227
      %p229 = scmp.ne.s32.totalorder %s220, %s221
      %p230 = scmp.eq.s32.totalorder %s42, 0
      %p231 = por %p229, %p230
      %p232 = scmp.ne.s32.totalorder %s220, %s221
      %p233 = scmp.eq.s32.totalorder %s43, 1
      %p234 = por %p232, %p233
      %p236 = scmp.ne.s32.totalorder %s221, %s235
      %p237 = scmp.eq.s32.totalorder %s43, 0
      %p238 = por %p236, %p237
      %s240 = sadd.s32 %s239, 1
      %p243 = scmp.eq.s32.totalorder %s37, 1
      %p244 = scmp.ne.s32.totalorder %s239, %s241
      %p245 = scmp.eq.s32.totalorder %s37, 0
      %p246 = por %p244, %p245
      %p247 = scmp.ne.s32.totalorder %s239, %s241
      %p248 = scmp.eq.s32.totalorder %s42, 1
      %p249 = por %p247, %p248
      %p250 = scmp.ne.s32.totalorder %s241, %s242
      %p251 = scmp.eq.s32.totalorder %s42, 0
      %p252 = por %p250, %p251
      %p253 = scmp.ne.s32.totalorder %s241, %s242
      %p254 = scmp.eq.s32.totalorder %s43, 1
      %p255 = por %p253, %p254
      %p257 = scmp.ne.s32.totalorder %s242, %s256
      %p258 = scmp.eq.s32.totalorder %s43, 0
      %p259 = por %p257, %p258
      %s261 = sadd.s32 %s260, 1
      %p264 = scmp.eq.s32.totalorder %s37, 1
      %p265 = scmp.ne.s32.totalorder %s260, %s262
      %p266 = scmp.eq.s32.totalorder %s37, 0
      %p267 = por %p265, %p266
      %p268 = scmp.ne.s32.totalorder %s260, %s262
      %p269 = scmp.eq.s32.totalorder %s42, 1
      %p270 = por %p268, %p269
      %p271 = scmp.ne.s32.totalorder %s262, %s263
      %p272 = scmp.eq.s32.totalorder %s42, 0
      %p273 = por %p271, %p272
      %p274 = scmp.ne.s32.totalorder %s262, %s263
      %p275 = scmp.eq.s32.totalorder %s43, 1
      %p276 = por %p274, %p275
      %p278 = scmp.ne.s32.totalorder %s263, %s277
      %p279 = scmp.eq.s32.totalorder %s43, 0
      %p280 = por %p278, %p279
      %s282 = sadd.s32 %s281, 1
      %p285 = scmp.eq.s32.totalorder %s37, 1
      %p286 = scmp.ne.s32.totalorder %s281, %s283
      %p287 = scmp.eq.s32.totalorder %s37, 0
      %p288 = por %p286, %p287
      %p289 = scmp.ne.s32.totalorder %s281, %s283
      %p290 = scmp.eq.s32.totalorder %s42, 1
      %p291 = por %p289, %p290
      %p292 = scmp.ne.s32.totalorder %s283, %s284
      %p293 = scmp.eq.s32.totalorder %s42, 0
      %p294 = por %p292, %p293
      %p295 = scmp.ne.s32.totalorder %s283, %s284
      %p296 = scmp.eq.s32.totalorder %s43, 1
      %p297 = por %p295, %p296
      %p299 = scmp.ne.s32.totalorder %s284, %s298
      %p300 = scmp.eq.s32.totalorder %s43, 0
      %p301 = por %p299, %p300
      %s303 = sadd.s32 %s302, 1
      %p306 = scmp.eq.s32.totalorder %s37, 1
      %p307 = scmp.ne.s32.totalorder %s302, %s304
      %p308 = scmp.eq.s32.totalorder %s37, 0
      %p309 = por %p307, %p308
      %p310 = scmp.ne.s32.totalorder %s302, %s304
      %p311 = scmp.eq.s32.totalorder %s42, 1
      %p312 = por %p310, %p311
      %p313 = scmp.ne.s32.totalorder %s304, %s305
      %p314 = scmp.eq.s32.totalorder %s42, 0
      %p315 = por %p313, %p314
      %p316 = scmp.ne.s32.totalorder %s304, %s305
      %p317 = scmp.eq.s32.totalorder %s43, 1
      %p318 = por %p316, %p317
      %p320 = scmp.ne.s32.totalorder %s305, %s319
      %p321 = scmp.eq.s32.totalorder %s43, 0
      %p322 = por %p320, %p321
      %s324 = sadd.s32 %s323, 1
      %p327 = scmp.eq.s32.totalorder %s37, 1
      %p328 = scmp.ne.s32.totalorder %s323, %s325
      %p329 = scmp.eq.s32.totalorder %s37, 0
      %p330 = por %p328, %p329
      %p331 = scmp.ne.s32.totalorder %s323, %s325
      %p332 = scmp.eq.s32.totalorder %s42, 1
      %p333 = por %p331, %p332
      %p334 = scmp.ne.s32.totalorder %s325, %s326
      %p335 = scmp.eq.s32.totalorder %s42, 0
      %p336 = por %p334, %p335
      %p337 = scmp.ne.s32.totalorder %s325, %s326
      %p338 = scmp.eq.s32.totalorder %s43, 1
      %p339 = por %p337, %p338
      %p341 = scmp.ne.s32.totalorder %s326, %s340
      %p342 = scmp.eq.s32.totalorder %s43, 0
      %p343 = por %p341, %p342
      %s345 = sadd.s32 %s344, 1
      %p348 = scmp.eq.s32.totalorder %s37, 1
      %p349 = scmp.ne.s32.totalorder %s344, %s346
      %p350 = scmp.eq.s32.totalorder %s37, 0
      %p351 = por %p349, %p350
      %p352 = scmp.ne.s32.totalorder %s344, %s346
      %p353 = scmp.eq.s32.totalorder %s42, 1
      %p354 = por %p352, %p353
      %p355 = scmp.ne.s32.totalorder %s346, %s347
      %p356 = scmp.eq.s32.totalorder %s42, 0
      %p357 = por %p355, %p356
      %p358 = scmp.ne.s32.totalorder %s346, %s347
      %p359 = scmp.eq.s32.totalorder %s43, 1
      %p360 = por %p358, %p359
      %p362 = scmp.ne.s32.totalorder %s347, %s361
      %p363 = scmp.eq.s32.totalorder %s43, 0
      %p364 = por %p362, %p363
      %s366 = sadd.s32 %s365, 1
      %p369 = scmp.eq.s32.totalorder %s37, 1
      %p370 = scmp.ne.s32.totalorder %s365, %s367
      %p371 = scmp.eq.s32.totalorder %s37, 0
      %p372 = por %p370, %p371
      %p373 = scmp.ne.s32.totalorder %s365, %s367
      %p374 = scmp.eq.s32.totalorder %s42, 1
      %p375 = por %p373, %p374
      %p376 = scmp.ne.s32.totalorder %s367, %s368
      %p377 = scmp.eq.s32.totalorder %s42, 0
      %p378 = por %p376, %p377
      %p379 = scmp.ne.s32.totalorder %s367, %s368
      %p380 = scmp.eq.s32.totalorder %s43, 1
      %p381 = por %p379, %p380
      %p383 = scmp.ne.s32.totalorder %s368, %s382
      %p384 = scmp.eq.s32.totalorder %s43, 0
      %p385 = por %p383, %p384
      %s387 = sadd.s32 %s386, 1
      %p390 = scmp.eq.s32.totalorder %s37, 1
      %p391 = scmp.ne.s32.totalorder %s386, %s388
      %p392 = scmp.eq.s32.totalorder %s37, 0
      %p393 = por %p391, %p392
      %p394 = scmp.ne.s32.totalorder %s386, %s388
      %p395 = scmp.eq.s32.totalorder %s42, 1
      %p396 = por %p394, %p395
      %p397 = scmp.ne.s32.totalorder %s388, %s389
      %p398 = scmp.eq.s32.totalorder %s42, 0
      %p399 = por %p397, %p398
      %p400 = scmp.ne.s32.totalorder %s388, %s389
      %p401 = scmp.eq.s32.totalorder %s43, 1
      %p402 = por %p400, %p401
      %p404 = scmp.ne.s32.totalorder %s389, %s403
      %p405 = scmp.eq.s32.totalorder %s43, 0
      %p406 = por %p404, %p405
      %s407 = ssub.s32 %s37, %s44
      %p408 = scmp.eq.s32.totalorder %s407, 0
      %s410 = sadd.s32 %s409, 1
      %s411 = scalar_select %p408, %s409, %s410
      %p414 = pneg %p408
      %p415 = scmp.eq.s32.totalorder %s37, 1
      %p416 = por %p414, %p415
      %p417 = scmp.ne.s32.totalorder %s409, %s412
      %p418 = scmp.eq.s32.totalorder %s37, 0
      %p419 = por %p417, %p418
      %p420 = scmp.ne.s32.totalorder %s409, %s412
      %p421 = scmp.eq.s32.totalorder %s42, 1
      %p422 = por %p420, %p421
      %p423 = scmp.ne.s32.totalorder %s412, %s413
      %p424 = scmp.eq.s32.totalorder %s42, 0
      %p425 = por %p423, %p424
      %p426 = scmp.ne.s32.totalorder %s412, %s413
      %p427 = scmp.eq.s32.totalorder %s43, 1
      %p428 = por %p426, %p427
      %p430 = scmp.ne.s32.totalorder %s413, %s429
      %p431 = scmp.eq.s32.totalorder %s43, 0
      %p432 = por %p430, %p431
      %s433 = ssub.s32 %s37, %s44
      %p434 = scmp.eq.s32.totalorder %s433, 0
      %s436 = sadd.s32 %s435, 1
      %s437 = scalar_select %p434, %s435, %s436
      %p440 = pneg %p434
      %p441 = scmp.eq.s32.totalorder %s37, 1
      %p442 = por %p440, %p441
      %p443 = scmp.ne.s32.totalorder %s435, %s438
      %p444 = scmp.eq.s32.totalorder %s37, 0
      %p445 = por %p443, %p444
      %p446 = scmp.ne.s32.totalorder %s435, %s438
      %p447 = scmp.eq.s32.totalorder %s42, 1
      %p448 = por %p446, %p447
      %p449 = scmp.ne.s32.totalorder %s438, %s439
      %p450 = scmp.eq.s32.totalorder %s42, 0
      %p451 = por %p449, %p450
      %p452 = scmp.ne.s32.totalorder %s438, %s439
      %p453 = scmp.eq.s32.totalorder %s43, 1
      %p454 = por %p452, %p453
      %p456 = scmp.ne.s32.totalorder %s439, %s455
      %p457 = scmp.eq.s32.totalorder %s43, 0
      %p458 = por %p456, %p457
      %p459 = scmp.le.s32.totalorder 1, %s37
      %p460 = scmp.lt.s32.totalorder %s37, 3
      %p461 = pnand %p459, %p460
      %p462 = pneg %p461
      // Predicated region
      $region9: #{tpu_custom_call.1} parent=5 // pred_check
        _
      $region10: #{tpu_custom_call.1} parent=5 // pred_check_branch
        %464 = sbr.rel (%p461) target = $region12
      $region11: #{tpu_custom_call.1} parent=5 // pred_region
        %s465 = ssub.s32 %s37, 1
        // Predicated region
        $region13: #{tpu_custom_call.1} parent=11 // pred_check
          %p466 = pneg %p84
        $region14: #{tpu_custom_call.1} parent=11 // pred_check_branch
          %468 = sbr.rel (%p466) target = $region16
        $region15: #{tpu_custom_call.1} parent=11 // pred_region
          _
        $region16: #{tpu_custom_call.1} parent=11 // pred_fallthru
          _
        // Predicated region
        $region17: #{tpu_custom_call.1} parent=11 // pred_check
          %p469 = pneg %p105
        $region18: #{tpu_custom_call.1} parent=11 // pred_check_branch
          %471 = sbr.rel (%p469) target = $region20
        $region19: #{tpu_custom_call.1} parent=11 // pred_region
          _
        $region20: #{tpu_custom_call.1} parent=11 // pred_fallthru
          _
        // Predicated region
        $region21: #{tpu_custom_call.1} parent=11 // pred_check
          %p472 = pneg %p126
        $region22: #{tpu_custom_call.1} parent=11 // pred_check_branch
          %474 = sbr.rel (%p472) target = $region24
        $region23: #{tpu_custom_call.1} parent=11 // pred_region
          %s476 = ssub.s32 2048, 2048
          %477 = vsyncadd [#allocation6], %s476
          %s478 = sshll.u32 [#allocation5], 4
          %s479 = int_to_ptr.vmem [resolvable:$true] %s478
          %484 = dma.hbm_to_vmem [thread:$0]  %s3, 2048, %s479, [#allocation6], 128, 128, 8
        $region24: #{tpu_custom_call.1} parent=11 // pred_fallthru
          _
        // Predicated region
        $region25: #{tpu_custom_call.1} parent=11 // pred_check
          %p485 = pneg %p147
        $region26: #{tpu_custom_call.1} parent=11 // pred_check_branch
          %487 = sbr.rel (%p485) target = $region28
        $region27: #{tpu_custom_call.1} parent=11 // pred_region
          _
        $region28: #{tpu_custom_call.1} parent=11 // pred_fallthru
          _
        // Predicated region
        $region29: #{tpu_custom_call.1} parent=11 // pred_check
          %p488 = pneg %p168
        $region30: #{tpu_custom_call.1} parent=11 // pred_check_branch
          %490 = sbr.rel (%p488) target = $region32
        $region31: #{tpu_custom_call.1} parent=11 // pred_region
          %s492 = ssub.s32 2048, 2048
          %493 = vsyncadd [#allocation6], %s492
          %s494 = sshll.u32 [#allocation7], 4
          %s495 = int_to_ptr.vmem [resolvable:$true] %s494
          %500 = dma.hbm_to_vmem [thread:$0]  %s5, 2048, %s495, [#allocation6], 128, 128, 8
        $region32: #{tpu_custom_call.1} parent=11 // pred_fallthru
          _
        // Predicated region
        $region33: #{tpu_custom_call.1} parent=11 // pred_check
          %p501 = pneg %p189
        $region34: #{tpu_custom_call.1} parent=11 // pred_check_branch
          %503 = sbr.rel (%p501) target = $region36
        $region35: #{tpu_custom_call.1} parent=11 // pred_region
          _
        $region36: #{tpu_custom_call.1} parent=11 // pred_fallthru
          _
        // Predicated region
        $region37: #{tpu_custom_call.1} parent=11 // pred_check
          %p504 = pneg %p210
        $region38: #{tpu_custom_call.1} parent=11 // pred_check_branch
          %506 = sbr.rel (%p504) target = $region40
        $region39: #{tpu_custom_call.1} parent=11 // pred_region
          %s508 = ssub.s32 2048, 2048
          %509 = vsyncadd [#allocation9], %s508
          %s510 = sshll.u32 [#allocation8], 4
          %s511 = int_to_ptr.vmem [resolvable:$true] %s510
          %516 = dma.hbm_to_vmem [thread:$0]  %s7, 2048, %s511, [#allocation9], 128, 128, 8
        $region40: #{tpu_custom_call.1} parent=11 // pred_fallthru
          _
        // Predicated region
        $region41: #{tpu_custom_call.1} parent=11 // pred_check
          %p517 = pneg %p231
        $region42: #{tpu_custom_call.1} parent=11 // pred_check_branch
          %519 = sbr.rel (%p517) target = $region44
        $region43: #{tpu_custom_call.1} parent=11 // pred_region
          _
        $region44: #{tpu_custom_call.1} parent=11 // pred_fallthru
          _
        // Predicated region
        $region45: #{tpu_custom_call.1} parent=11 // pred_check
          %p520 = pneg %p252
        $region46: #{tpu_custom_call.1} parent=11 // pred_check_branch
          %522 = sbr.rel (%p520) target = $region48
        $region47: #{tpu_custom_call.1} parent=11 // pred_region
          %s524 = ssub.s32 2048, 2048
          %525 = vsyncadd [#allocation9], %s524
          %s526 = sshll.u32 [#allocation10], 4
          %s527 = int_to_ptr.vmem [resolvable:$true] %s526
          %532 = dma.hbm_to_vmem [thread:$0]  %s9, 2048, %s527, [#allocation9], 128, 128, 8
        $region48: #{tpu_custom_call.1} parent=11 // pred_fallthru
          _
        // Predicated region
        $region49: #{tpu_custom_call.1} parent=11 // pred_check
          %p533 = pneg %p273
        $region50: #{tpu_custom_call.1} parent=11 // pred_check_branch
          %535 = sbr.rel (%p533) target = $region52
        $region51: #{tpu_custom_call.1} parent=11 // pred_region
          _
        $region52: #{tpu_custom_call.1} parent=11 // pred_fallthru
          _
        // Predicated region
        $region53: #{tpu_custom_call.1} parent=11 // pred_check
          %p536 = pneg %p294
        $region54: #{tpu_custom_call.1} parent=11 // pred_check_branch
          %538 = sbr.rel (%p536) target = $region56
        $region55: #{tpu_custom_call.1} parent=11 // pred_region
          _
        $region56: #{tpu_custom_call.1} parent=11 // pred_fallthru
          _
        // Predicated region
        $region57: #{tpu_custom_call.1} parent=11 // pred_check
          %p539 = pneg %p315
        $region58: #{tpu_custom_call.1} parent=11 // pred_check_branch
          %541 = sbr.rel (%p539) target = $region60
        $region59: #{tpu_custom_call.1} parent=11 // pred_region
          _
        $region60: #{tpu_custom_call.1} parent=11 // pred_fallthru
          _
        // Predicated region
        $region61: #{tpu_custom_call.1} parent=11 // pred_check
          %p542 = pneg %p336
        $region62: #{tpu_custom_call.1} parent=11 // pred_check_branch
          %544 = sbr.rel (%p542) target = $region64
        $region63: #{tpu_custom_call.1} parent=11 // pred_region
          %s546 = ssub.s32 8192, 8192
          %547 = vsyncadd [#allocation12], %s546
          %s548 = sshll.u32 [#allocation11], 4
          %s549 = int_to_ptr.vmem [resolvable:$true] %s548
          %554 = dma.hbm_to_vmem [thread:$0]  %s13, 8192, %s549, [#allocation12], 512, 512, 32
        $region64: #{tpu_custom_call.1} parent=11 // pred_fallthru
          _
        // Predicated region
        $region65: #{tpu_custom_call.1} parent=11 // pred_check
          %p555 = pneg %p357
        $region66: #{tpu_custom_call.1} parent=11 // pred_check_branch
          %557 = sbr.rel (%p555) target = $region68
        $region67: #{tpu_custom_call.1} parent=11 // pred_region
          _
        $region68: #{tpu_custom_call.1} parent=11 // pred_fallthru
          _
        // Predicated region
        $region69: #{tpu_custom_call.1} parent=11 // pred_check
          %p558 = pneg %p378
        $region70: #{tpu_custom_call.1} parent=11 // pred_check_branch
          %560 = sbr.rel (%p558) target = $region72
        $region71: #{tpu_custom_call.1} parent=11 // pred_region
          %s562 = ssub.s32 8192, 8192
          %563 = vsyncadd [#allocation12], %s562
          %s564 = sshll.u32 [#allocation13], 4
          %s565 = int_to_ptr.vmem [resolvable:$true] %s564
          %570 = dma.hbm_to_vmem [thread:$0]  %s15, 8192, %s565, [#allocation12], 128, 128, 8
        $region72: #{tpu_custom_call.1} parent=11 // pred_fallthru
          _
        // Predicated region
        $region73: #{tpu_custom_call.1} parent=11 // pred_check
          %p571 = pneg %p399
        $region74: #{tpu_custom_call.1} parent=11 // pred_check_branch
          %573 = sbr.rel (%p571) target = $region76
        $region75: #{tpu_custom_call.1} parent=11 // pred_region
          _
        $region76: #{tpu_custom_call.1} parent=11 // pred_fallthru
          _
      $region12: #{tpu_custom_call.1} parent=5 // pred_fallthru
        _
      %p574 = scmp.lt.s32.totalorder %s37, 2
      // Predicated region
      $region77: #{tpu_custom_call.1} parent=5 // pred_check
        %p575 = pneg %p574
      $region78: #{tpu_custom_call.1} parent=5 // pred_check_branch
        %577 = sbr.rel (%p575) target = $region80
      $region79: #{tpu_custom_call.1} parent=5 // pred_region
        // Predicated region
        $region81: #{tpu_custom_call.1} parent=79 // pred_check
          %p578 = pneg %p57
        $region82: #{tpu_custom_call.1} parent=79 // pred_check_branch
          %580 = sbr.rel (%p578) target = $region84
        $region83: #{tpu_custom_call.1} parent=79 // pred_region
          %s581 = sand.u32 %s47, 1
          %s582 = scalar_lea.sflag [#allocation3], %s581
          %s583 = sand.u32 %s47, 1
          %s584 = smul.addr %s583, 128
          %s585 = scalar_lea.vmem [#allocation2], %s584
          %s587 = ssub.s32 2048, 2048
          %588 = vsyncadd %s582, %s587
          %s589 = smul.addr %s37, 16
          %s590 = smul.addr %s589, 128
          %s591 = scalar_lea.hbm %s0, %s590
          %s592 = sshll.u32 %s585, 4
          %s593 = int_to_ptr.vmem [resolvable:$true] %s592
          %598 = dma.hbm_to_vmem [thread:$0]  %s591, 2048, %s593, %s582, 128, 128, 8
        $region84: #{tpu_custom_call.1} parent=79 // pred_fallthru
          _
      $region80: #{tpu_custom_call.1} parent=5 // pred_fallthru
        _
      %p599 = scmp.le.s32.totalorder 1, %s37
      %p600 = scmp.lt.s32.totalorder %s37, 3
      %p601 = pnand %p599, %p600
      %p602 = pneg %p601
      // Predicated region
      $region85: #{tpu_custom_call.1} parent=5 // pred_check
        _
      $region86: #{tpu_custom_call.1} parent=5 // pred_check_branch
        %604 = sbr.rel (%p601) target = $region88
      $region87: #{tpu_custom_call.1} parent=5 // pred_region
        %s605 = ssub.s32 %s37, 1
        %s606 = sand.u32 %s50, 1
        %s607 = scalar_lea.sflag [#allocation3], %s606
        %s608 = sand.u32 %s50, 1
        %s609 = smul.addr %s608, 128
        %s610 = scalar_lea.vmem [#allocation2], %s609
        // Predicated region
        $region89: #{tpu_custom_call.1} parent=87 // pred_check
          %p611 = pneg %p63
        $region90: #{tpu_custom_call.1} parent=87 // pred_check_branch
          %613 = sbr.rel (%p611) target = $region92
        $region91: #{tpu_custom_call.1} parent=87 // pred_region
          %614 = dma.done %s607, 2048
        $region92: #{tpu_custom_call.1} parent=87 // pred_fallthru
          _
        // Predicated region
        $region93: #{tpu_custom_call.1} parent=87 // pred_check
          %p615 = pneg %p126
        $region94: #{tpu_custom_call.1} parent=87 // pred_check_branch
          %617 = sbr.rel (%p615) target = $region96
        $region95: #{tpu_custom_call.1} parent=87 // pred_region
          %618 = dma.done [#allocation6], 2048
        $region96: #{tpu_custom_call.1} parent=87 // pred_fallthru
          _
        // Predicated region
        $region97: #{tpu_custom_call.1} parent=87 // pred_check
          %p619 = pneg %p168
        $region98: #{tpu_custom_call.1} parent=87 // pred_check_branch
          %621 = sbr.rel (%p619) target = $region100
        $region99: #{tpu_custom_call.1} parent=87 // pred_region
          %622 = dma.done [#allocation6], 2048
        $region100: #{tpu_custom_call.1} parent=87 // pred_fallthru
          _
        // Predicated region
        $region101: #{tpu_custom_call.1} parent=87 // pred_check
          %p623 = pneg %p210
        $region102: #{tpu_custom_call.1} parent=87 // pred_check_branch
          %625 = sbr.rel (%p623) target = $region104
        $region103: #{tpu_custom_call.1} parent=87 // pred_region
          %626 = dma.done [#allocation9], 2048
        $region104: #{tpu_custom_call.1} parent=87 // pred_fallthru
          _
        // Predicated region
        $region105: #{tpu_custom_call.1} parent=87 // pred_check
          %p627 = pneg %p252
        $region106: #{tpu_custom_call.1} parent=87 // pred_check_branch
          %629 = sbr.rel (%p627) target = $region108
        $region107: #{tpu_custom_call.1} parent=87 // pred_region
          %630 = dma.done [#allocation9], 2048
        $region108: #{tpu_custom_call.1} parent=87 // pred_fallthru
          _
        // Predicated region
        $region109: #{tpu_custom_call.1} parent=87 // pred_check
          %p631 = pneg %p336
        $region110: #{tpu_custom_call.1} parent=87 // pred_check_branch
          %633 = sbr.rel (%p631) target = $region112
        $region111: #{tpu_custom_call.1} parent=87 // pred_region
          %634 = dma.done [#allocation12], 8192
        $region112: #{tpu_custom_call.1} parent=87 // pred_fallthru
          _
        // Predicated region
        $region113: #{tpu_custom_call.1} parent=87 // pred_check
          %p635 = pneg %p378
        $region114: #{tpu_custom_call.1} parent=87 // pred_check_branch
          %637 = sbr.rel (%p635) target = $region116
        $region115: #{tpu_custom_call.1} parent=87 // pred_region
          %638 = dma.done [#allocation12], 8192
        $region116: #{tpu_custom_call.1} parent=87 // pred_fallthru
          _
        %s639 = sand.u32 %s50, 1
        %s640 = scalar_lea.sflag [#allocation3], %s639
        %s641 = sand.u32 %s50, 1
        %s642 = smul.addr %s641, 128
        %s643 = scalar_lea.vmem [#allocation2], %s642
        %p644 = pneg %p63
        %p645 = pneg %p60
        %p646 = pneg %p84
        %p647 = pneg %p81
        %p648 = pneg %p105
        %p649 = pneg %p102
        %p650 = pneg %p126
        %p651 = pneg %p123
        %p652 = pneg %p147
        %p653 = pneg %p144
        %p654 = pneg %p168
        %p655 = pneg %p165
        %p656 = pneg %p189
        %p657 = pneg %p186
        %p658 = pneg %p210
        %p659 = pneg %p207
        %p660 = pneg %p231
        %p661 = pneg %p228
        %p662 = pneg %p252
        %p663 = pneg %p249
        %p664 = pneg %p273
        %p665 = pneg %p270
        %p666 = pneg %p294
        %p667 = pneg %p291
        %p668 = pneg %p315
        %p669 = pneg %p312
        %p670 = pneg %p336
        %p671 = pneg %p333
        %p672 = pneg %p357
        %p673 = pneg %p354
        %p674 = pneg %p378
        %p675 = pneg %p375
        %p676 = pneg %p399
        %p677 = pneg %p396
        %p678 = pneg %p425
        %p679 = pneg %p422
        %s680 = sand.u32 %s412, 1
        %s681 = scalar_lea.sflag [#allocation4], %s680
        %s682 = sand.u32 %s412, 1
        %s683 = smul.addr %s682, 128
        %s684 = scalar_lea.vmem [#allocation14], %s683
        %p685 = pneg %p451
        %p686 = pneg %p448
        %s687 = sand.u32 %s438, 1
        %s688 = scalar_lea.sflag [#allocation16], %s687
        %s689 = sand.u32 %s438, 1
        %s690 = smul.addr %s689, 512
        %s691 = scalar_lea.vmem [#allocation15], %s690
        %v692 = vld [vmem:[%s610] sm:$0xff]
        %v693 = vld [vmem:[%s610 + $0x8] sm:$0xff]
        %v694 = vld [vmem:[%s610 + $0x10] sm:$0xff]
        %v695 = vld [vmem:[%s610 + $0x18] sm:$0xff]
        %v696 = vld [vmem:[%s610 + $0x20] sm:$0xff]
        %v697 = vld [vmem:[%s610 + $0x28] sm:$0xff]
        %v698 = vld [vmem:[%s610 + $0x30] sm:$0xff]
        %v699 = vld [vmem:[%s610 + $0x38] sm:$0xff]
        %v700 = vld [vmem:[%s610 + $0x40] sm:$0xff]
        %v701 = vld [vmem:[%s610 + $0x48] sm:$0xff]
        %v702 = vld [vmem:[%s610 + $0x50] sm:$0xff]
        %v703 = vld [vmem:[%s610 + $0x58] sm:$0xff]
        %v704 = vld [vmem:[%s610 + $0x60] sm:$0xff]
        %v705 = vld [vmem:[%s610 + $0x68] sm:$0xff]
        %v706 = vld [vmem:[%s610 + $0x70] sm:$0xff]
        %v707 = vld [vmem:[%s610 + $0x78] sm:$0xff]
        %v708 = vld [vmem:[%s1] sm:$0x1]
        %v709 = vld [vmem:[%s2] sm:$0x1]
        %710 = vadd.xlane.f32.xlu0 %v692
        %v711 = vpop.xlane.xlu0 %710
        %712 = vadd.xlane.f32.xlu0 %v693
        %v713 = vpop.xlane.xlu0 %712
        %714 = vadd.xlane.f32.xlu0 %v694
        %v715 = vpop.xlane.xlu0 %714
        %716 = vadd.xlane.f32.xlu0 %v695
        %v717 = vpop.xlane.xlu0 %716
        %718 = vadd.xlane.f32.xlu0 %v696
        %v719 = vpop.xlane.xlu0 %718
        %720 = vadd.xlane.f32.xlu0 %v697
        %v721 = vpop.xlane.xlu0 %720
        %722 = vadd.xlane.f32.xlu0 %v698
        %v723 = vpop.xlane.xlu0 %722
        %724 = vadd.xlane.f32.xlu0 %v699
        %v725 = vpop.xlane.xlu0 %724
        %726 = vadd.xlane.f32.xlu0 %v700
        %v727 = vpop.xlane.xlu0 %726
        %728 = vadd.xlane.f32.xlu0 %v701
        %v729 = vpop.xlane.xlu0 %728
        %730 = vadd.xlane.f32.xlu0 %v702
        %v731 = vpop.xlane.xlu0 %730
        %732 = vadd.xlane.f32.xlu0 %v703
        %v733 = vpop.xlane.xlu0 %732
        %734 = vadd.xlane.f32.xlu0 %v704
        %v735 = vpop.xlane.xlu0 %734
        %736 = vadd.xlane.f32.xlu0 %v705
        %v737 = vpop.xlane.xlu0 %736
        %738 = vadd.xlane.f32.xlu0 %v706
        %v739 = vpop.xlane.xlu0 %738
        %740 = vadd.xlane.f32.xlu0 %v707
        %v741 = vpop.xlane.xlu0 %740
        %v742 = vrcp.pop 128.0
        %v743 = vmul.f32 %v711, %v742
        %v744 = vmul.f32 %v713, %v742
        %v745 = vmul.f32 %v715, %v742
        %v746 = vmul.f32 %v717, %v742
        %v747 = vmul.f32 %v719, %v742
        %v748 = vmul.f32 %v721, %v742
        %v749 = vmul.f32 %v723, %v742
        %v750 = vmul.f32 %v725, %v742
        %v751 = vmul.f32 %v727, %v742
        %v752 = vmul.f32 %v729, %v742
        %v753 = vmul.f32 %v731, %v742
        %v754 = vmul.f32 %v733, %v742
        %v755 = vmul.f32 %v735, %v742
        %v756 = vmul.f32 %v737, %v742
        %v757 = vmul.f32 %v739, %v742
        %v758 = vmul.f32 %v741, %v742
        %v759 = vsub.f32 %v692, %v743
        %v760 = vsub.f32 %v693, %v744
        %v761 = vsub.f32 %v694, %v745
        %v762 = vsub.f32 %v695, %v746
        %v763 = vsub.f32 %v696, %v747
        %v764 = vsub.f32 %v697, %v748
        %v765 = vsub.f32 %v698, %v749
        %v766 = vsub.f32 %v699, %v750
        %v767 = vsub.f32 %v700, %v751
        %v768 = vsub.f32 %v701, %v752
        %v769 = vsub.f32 %v702, %v753
        %v770 = vsub.f32 %v703, %v754
        %v771 = vsub.f32 %v704, %v755
        %v772 = vsub.f32 %v705, %v756
        %v773 = vsub.f32 %v706, %v757
        %v774 = vsub.f32 %v707, %v758
        %v775 = vmul.f32 %v759, %v759
        %v776 = vmul.f32 %v760, %v760
        %v777 = vmul.f32 %v761, %v761
        %v778 = vmul.f32 %v762, %v762
        %v779 = vmul.f32 %v763, %v763
        %v780 = vmul.f32 %v764, %v764
        %v781 = vmul.f32 %v765, %v765
        %v782 = vmul.f32 %v766, %v766
        %v783 = vmul.f32 %v767, %v767
        %v784 = vmul.f32 %v768, %v768
        %v785 = vmul.f32 %v769, %v769
        %v786 = vmul.f32 %v770, %v770
        %v787 = vmul.f32 %v771, %v771
        %v788 = vmul.f32 %v772, %v772
        %v789 = vmul.f32 %v773, %v773
        %v790 = vmul.f32 %v774, %v774
        %791 = vadd.xlane.f32.xlu0 %v775
        %v792 = vpop.xlane.xlu0 %791
        %793 = vadd.xlane.f32.xlu0 %v776
        %v794 = vpop.xlane.xlu0 %793
        %795 = vadd.xlane.f32.xlu0 %v777
        %v796 = vpop.xlane.xlu0 %795
        %797 = vadd.xlane.f32.xlu0 %v778
        %v798 = vpop.xlane.xlu0 %797
        %799 = vadd.xlane.f32.xlu0 %v779
        %v800 = vpop.xlane.xlu0 %799
        %801 = vadd.xlane.f32.xlu0 %v780
        %v802 = vpop.xlane.xlu0 %801
        %803 = vadd.xlane.f32.xlu0 %v781
        %v804 = vpop.xlane.xlu0 %803
        %805 = vadd.xlane.f32.xlu0 %v782
        %v806 = vpop.xlane.xlu0 %805
        %807 = vadd.xlane.f32.xlu0 %v783
        %v808 = vpop.xlane.xlu0 %807
        %809 = vadd.xlane.f32.xlu0 %v784
        %v810 = vpop.xlane.xlu0 %809
        %811 = vadd.xlane.f32.xlu0 %v785
        %v812 = vpop.xlane.xlu0 %811
        %813 = vadd.xlane.f32.xlu0 %v786
        %v814 = vpop.xlane.xlu0 %813
        %815 = vadd.xlane.f32.xlu0 %v787
        %v816 = vpop.xlane.xlu0 %815
        %817 = vadd.xlane.f32.xlu0 %v788
        %v818 = vpop.xlane.xlu0 %817
        %819 = vadd.xlane.f32.xlu0 %v789
        %v820 = vpop.xlane.xlu0 %819
        %821 = vadd.xlane.f32.xlu0 %v790
        %v822 = vpop.xlane.xlu0 %821
        %v823 = vmul.f32 %v792, %v742
        %v824 = vmul.f32 %v794, %v742
        %v825 = vmul.f32 %v796, %v742
        %v826 = vmul.f32 %v798, %v742
        %v827 = vmul.f32 %v800, %v742
        %v828 = vmul.f32 %v802, %v742
        %v829 = vmul.f32 %v804, %v742
        %v830 = vmul.f32 %v806, %v742
        %v831 = vmul.f32 %v808, %v742
        %v832 = vmul.f32 %v810, %v742
        %v833 = vmul.f32 %v812, %v742
        %v834 = vmul.f32 %v814, %v742
        %v835 = vmul.f32 %v816, %v742
        %v836 = vmul.f32 %v818, %v742
        %v837 = vmul.f32 %v820, %v742
        %v838 = vmul.f32 %v822, %v742
        %v839 = vadd.f32 %v823, 1e-06
        %v840 = vadd.f32 %v824, 1e-06
        %v841 = vadd.f32 %v825, 1e-06
        %v842 = vadd.f32 %v826, 1e-06
        %v843 = vadd.f32 %v827, 1e-06
        %v844 = vadd.f32 %v828, 1e-06
        %v845 = vadd.f32 %v829, 1e-06
        %v846 = vadd.f32 %v830, 1e-06
        %v847 = vadd.f32 %v831, 1e-06
        %v848 = vadd.f32 %v832, 1e-06
        %v849 = vadd.f32 %v833, 1e-06
        %v850 = vadd.f32 %v834, 1e-06
        %v851 = vadd.f32 %v835, 1e-06
        %v852 = vadd.f32 %v836, 1e-06
        %v853 = vadd.f32 %v837, 1e-06
        %v854 = vadd.f32 %v838, 1e-06
        %v855 = vrsqrt.pop %v839
        %v856 = vrsqrt.pop %v840
        %v857 = vrsqrt.pop %v841
        %v858 = vrsqrt.pop %v842
        %v859 = vrsqrt.pop %v843
        %v860 = vrsqrt.pop %v844
        %v861 = vrsqrt.pop %v845
        %v862 = vrsqrt.pop %v846
        %v863 = vrsqrt.pop %v847
        %v864 = vrsqrt.pop %v848
        %v865 = vrsqrt.pop %v849
        %v866 = vrsqrt.pop %v850
        %v867 = vrsqrt.pop %v851
        %v868 = vrsqrt.pop %v852
        %v869 = vrsqrt.pop %v853
        %v870 = vrsqrt.pop %v854
        %v871 = vmul.f32 %v759, %v855
        %v872 = vmul.f32 %v760, %v856
        %v873 = vmul.f32 %v761, %v857
        %v874 = vmul.f32 %v762, %v858
        %v875 = vmul.f32 %v763, %v859
        %v876 = vmul.f32 %v764, %v860
        %v877 = vmul.f32 %v765, %v861
        %v878 = vmul.f32 %v766, %v862
        %v879 = vmul.f32 %v767, %v863
        %v880 = vmul.f32 %v768, %v864
        %v881 = vmul.f32 %v769, %v865
        %v882 = vmul.f32 %v770, %v866
        %v883 = vmul.f32 %v771, %v867
        %v884 = vmul.f32 %v772, %v868
        %v885 = vmul.f32 %v773, %v869
        %v886 = vmul.f32 %v774, %v870
        %v888 = vlaneseq
        %v889 = vshrl.u32 %v888, 7
        %v890 = vsub.s32 0, %v889
        %v891 = vrot.slane %v708, %v890
        %v893 = vmul.f32 %v871, %v891
        %v894 = vmul.f32 %v872, %v891
        %v895 = vmul.f32 %v873, %v891
        %v896 = vmul.f32 %v874, %v891
        %v897 = vmul.f32 %v875, %v891
        %v898 = vmul.f32 %v876, %v891
        %v899 = vmul.f32 %v877, %v891
        %v900 = vmul.f32 %v878, %v891
        %v901 = vmul.f32 %v879, %v891
        %v902 = vmul.f32 %v880, %v891
        %v903 = vmul.f32 %v881, %v891
        %v904 = vmul.f32 %v882, %v891
        %v905 = vmul.f32 %v883, %v891
        %v906 = vmul.f32 %v884, %v891
        %v907 = vmul.f32 %v885, %v891
        %v908 = vmul.f32 %v886, %v891
        %v910 = vlaneseq
        %v911 = vshrl.u32 %v910, 7
        %v912 = vsub.s32 0, %v911
        %v913 = vrot.slane %v709, %v912
        %v915 = vadd.f32 %v893, %v913
        %v916 = vadd.f32 %v894, %v913
        %v917 = vadd.f32 %v895, %v913
        %v918 = vadd.f32 %v896, %v913
        %v919 = vadd.f32 %v897, %v913
        %v920 = vadd.f32 %v898, %v913
        %v921 = vadd.f32 %v899, %v913
        %v922 = vadd.f32 %v900, %v913
        %v923 = vadd.f32 %v901, %v913
        %v924 = vadd.f32 %v902, %v913
        %v925 = vadd.f32 %v903, %v913
        %v926 = vadd.f32 %v904, %v913
        %v927 = vadd.f32 %v905, %v913
        %v928 = vadd.f32 %v906, %v913
        %v929 = vadd.f32 %v907, %v913
        %v930 = vadd.f32 %v908, %v913
        %v931 = vld [vmem:[#allocation5] sm:$0xff]
        %v932 = vld [vmem:[#allocation5 + $0x8] sm:$0xff]
        %v933 = vld [vmem:[#allocation5 + $0x10] sm:$0xff]
        %v934 = vld [vmem:[#allocation5 + $0x18] sm:$0xff]
        %v935 = vld [vmem:[#allocation5 + $0x20] sm:$0xff]
        %v936 = vld [vmem:[#allocation5 + $0x28] sm:$0xff]
        %v937 = vld [vmem:[#allocation5 + $0x30] sm:$0xff]
        %v938 = vld [vmem:[#allocation5 + $0x38] sm:$0xff]
        %v939 = vld [vmem:[#allocation5 + $0x40] sm:$0xff]
        %v940 = vld [vmem:[#allocation5 + $0x48] sm:$0xff]
        %v941 = vld [vmem:[#allocation5 + $0x50] sm:$0xff]
        %v942 = vld [vmem:[#allocation5 + $0x58] sm:$0xff]
        %v943 = vld [vmem:[#allocation5 + $0x60] sm:$0xff]
        %v944 = vld [vmem:[#allocation5 + $0x68] sm:$0xff]
        %v945 = vld [vmem:[#allocation5 + $0x70] sm:$0xff]
        %v946 = vld [vmem:[#allocation5 + $0x78] sm:$0xff]
        %v947 = vld [vmem:[%s4] sm:$0x1]
        %v949 = vlaneseq
        %v950 = vshrl.u32 %v949, 7
        %v951 = vsub.s32 0, %v950
        %v952 = vrot.slane %v947, %v951
        %954 = vmatprep.subr.mxu0 0.0
        %955 = vmatpush1.msra.mxu0 %v931
        %956 = vmatprep.subr.mxu0 0.0
        %957 = vmatpush1.msra.mxu0 %v932
        %958 = vmatprep.subr.mxu0 0.0
        %959 = vmatpush1.msra.mxu0 %v933
        %960 = vmatprep.subr.mxu0 0.0
        %961 = vmatpush1.msra.mxu0 %v934
        %962 = vmatprep.subr.mxu0 0.0
        %963 = vmatpush1.msra.mxu0 %v935
        %964 = vmatprep.subr.mxu0 0.0
        %965 = vmatpush1.msra.mxu0 %v936
        %966 = vmatprep.subr.mxu0 0.0
        %967 = vmatpush1.msra.mxu0 %v937
        %968 = vmatprep.subr.mxu0 0.0
        %969 = vmatpush1.msra.mxu0 %v938
        %970 = vmatprep.subr.mxu0 0.0
        %971 = vmatpush1.msra.mxu0 %v939
        %972 = vmatprep.subr.mxu0 0.0
        %973 = vmatpush1.msra.mxu0 %v940
        %974 = vmatprep.subr.mxu0 0.0
        %975 = vmatpush1.msra.mxu0 %v941
        %976 = vmatprep.subr.mxu0 0.0
        %977 = vmatpush1.msra.mxu0 %v942
        %978 = vmatprep.subr.mxu0 0.0
        %979 = vmatpush1.msra.mxu0 %v943
        %980 = vmatprep.subr.mxu0 0.0
        %981 = vmatpush1.msra.mxu0 %v944
        %982 = vmatprep.subr.mxu0 0.0
        %983 = vmatpush1.msra.mxu0 %v945
        %984 = vmatprep.subr.mxu0 0.0
        %985 = vmatpush1.msra.mxu0 %v946
        %986 = vmatprep.subr.mxu0 0.0
        %987 = vmatpush1.msra.mxu0 0.0
        %988 = vmatprep.subr.mxu0 0.0
        %989 = vmatpush1.msra.mxu0 0.0
        %990 = vmatprep.subr.mxu0 0.0
        %991 = vmatpush1.msra.mxu0 0.0
        %992 = vmatprep.subr.mxu0 0.0
        %993 = vmatpush1.msra.mxu0 0.0
        %994 = vmatprep.subr.mxu0 0.0
        %995 = vmatpush1.msra.mxu0 0.0
        %996 = vmatprep.subr.mxu0 0.0
        %997 = vmatpush1.msra.mxu0 0.0
        %998 = vmatprep.subr.mxu0 0.0
        %999 = vmatpush1.msra.mxu0 0.0
        %1000 = vmatprep.subr.mxu0 0.0
        %1001 = vmatpush1.msra.mxu0 0.0
        %1002 = vmatprep.subr.mxu0 0.0
        %1003 = vmatpush1.msra.mxu0 0.0
        %1004 = vmatprep.subr.mxu0 0.0
        %1005 = vmatpush1.msra.mxu0 0.0
        %1006 = vmatprep.subr.mxu0 0.0
        %1007 = vmatpush1.msra.mxu0 0.0
        %1008 = vmatprep.subr.mxu0 0.0
        %1009 = vmatpush1.msra.mxu0 0.0
        %1010 = vmatprep.subr.mxu0 0.0
        %1011 = vmatpush1.msra.mxu0 0.0
        %1012 = vmatprep.subr.mxu0 0.0
        %1013 = vmatpush1.msra.mxu0 0.0
        %1014 = vmatprep.subr.mxu0 0.0
        %1015 = vmatpush1.msra.mxu0 0.0
        %1016 = vmatprep.subr.mxu0 0.0
        %1017 = vmatpush1.msra.mxu0 0.0
        %1018 = vmatprep.mubr.f32.mxu0 0.0
        %1019 = vmatmul.mubr.f32.gmra.mrb[0].mxu0 %v915
        %v1020 = vpop.f32.mrb[0].mxu0
        %v1021 = vadd.f32 %v952, %v1020
        %v1022 = vpop.f32.mrb[0].mxu0
        %1023 = vmatprep.mubr.f32.mxu0 0.0
        %1024 = vmatmul.mubr.f32.gmra.mrb[0].mxu0 %v916
        %v1025 = vpop.f32.mrb[0].mxu0
        %v1026 = vadd.f32 %v952, %v1025
        %v1027 = vpop.f32.mrb[0].mxu0
        %1028 = vmatprep.mubr.f32.mxu0 0.0
        %1029 = vmatmul.mubr.f32.gmra.mrb[0].mxu0 %v917
        %v1030 = vpop.f32.mrb[0].mxu0
        %v1031 = vadd.f32 %v952, %v1030
        %v1032 = vpop.f32.mrb[0].mxu0
        %1033 = vmatprep.mubr.f32.mxu0 0.0
        %1034 = vmatmul.mubr.f32.gmra.mrb[0].mxu0 %v918
        %v1035 = vpop.f32.mrb[0].mxu0
        %v1036 = vadd.f32 %v952, %v1035
        %v1037 = vpop.f32.mrb[0].mxu0
        %1038 = vmatprep.mubr.f32.mxu0 0.0
        %1039 = vmatmul.mubr.f32.gmra.mrb[0].mxu0 %v919
        %v1040 = vpop.f32.mrb[0].mxu0
        %v1041 = vadd.f32 %v952, %v1040
        %v1042 = vpop.f32.mrb[0].mxu0
        %1043 = vmatprep.mubr.f32.mxu0 0.0
        %1044 = vmatmul.mubr.f32.gmra.mrb[0].mxu0 %v920
        %v1045 = vpop.f32.mrb[0].mxu0
        %v1046 = vadd.f32 %v952, %v1045
        %v1047 = vpop.f32.mrb[0].mxu0
        %1048 = vmatprep.mubr.f32.mxu0 0.0
        %1049 = vmatmul.mubr.f32.gmra.mrb[0].mxu0 %v921
        %v1050 = vpop.f32.mrb[0].mxu0
        %v1051 = vadd.f32 %v952, %v1050
        %v1052 = vpop.f32.mrb[0].mxu0
        %1053 = vmatprep.mubr.f32.mxu0 0.0
        %1054 = vmatmul.mubr.f32.gmra.mrb[0].mxu0 %v922
        %v1055 = vpop.f32.mrb[0].mxu0
        %v1056 = vadd.f32 %v952, %v1055
        %v1057 = vpop.f32.mrb[0].mxu0
        %1058 = vmatprep.mubr.f32.mxu0 0.0
        %1059 = vmatmul.mubr.f32.gmra.mrb[0].mxu0 %v923
        %v1060 = vpop.f32.mrb[0].mxu0
        %v1061 = vadd.f32 %v952, %v1060
        %v1062 = vpop.f32.mrb[0].mxu0
        %1063 = vmatprep.mubr.f32.mxu0 0.0
        %1064 = vmatmul.mubr.f32.gmra.mrb[0].mxu0 %v924
        %v1065 = vpop.f32.mrb[0].mxu0
        %v1066 = vadd.f32 %v952, %v1065
        %v1067 = vpop.f32.mrb[0].mxu0
        %1068 = vmatprep.mubr.f32.mxu0 0.0
        %1069 = vmatmul.mubr.f32.gmra.mrb[0].mxu0 %v925
        %v1070 = vpop.f32.mrb[0].mxu0
        %v1071 = vadd.f32 %v952, %v1070
        %v1072 = vpop.f32.mrb[0].mxu0
        %1073 = vmatprep.mubr.f32.mxu0 0.0
        %1074 = vmatmul.mubr.f32.gmra.mrb[0].mxu0 %v926
        %v1075 = vpop.f32.mrb[0].mxu0
        %v1076 = vadd.f32 %v952, %v1075
        %v1077 = vpop.f32.mrb[0].mxu0
        %1078 = vmatprep.mubr.f32.mxu0 0.0
        %1079 = vmatmul.mubr.f32.gmra.mrb[0].mxu0 %v927
        %v1080 = vpop.f32.mrb[0].mxu0
        %v1081 = vadd.f32 %v952, %v1080
        %v1082 = vpop.f32.mrb[0].mxu0
        %1083 = vmatprep.mubr.f32.mxu0 0.0
        %1084 = vmatmul.mubr.f32.gmra.mrb[0].mxu0 %v928
        %v1085 = vpop.f32.mrb[0].mxu0
        %v1086 = vadd.f32 %v952, %v1085
        %v1087 = vpop.f32.mrb[0].mxu0
        %1088 = vmatprep.mubr.f32.mxu0 0.0
        %1089 = vmatmul.mubr.f32.gmra.mrb[0].mxu0 %v929
        %v1090 = vpop.f32.mrb[0].mxu0
        %v1091 = vadd.f32 %v952, %v1090
        %v1092 = vpop.f32.mrb[0].mxu0
        %1093 = vmatprep.mubr.f32.mxu0 0.0
        %1094 = vmatmul.mubr.f32.gmra.mrb[0].mxu0 %v930
        %v1095 = vpop.f32.mrb[0].mxu0
        %v1096 = vadd.f32 %v952, %v1095
        %v1097 = vpop.f32.mrb[0].mxu0
        %1098 = vdwg.mxu0
        %v1099 = vld [vmem:[#allocation7] sm:$0xff]
        %v1100 = vld [vmem:[#allocation7 + $0x8] sm:$0xff]
        %v1101 = vld [vmem:[#allocation7 + $0x10] sm:$0xff]
        %v1102 = vld [vmem:[#allocation7 + $0x18] sm:$0xff]
        %v1103 = vld [vmem:[#allocation7 + $0x20] sm:$0xff]
        %v1104 = vld [vmem:[#allocation7 + $0x28] sm:$0xff]
        %v1105 = vld [vmem:[#allocation7 + $0x30] sm:$0xff]
        %v1106 = vld [vmem:[#allocation7 + $0x38] sm:$0xff]
        %v1107 = vld [vmem:[#allocation7 + $0x40] sm:$0xff]
        %v1108 = vld [vmem:[#allocation7 + $0x48] sm:$0xff]
        %v1109 = vld [vmem:[#allocation7 + $0x50] sm:$0xff]
        %v1110 = vld [vmem:[#allocation7 + $0x58] sm:$0xff]
        %v1111 = vld [vmem:[#allocation7 + $0x60] sm:$0xff]
        %v1112 = vld [vmem:[#allocation7 + $0x68] sm:$0xff]
        %v1113 = vld [vmem:[#allocation7 + $0x70] sm:$0xff]
        %v1114 = vld [vmem:[#allocation7 + $0x78] sm:$0xff]
        %v1115 = vld [vmem:[%s6] sm:$0x1]
        %v1117 = vlaneseq
        %v1118 = vshrl.u32 %v1117, 7
        %v1119 = vsub.s32 0, %v1118
        %v1120 = vrot.slane %v1115, %v1119
        %1122 = vmatprep.subr.mxu0 0.0
        %1123 = vmatpush1.msra.mxu0 %v1099
        %1124 = vmatprep.subr.mxu0 0.0
        %1125 = vmatpush1.msra.mxu0 %v1100
        %1126 = vmatprep.subr.mxu0 0.0
        %1127 = vmatpush1.msra.mxu0 %v1101
        %1128 = vmatprep.subr.mxu0 0.0
        %1129 = vmatpush1.msra.mxu0 %v1102
        %1130 = vmatprep.subr.mxu0 0.0
        %1131 = vmatpush1.msra.mxu0 %v1103
        %1132 = vmatprep.subr.mxu0 0.0
        %1133 = vmatpush1.msra.mxu0 %v1104
        %1134 = vmatprep.subr.mxu0 0.0
        %1135 = vmatpush1.msra.mxu0 %v1105
        %1136 = vmatprep.subr.mxu0 0.0
        %1137 = vmatpush1.msra.mxu0 %v1106
        %1138 = vmatprep.subr.mxu0 0.0
        %1139 = vmatpush1.msra.mxu0 %v1107
        %1140 = vmatprep.subr.mxu0 0.0
        %1141 = vmatpush1.msra.mxu0 %v1108
        %1142 = vmatprep.subr.mxu0 0.0
        %1143 = vmatpush1.msra.mxu0 %v1109
        %1144 = vmatprep.subr.mxu0 0.0
        %1145 = vmatpush1.msra.mxu0 %v1110
        %1146 = vmatprep.subr.mxu0 0.0
        %1147 = vmatpush1.msra.mxu0 %v1111
        %1148 = vmatprep.subr.mxu0 0.0
        %1149 = vmatpush1.msra.mxu0 %v1112
        %1150 = vmatprep.subr.mxu0 0.0
        %1151 = vmatpush1.msra.mxu0 %v1113
        %1152 = vmatprep.subr.mxu0 0.0
        %1153 = vmatpush1.msra.mxu0 %v1114
        %1154 = vmatprep.subr.mxu0 0.0
        %1155 = vmatpush1.msra.mxu0 0.0
        %1156 = vmatprep.subr.mxu0 0.0
        %1157 = vmatpush1.msra.mxu0 0.0
        %1158 = vmatprep.subr.mxu0 0.0
        %1159 = vmatpush1.msra.mxu0 0.0
        %1160 = vmatprep.subr.mxu0 0.0
        %1161 = vmatpush1.msra.mxu0 0.0
        %1162 = vmatprep.subr.mxu0 0.0
        %1163 = vmatpush1.msra.mxu0 0.0
        %1164 = vmatprep.subr.mxu0 0.0
        %1165 = vmatpush1.msra.mxu0 0.0
        %1166 = vmatprep.subr.mxu0 0.0
        %1167 = vmatpush1.msra.mxu0 0.0
        %1168 = vmatprep.subr.mxu0 0.0
        %1169 = vmatpush1.msra.mxu0 0.0
        %1170 = vmatprep.subr.mxu0 0.0
        %1171 = vmatpush1.msra.mxu0 0.0
        %1172 = vmatprep.subr.mxu0 0.0
        %1173 = vmatpush1.msra.mxu0 0.0
        %1174 = vmatprep.subr.mxu0 0.0
        %1175 = vmatpush1.msra.mxu0 0.0
        %1176 = vmatprep.subr.mxu0 0.0
        %1177 = vmatpush1.msra.mxu0 0.0
        %1178 = vmatprep.subr.mxu0 0.0
        %1179 = vmatpush1.msra.mxu0 0.0
        %1180 = vmatprep.subr.mxu0 0.0
        %1181 = vmatpush1.msra.mxu0 0.0
        %1182 = vmatprep.subr.mxu0 0.0
        %1183 = vmatpush1.msra.mxu0 0.0
        %1184 = vmatprep.subr.mxu0 0.0
        %1185 = vmatpush1.msra.mxu0 0.0
        %1186 = vmatprep.mubr.f32.mxu0 0.0
        %1187 = vmatmul.mubr.f32.gmra.mrb[0].mxu0 %v915
        %v1188 = vpop.f32.mrb[0].mxu0
        %v1189 = vadd.f32 %v1120, %v1188
        %v1190 = vpop.f32.mrb[0].mxu0
        %1191 = vmatprep.mubr.f32.mxu0 0.0
        %1192 = vmatmul.mubr.f32.gmra.mrb[0].mxu0 %v916
        %v1193 = vpop.f32.mrb[0].mxu0
        %v1194 = vadd.f32 %v1120, %v1193
        %v1195 = vpop.f32.mrb[0].mxu0
        %1196 = vmatprep.mubr.f32.mxu0 0.0
        %1197 = vmatmul.mubr.f32.gmra.mrb[0].mxu0 %v917
        %v1198 = vpop.f32.mrb[0].mxu0
        %v1199 = vadd.f32 %v1120, %v1198
        %v1200 = vpop.f32.mrb[0].mxu0
        %1201 = vmatprep.mubr.f32.mxu0 0.0
        %1202 = vmatmul.mubr.f32.gmra.mrb[0].mxu0 %v918
        %v1203 = vpop.f32.mrb[0].mxu0
        %v1204 = vadd.f32 %v1120, %v1203
        %v1205 = vpop.f32.mrb[0].mxu0
        %1206 = vmatprep.mubr.f32.mxu0 0.0
        %1207 = vmatmul.mubr.f32.gmra.mrb[0].mxu0 %v919
        %v1208 = vpop.f32.mrb[0].mxu0
        %v1209 = vadd.f32 %v1120, %v1208
        %v1210 = vpop.f32.mrb[0].mxu0
        %1211 = vmatprep.mubr.f32.mxu0 0.0
        %1212 = vmatmul.mubr.f32.gmra.mrb[0].mxu0 %v920
        %v1213 = vpop.f32.mrb[0].mxu0
        %v1214 = vadd.f32 %v1120, %v1213
        %v1215 = vpop.f32.mrb[0].mxu0
        %1216 = vmatprep.mubr.f32.mxu0 0.0
        %1217 = vmatmul.mubr.f32.gmra.mrb[0].mxu0 %v921
        %v1218 = vpop.f32.mrb[0].mxu0
        %v1219 = vadd.f32 %v1120, %v1218
        %v1220 = vpop.f32.mrb[0].mxu0
        %1221 = vmatprep.mubr.f32.mxu0 0.0
        %1222 = vmatmul.mubr.f32.gmra.mrb[0].mxu0 %v922
        %v1223 = vpop.f32.mrb[0].mxu0
        %v1224 = vadd.f32 %v1120, %v1223
        %v1225 = vpop.f32.mrb[0].mxu0
        %1226 = vmatprep.mubr.f32.mxu0 0.0
        %1227 = vmatmul.mubr.f32.gmra.mrb[0].mxu0 %v923
        %v1228 = vpop.f32.mrb[0].mxu0
        %v1229 = vadd.f32 %v1120, %v1228
        %v1230 = vpop.f32.mrb[0].mxu0
        %1231 = vmatprep.mubr.f32.mxu0 0.0
        %1232 = vmatmul.mubr.f32.gmra.mrb[0].mxu0 %v924
        %v1233 = vpop.f32.mrb[0].mxu0
        %v1234 = vadd.f32 %v1120, %v1233
        %v1235 = vpop.f32.mrb[0].mxu0
        %1236 = vmatprep.mubr.f32.mxu0 0.0
        %1237 = vmatmul.mubr.f32.gmra.mrb[0].mxu0 %v925
        %v1238 = vpop.f32.mrb[0].mxu0
        %v1239 = vadd.f32 %v1120, %v1238
        %v1240 = vpop.f32.mrb[0].mxu0
        %1241 = vmatprep.mubr.f32.mxu0 0.0
        %1242 = vmatmul.mubr.f32.gmra.mrb[0].mxu0 %v926
        %v1243 = vpop.f32.mrb[0].mxu0
        %v1244 = vadd.f32 %v1120, %v1243
        %v1245 = vpop.f32.mrb[0].mxu0
        %1246 = vmatprep.mubr.f32.mxu0 0.0
        %1247 = vmatmul.mubr.f32.gmra.mrb[0].mxu0 %v927
        %v1248 = vpop.f32.mrb[0].mxu0
        %v1249 = vadd.f32 %v1120, %v1248
        %v1250 = vpop.f32.mrb[0].mxu0
        %1251 = vmatprep.mubr.f32.mxu0 0.0
        %1252 = vmatmul.mubr.f32.gmra.mrb[0].mxu0 %v928
        %v1253 = vpop.f32.mrb[0].mxu0
        %v1254 = vadd.f32 %v1120, %v1253
        %v1255 = vpop.f32.mrb[0].mxu0
        %1256 = vmatprep.mubr.f32.mxu0 0.0
        %1257 = vmatmul.mubr.f32.gmra.mrb[0].mxu0 %v929
        %v1258 = vpop.f32.mrb[0].mxu0
        %v1259 = vadd.f32 %v1120, %v1258
        %v1260 = vpop.f32.mrb[0].mxu0
        %1261 = vmatprep.mubr.f32.mxu0 0.0
        %1262 = vmatmul.mubr.f32.gmra.mrb[0].mxu0 %v930
        %v1263 = vpop.f32.mrb[0].mxu0
        %v1264 = vadd.f32 %v1120, %v1263
        %v1265 = vpop.f32.mrb[0].mxu0
        %1266 = vdwg.mxu0
        %v1267 = vld [vmem:[#allocation8] sm:$0xff]
        %v1268 = vld [vmem:[#allocation8 + $0x8] sm:$0xff]
        %v1269 = vld [vmem:[#allocation8 + $0x10] sm:$0xff]
        %v1270 = vld [vmem:[#allocation8 + $0x18] sm:$0xff]
        %v1271 = vld [vmem:[#allocation8 + $0x20] sm:$0xff]
        %v1272 = vld [vmem:[#allocation8 + $0x28] sm:$0xff]
        %v1273 = vld [vmem:[#allocation8 + $0x30] sm:$0xff]
        %v1274 = vld [vmem:[#allocation8 + $0x38] sm:$0xff]
        %v1275 = vld [vmem:[#allocation8 + $0x40] sm:$0xff]
        %v1276 = vld [vmem:[#allocation8 + $0x48] sm:$0xff]
        %v1277 = vld [vmem:[#allocation8 + $0x50] sm:$0xff]
        %v1278 = vld [vmem:[#allocation8 + $0x58] sm:$0xff]
        %v1279 = vld [vmem:[#allocation8 + $0x60] sm:$0xff]
        %v1280 = vld [vmem:[#allocation8 + $0x68] sm:$0xff]
        %v1281 = vld [vmem:[#allocation8 + $0x70] sm:$0xff]
        %v1282 = vld [vmem:[#allocation8 + $0x78] sm:$0xff]
        %v1283 = vld [vmem:[%s8] sm:$0x1]
        %v1285 = vlaneseq
        %v1286 = vshrl.u32 %v1285, 7
        %v1287 = vsub.s32 0, %v1286
        %v1288 = vrot.slane %v1283, %v1287
        %1290 = vmatprep.subr.mxu0 0.0
        %1291 = vmatpush1.msra.mxu0 %v1267
        %1292 = vmatprep.subr.mxu0 0.0
        %1293 = vmatpush1.msra.mxu0 %v1268
        %1294 = vmatprep.subr.mxu0 0.0
        %1295 = vmatpush1.msra.mxu0 %v1269
        %1296 = vmatprep.subr.mxu0 0.0
        %1297 = vmatpush1.msra.mxu0 %v1270
        %1298 = vmatprep.subr.mxu0 0.0
        %1299 = vmatpush1.msra.mxu0 %v1271
        %1300 = vmatprep.subr.mxu0 0.0
        %1301 = vmatpush1.msra.mxu0 %v1272
        %1302 = vmatprep.subr.mxu0 0.0
        %1303 = vmatpush1.msra.mxu0 %v1273
        %1304 = vmatprep.subr.mxu0 0.0
        %1305 = vmatpush1.msra.mxu0 %v1274
        %1306 = vmatprep.subr.mxu0 0.0
        %1307 = vmatpush1.msra.mxu0 %v1275
        %1308 = vmatprep.subr.mxu0 0.0
        %1309 = vmatpush1.msra.mxu0 %v1276
        %1310 = vmatprep.subr.mxu0 0.0
        %1311 = vmatpush1.msra.mxu0 %v1277
        %1312 = vmatprep.subr.mxu0 0.0
        %1313 = vmatpush1.msra.mxu0 %v1278
        %1314 = vmatprep.subr.mxu0 0.0
        %1315 = vmatpush1.msra.mxu0 %v1279
        %1316 = vmatprep.subr.mxu0 0.0
        %1317 = vmatpush1.msra.mxu0 %v1280
        %1318 = vmatprep.subr.mxu0 0.0
        %1319 = vmatpush1.msra.mxu0 %v1281
        %1320 = vmatprep.subr.mxu0 0.0
        %1321 = vmatpush1.msra.mxu0 %v1282
        %1322 = vmatprep.subr.mxu0 0.0
        %1323 = vmatpush1.msra.mxu0 0.0
        %1324 = vmatprep.subr.mxu0 0.0
        %1325 = vmatpush1.msra.mxu0 0.0
        %1326 = vmatprep.subr.mxu0 0.0
        %1327 = vmatpush1.msra.mxu0 0.0
        %1328 = vmatprep.subr.mxu0 0.0
        %1329 = vmatpush1.msra.mxu0 0.0
        %1330 = vmatprep.subr.mxu0 0.0
        %1331 = vmatpush1.msra.mxu0 0.0
        %1332 = vmatprep.subr.mxu0 0.0
        %1333 = vmatpush1.msra.mxu0 0.0
        %1334 = vmatprep.subr.mxu0 0.0
        %1335 = vmatpush1.msra.mxu0 0.0
        %1336 = vmatprep.subr.mxu0 0.0
        %1337 = vmatpush1.msra.mxu0 0.0
        %1338 = vmatprep.subr.mxu0 0.0
        %1339 = vmatpush1.msra.mxu0 0.0
        %1340 = vmatprep.subr.mxu0 0.0
        %1341 = vmatpush1.msra.mxu0 0.0
        %1342 = vmatprep.subr.mxu0 0.0
        %1343 = vmatpush1.msra.mxu0 0.0
        %1344 = vmatprep.subr.mxu0 0.0
        %1345 = vmatpush1.msra.mxu0 0.0
        %1346 = vmatprep.subr.mxu0 0.0
        %1347 = vmatpush1.msra.mxu0 0.0
        %1348 = vmatprep.subr.mxu0 0.0
        %1349 = vmatpush1.msra.mxu0 0.0
        %1350 = vmatprep.subr.mxu0 0.0
        %1351 = vmatpush1.msra.mxu0 0.0
        %1352 = vmatprep.subr.mxu0 0.0
        %1353 = vmatpush1.msra.mxu0 0.0
        %1354 = vmatprep.mubr.f32.mxu0 0.0
        %1355 = vmatmul.mubr.f32.gmra.mrb[0].mxu0 %v915
        %v1356 = vpop.f32.mrb[0].mxu0
        %v1357 = vadd.f32 %v1288, %v1356
        %v1358 = vpop.f32.mrb[0].mxu0
        %1359 = vmatprep.mubr.f32.mxu0 0.0
        %1360 = vmatmul.mubr.f32.gmra.mrb[0].mxu0 %v916
        %v1361 = vpop.f32.mrb[0].mxu0
        %v1362 = vadd.f32 %v1288, %v1361
        %v1363 = vpop.f32.mrb[0].mxu0
        %1364 = vmatprep.mubr.f32.mxu0 0.0
        %1365 = vmatmul.mubr.f32.gmra.mrb[0].mxu0 %v917
        %v1366 = vpop.f32.mrb[0].mxu0
        %v1367 = vadd.f32 %v1288, %v1366
        %v1368 = vpop.f32.mrb[0].mxu0
        %1369 = vmatprep.mubr.f32.mxu0 0.0
        %1370 = vmatmul.mubr.f32.gmra.mrb[0].mxu0 %v918
        %v1371 = vpop.f32.mrb[0].mxu0
        %v1372 = vadd.f32 %v1288, %v1371
        %v1373 = vpop.f32.mrb[0].mxu0
        %1374 = vmatprep.mubr.f32.mxu0 0.0
        %1375 = vmatmul.mubr.f32.gmra.mrb[0].mxu0 %v919
        %v1376 = vpop.f32.mrb[0].mxu0
        %v1377 = vadd.f32 %v1288, %v1376
        %v1378 = vpop.f32.mrb[0].mxu0
        %1379 = vmatprep.mubr.f32.mxu0 0.0
        %1380 = vmatmul.mubr.f32.gmra.mrb[0].mxu0 %v920
        %v1381 = vpop.f32.mrb[0].mxu0
        %v1382 = vadd.f32 %v1288, %v1381
        %v1383 = vpop.f32.mrb[0].mxu0
        %1384 = vmatprep.mubr.f32.mxu0 0.0
        %1385 = vmatmul.mubr.f32.gmra.mrb[0].mxu0 %v921
        %v1386 = vpop.f32.mrb[0].mxu0
        %v1387 = vadd.f32 %v1288, %v1386
        %v1388 = vpop.f32.mrb[0].mxu0
        %1389 = vmatprep.mubr.f32.mxu0 0.0
        %1390 = vmatmul.mubr.f32.gmra.mrb[0].mxu0 %v922
        %v1391 = vpop.f32.mrb[0].mxu0
        %v1392 = vadd.f32 %v1288, %v1391
        %v1393 = vpop.f32.mrb[0].mxu0
        %1394 = vmatprep.mubr.f32.mxu0 0.0
        %1395 = vmatmul.mubr.f32.gmra.mrb[0].mxu0 %v923
        %v1396 = vpop.f32.mrb[0].mxu0
        %v1397 = vadd.f32 %v1288, %v1396
        %v1398 = vpop.f32.mrb[0].mxu0
        %1399 = vmatprep.mubr.f32.mxu0 0.0
        %1400 = vmatmul.mubr.f32.gmra.mrb[0].mxu0 %v924
        %v1401 = vpop.f32.mrb[0].mxu0
        %v1402 = vadd.f32 %v1288, %v1401
        %v1403 = vpop.f32.mrb[0].mxu0
        %1404 = vmatprep.mubr.f32.mxu0 0.0
        %1405 = vmatmul.mubr.f32.gmra.mrb[0].mxu0 %v925
        %v1406 = vpop.f32.mrb[0].mxu0
        %v1407 = vadd.f32 %v1288, %v1406
        %v1408 = vpop.f32.mrb[0].mxu0
        %1409 = vmatprep.mubr.f32.mxu0 0.0
        %1410 = vmatmul.mubr.f32.gmra.mrb[0].mxu0 %v926
        %v1411 = vpop.f32.mrb[0].mxu0
        %v1412 = vadd.f32 %v1288, %v1411
        %v1413 = vpop.f32.mrb[0].mxu0
        %1414 = vmatprep.mubr.f32.mxu0 0.0
        %1415 = vmatmul.mubr.f32.gmra.mrb[0].mxu0 %v927
        %v1416 = vpop.f32.mrb[0].mxu0
        %v1417 = vadd.f32 %v1288, %v1416
        %v1418 = vpop.f32.mrb[0].mxu0
        %1419 = vmatprep.mubr.f32.mxu0 0.0
        %1420 = vmatmul.mubr.f32.gmra.mrb[0].mxu0 %v928
        %v1421 = vpop.f32.mrb[0].mxu0
        %v1422 = vadd.f32 %v1288, %v1421
        %v1423 = vpop.f32.mrb[0].mxu0
        %1424 = vmatprep.mubr.f32.mxu0 0.0
        %1425 = vmatmul.mubr.f32.gmra.mrb[0].mxu0 %v929
        %v1426 = vpop.f32.mrb[0].mxu0
        %v1427 = vadd.f32 %v1288, %v1426
        %v1428 = vpop.f32.mrb[0].mxu0
        %1429 = vmatprep.mubr.f32.mxu0 0.0
        %1430 = vmatmul.mubr.f32.gmra.mrb[0].mxu0 %v930
        %v1431 = vpop.f32.mrb[0].mxu0
        %v1432 = vadd.f32 %v1288, %v1431
        %v1433 = vpop.f32.mrb[0].mxu0
        %1434 = vdwg.mxu0
        %vm1435 = vcmask 261120
        %v1437 = vsel %vm1435, %v1021, 0
        %v1440 = vsel %vm1435, %v1026, 0
        %v1443 = vsel %vm1435, %v1031, 0
        %v1446 = vsel %vm1435, %v1036, 0
        %v1449 = vsel %vm1435, %v1041, 0
        %v1452 = vsel %vm1435, %v1046, 0
        %v1455 = vsel %vm1435, %v1051, 0
        %v1458 = vsel %vm1435, %v1056, 0
        %v1461 = vsel %vm1435, %v1061, 0
        %v1464 = vsel %vm1435, %v1066, 0
        %v1467 = vsel %vm1435, %v1071, 0
        %v1470 = vsel %vm1435, %v1076, 0
        %v1473 = vsel %vm1435, %v1081, 0
        %v1476 = vsel %vm1435, %v1086, 0
        %v1479 = vsel %vm1435, %v1091, 0
        %v1482 = vsel %vm1435, %v1096, 0
        %v1485 = vsel %vm1435, %v1189, 0
        %v1488 = vsel %vm1435, %v1194, 0
        %v1491 = vsel %vm1435, %v1199, 0
        %v1494 = vsel %vm1435, %v1204, 0
        %v1497 = vsel %vm1435, %v1209, 0
        %v1500 = vsel %vm1435, %v1214, 0
        %v1503 = vsel %vm1435, %v1219, 0
        %v1506 = vsel %vm1435, %v1224, 0
        %v1509 = vsel %vm1435, %v1229, 0
        %v1512 = vsel %vm1435, %v1234, 0
        %v1515 = vsel %vm1435, %v1239, 0
        %v1518 = vsel %vm1435, %v1244, 0
        %v1521 = vsel %vm1435, %v1249, 0
        %v1524 = vsel %vm1435, %v1254, 0
        %v1527 = vsel %vm1435, %v1259, 0
        %v1530 = vsel %vm1435, %v1264, 0
        %1532 = vmatprep.subr.mxu0 0.0
        %1533 = vmatpush1.xpose.msra.mxu0 %v1485
        %1534 = vmatprep.subr.mxu0 0.0
        %1535 = vmatpush1.xpose.msra.mxu0 %v1488
        %1536 = vmatprep.subr.mxu0 0.0
        %1537 = vmatpush1.xpose.msra.mxu0 %v1491
        %1538 = vmatprep.subr.mxu0 0.0
        %1539 = vmatpush1.xpose.msra.mxu0 %v1494
        %1540 = vmatprep.subr.mxu0 0.0
        %1541 = vmatpush1.xpose.msra.mxu0 %v1497
        %1542 = vmatprep.subr.mxu0 0.0
        %1543 = vmatpush1.xpose.msra.mxu0 %v1500
        %1544 = vmatprep.subr.mxu0 0.0
        %1545 = vmatpush1.xpose.msra.mxu0 %v1503
        %1546 = vmatprep.subr.mxu0 0.0
        %1547 = vmatpush1.xpose.msra.mxu0 %v1506
        %1548 = vmatprep.subr.mxu0 0.0
        %1549 = vmatpush1.xpose.msra.mxu0 %v1509
        %1550 = vmatprep.subr.mxu0 0.0
        %1551 = vmatpush1.xpose.msra.mxu0 %v1512
        %1552 = vmatprep.subr.mxu0 0.0
        %1553 = vmatpush1.xpose.msra.mxu0 %v1515
        %1554 = vmatprep.subr.mxu0 0.0
        %1555 = vmatpush1.xpose.msra.mxu0 %v1518
        %1556 = vmatprep.subr.mxu0 0.0
        %1557 = vmatpush1.xpose.msra.mxu0 %v1521
        %1558 = vmatprep.subr.mxu0 0.0
        %1559 = vmatpush1.xpose.msra.mxu0 %v1524
        %1560 = vmatprep.subr.mxu0 0.0
        %1561 = vmatpush1.xpose.msra.mxu0 %v1527
        %1562 = vmatprep.subr.mxu0 0.0
        %1563 = vmatpush1.xpose.msra.mxu0 %v1530
        %1564 = vmatprep.subr.mxu0 0.0
        %1565 = vmatpush1.xpose.msra.mxu0 0.0
        %1566 = vmatprep.subr.mxu0 0.0
        %1567 = vmatpush1.xpose.msra.mxu0 0.0
        %1568 = vmatprep.subr.mxu0 0.0
        %1569 = vmatpush1.xpose.msra.mxu0 0.0
        %1570 = vmatprep.subr.mxu0 0.0
        %1571 = vmatpush1.xpose.msra.mxu0 0.0
        %1572 = vmatprep.subr.mxu0 0.0
        %1573 = vmatpush1.xpose.msra.mxu0 0.0
        %1574 = vmatprep.subr.mxu0 0.0
        %1575 = vmatpush1.xpose.msra.mxu0 0.0
        %1576 = vmatprep.subr.mxu0 0.0
        %1577 = vmatpush1.xpose.msra.mxu0 0.0
        %1578 = vmatprep.subr.mxu0 0.0
        %1579 = vmatpush1.xpose.msra.mxu0 0.0
        %1580 = vmatprep.subr.mxu0 0.0
        %1581 = vmatpush1.xpose.msra.mxu0 0.0
        %1582 = vmatprep.subr.mxu0 0.0
        %1583 = vmatpush1.xpose.msra.mxu0 0.0
        %1584 = vmatprep.subr.mxu0 0.0
        %1585 = vmatpush1.xpose.msra.mxu0 0.0
        %1586 = vmatprep.subr.mxu0 0.0
        %1587 = vmatpush1.xpose.msra.mxu0 0.0
        %1588 = vmatprep.subr.mxu0 0.0
        %1589 = vmatpush1.xpose.msra.mxu0 0.0
        %1590 = vmatprep.subr.mxu0 0.0
        %1591 = vmatpush1.xpose.msra.mxu0 0.0
        %1592 = vmatprep.subr.mxu0 0.0
        %1593 = vmatpush1.xpose.msra.mxu0 0.0
        %1594 = vmatprep.subr.mxu0 0.0
        %1595 = vmatpush1.xpose.msra.mxu0 0.0
        %1596 = vmatprep.mubr.f32.mxu0 0.0
        %1597 = vmatmul.mubr.f32.gmra.mrb[0].mxu0 %v1437
        %v1598 = vpop.f32.mrb[0].mxu0
        %v1599 = vadd.f32 0.0, %v1598
        %v1600 = vpop.f32.mrb[0].mxu0
        %1601 = vmatprep.mubr.f32.mxu0 0.0
        %1602 = vmatmul.mubr.f32.gmra.mrb[0].mxu0 %v1440
        %v1603 = vpop.f32.mrb[0].mxu0
        %v1604 = vadd.f32 0.0, %v1603
        %v1605 = vpop.f32.mrb[0].mxu0
        %1606 = vmatprep.mubr.f32.mxu0 0.0
        %1607 = vmatmul.mubr.f32.gmra.mrb[0].mxu0 %v1443
        %v1608 = vpop.f32.mrb[0].mxu0
        %v1609 = vadd.f32 0.0, %v1608
        %v1610 = vpop.f32.mrb[0].mxu0
        %1611 = vmatprep.mubr.f32.mxu0 0.0
        %1612 = vmatmul.mubr.f32.gmra.mrb[0].mxu0 %v1446
        %v1613 = vpop.f32.mrb[0].mxu0
        %v1614 = vadd.f32 0.0, %v1613
        %v1615 = vpop.f32.mrb[0].mxu0
        %1616 = vmatprep.mubr.f32.mxu0 0.0
        %1617 = vmatmul.mubr.f32.gmra.mrb[0].mxu0 %v1449
        %v1618 = vpop.f32.mrb[0].mxu0
        %v1619 = vadd.f32 0.0, %v1618
        %v1620 = vpop.f32.mrb[0].mxu0
        %1621 = vmatprep.mubr.f32.mxu0 0.0
        %1622 = vmatmul.mubr.f32.gmra.mrb[0].mxu0 %v1452
        %v1623 = vpop.f32.mrb[0].mxu0
        %v1624 = vadd.f32 0.0, %v1623
        %v1625 = vpop.f32.mrb[0].mxu0
        %1626 = vmatprep.mubr.f32.mxu0 0.0
        %1627 = vmatmul.mubr.f32.gmra.mrb[0].mxu0 %v1455
        %v1628 = vpop.f32.mrb[0].mxu0
        %v1629 = vadd.f32 0.0, %v1628
        %v1630 = vpop.f32.mrb[0].mxu0
        %1631 = vmatprep.mubr.f32.mxu0 0.0
        %1632 = vmatmul.mubr.f32.gmra.mrb[0].mxu0 %v1458
        %v1633 = vpop.f32.mrb[0].mxu0
        %v1634 = vadd.f32 0.0, %v1633
        %v1635 = vpop.f32.mrb[0].mxu0
        %1636 = vmatprep.mubr.f32.mxu0 0.0
        %1637 = vmatmul.mubr.f32.gmra.mrb[0].mxu0 %v1461
        %v1638 = vpop.f32.mrb[0].mxu0
        %v1639 = vadd.f32 0.0, %v1638
        %v1640 = vpop.f32.mrb[0].mxu0
        %1641 = vmatprep.mubr.f32.mxu0 0.0
        %1642 = vmatmul.mubr.f32.gmra.mrb[0].mxu0 %v1464
        %v1643 = vpop.f32.mrb[0].mxu0
        %v1644 = vadd.f32 0.0, %v1643
        %v1645 = vpop.f32.mrb[0].mxu0
        %1646 = vmatprep.mubr.f32.mxu0 0.0
        %1647 = vmatmul.mubr.f32.gmra.mrb[0].mxu0 %v1467
        %v1648 = vpop.f32.mrb[0].mxu0
        %v1649 = vadd.f32 0.0, %v1648
        %v1650 = vpop.f32.mrb[0].mxu0
        %1651 = vmatprep.mubr.f32.mxu0 0.0
        %1652 = vmatmul.mubr.f32.gmra.mrb[0].mxu0 %v1470
        %v1653 = vpop.f32.mrb[0].mxu0
        %v1654 = vadd.f32 0.0, %v1653
        %v1655 = vpop.f32.mrb[0].mxu0
        %1656 = vmatprep.mubr.f32.mxu0 0.0
        %1657 = vmatmul.mubr.f32.gmra.mrb[0].mxu0 %v1473
        %v1658 = vpop.f32.mrb[0].mxu0
        %v1659 = vadd.f32 0.0, %v1658
        %v1660 = vpop.f32.mrb[0].mxu0
        %1661 = vmatprep.mubr.f32.mxu0 0.0
        %1662 = vmatmul.mubr.f32.gmra.mrb[0].mxu0 %v1476
        %v1663 = vpop.f32.mrb[0].mxu0
        %v1664 = vadd.f32 0.0, %v1663
        %v1665 = vpop.f32.mrb[0].mxu0
        %1666 = vmatprep.mubr.f32.mxu0 0.0
        %1667 = vmatmul.mubr.f32.gmra.mrb[0].mxu0 %v1479
        %v1668 = vpop.f32.mrb[0].mxu0
        %v1669 = vadd.f32 0.0, %v1668
        %v1670 = vpop.f32.mrb[0].mxu0
        %1671 = vmatprep.mubr.f32.mxu0 0.0
        %1672 = vmatmul.mubr.f32.gmra.mrb[0].mxu0 %v1482
        %v1673 = vpop.f32.mrb[0].mxu0
        %v1674 = vadd.f32 0.0, %v1673
        %v1675 = vpop.f32.mrb[0].mxu0
        %1676 = vdwg.mxu0
        %v1677 = vmul.f32 %v1599, 0.17677669
        %v1678 = vmul.f32 %v1604, 0.17677669
        %v1679 = vmul.f32 %v1609, 0.17677669
        %v1680 = vmul.f32 %v1614, 0.17677669
        %v1681 = vmul.f32 %v1619, 0.17677669
        %v1682 = vmul.f32 %v1624, 0.17677669
        %v1683 = vmul.f32 %v1629, 0.17677669
        %v1684 = vmul.f32 %v1634, 0.17677669
        %v1685 = vmul.f32 %v1639, 0.17677669
        %v1686 = vmul.f32 %v1644, 0.17677669
        %v1687 = vmul.f32 %v1649, 0.17677669
        %v1688 = vmul.f32 %v1654, 0.17677669
        %v1689 = vmul.f32 %v1659, 0.17677669
        %v1690 = vmul.f32 %v1664, 0.17677669
        %v1691 = vmul.f32 %v1669, 0.17677669
        %v1692 = vmul.f32 %v1674, 0.17677669
        %1693 = vmax.xlane.f32.xlu0 %v1677
        %v1694 = vpop.xlane.xlu0 %1693
        %1695 = vmax.xlane.f32.xlu0 %v1678
        %v1696 = vpop.xlane.xlu0 %1695
        %1697 = vmax.xlane.f32.xlu0 %v1679
        %v1698 = vpop.xlane.xlu0 %1697
        %1699 = vmax.xlane.f32.xlu0 %v1680
        %v1700 = vpop.xlane.xlu0 %1699
        %1701 = vmax.xlane.f32.xlu0 %v1681
        %v1702 = vpop.xlane.xlu0 %1701
        %1703 = vmax.xlane.f32.xlu0 %v1682
        %v1704 = vpop.xlane.xlu0 %1703
        %1705 = vmax.xlane.f32.xlu0 %v1683
        %v1706 = vpop.xlane.xlu0 %1705
        %1707 = vmax.xlane.f32.xlu0 %v1684
        %v1708 = vpop.xlane.xlu0 %1707
        %1709 = vmax.xlane.f32.xlu0 %v1685
        %v1710 = vpop.xlane.xlu0 %1709
        %1711 = vmax.xlane.f32.xlu0 %v1686
        %v1712 = vpop.xlane.xlu0 %1711
        %1713 = vmax.xlane.f32.xlu0 %v1687
        %v1714 = vpop.xlane.xlu0 %1713
        %1715 = vmax.xlane.f32.xlu0 %v1688
        %v1716 = vpop.xlane.xlu0 %1715
        %1717 = vmax.xlane.f32.xlu0 %v1689
        %v1718 = vpop.xlane.xlu0 %1717
        %1719 = vmax.xlane.f32.xlu0 %v1690
        %v1720 = vpop.xlane.xlu0 %1719
        %1721 = vmax.xlane.f32.xlu0 %v1691
        %v1722 = vpop.xlane.xlu0 %1721
        %1723 = vmax.xlane.f32.xlu0 %v1692
        %v1724 = vpop.xlane.xlu0 %1723
        %v1725 = vsub.f32 %v1677, %v1694
        %v1726 = vsub.f32 %v1678, %v1696
        %v1727 = vsub.f32 %v1679, %v1698
        %v1728 = vsub.f32 %v1680, %v1700
        %v1729 = vsub.f32 %v1681, %v1702
        %v1730 = vsub.f32 %v1682, %v1704
        %v1731 = vsub.f32 %v1683, %v1706
        %v1732 = vsub.f32 %v1684, %v1708
        %v1733 = vsub.f32 %v1685, %v1710
        %v1734 = vsub.f32 %v1686, %v1712
        %v1735 = vsub.f32 %v1687, %v1714
        %v1736 = vsub.f32 %v1688, %v1716
        %v1737 = vsub.f32 %v1689, %v1718
        %v1738 = vsub.f32 %v1690, %v1720
        %v1739 = vsub.f32 %v1691, %v1722
        %v1740 = vsub.f32 %v1692, %v1724
        %v1741 = vmul.f32 %v1725, 1.442695
        %v1742 = vpow.pop %v1741
        %v1743 = vmul.f32 %v1726, 1.442695
        %v1744 = vpow.pop %v1743
        %v1745 = vmul.f32 %v1727, 1.442695
        %v1746 = vpow.pop %v1745
        %v1747 = vmul.f32 %v1728, 1.442695
        %v1748 = vpow.pop %v1747
        %v1749 = vmul.f32 %v1729, 1.442695
        %v1750 = vpow.pop %v1749
        %v1751 = vmul.f32 %v1730, 1.442695
        %v1752 = vpow.pop %v1751
        %v1753 = vmul.f32 %v1731, 1.442695
        %v1754 = vpow.pop %v1753
        %v1755 = vmul.f32 %v1732, 1.442695
        %v1756 = vpow.pop %v1755
        %v1757 = vmul.f32 %v1733, 1.442695
        %v1758 = vpow.pop %v1757
        %v1759 = vmul.f32 %v1734, 1.442695
        %v1760 = vpow.pop %v1759
        %v1761 = vmul.f32 %v1735, 1.442695
        %v1762 = vpow.pop %v1761
        %v1763 = vmul.f32 %v1736, 1.442695
        %v1764 = vpow.pop %v1763
        %v1765 = vmul.f32 %v1737, 1.442695
        %v1766 = vpow.pop %v1765
        %v1767 = vmul.f32 %v1738, 1.442695
        %v1768 = vpow.pop %v1767
        %v1769 = vmul.f32 %v1739, 1.442695
        %v1770 = vpow.pop %v1769
        %v1771 = vmul.f32 %v1740, 1.442695
        %v1772 = vpow.pop %v1771
        %1773 = vadd.xlane.f32.xlu0 %v1742
        %v1774 = vpop.xlane.xlu0 %1773
        %1775 = vadd.xlane.f32.xlu0 %v1744
        %v1776 = vpop.xlane.xlu0 %1775
        %1777 = vadd.xlane.f32.xlu0 %v1746
        %v1778 = vpop.xlane.xlu0 %1777
        %1779 = vadd.xlane.f32.xlu0 %v1748
        %v1780 = vpop.xlane.xlu0 %1779
        %1781 = vadd.xlane.f32.xlu0 %v1750
        %v1782 = vpop.xlane.xlu0 %1781
        %1783 = vadd.xlane.f32.xlu0 %v1752
        %v1784 = vpop.xlane.xlu0 %1783
        %1785 = vadd.xlane.f32.xlu0 %v1754
        %v1786 = vpop.xlane.xlu0 %1785
        %1787 = vadd.xlane.f32.xlu0 %v1756
        %v1788 = vpop.xlane.xlu0 %1787
        %1789 = vadd.xlane.f32.xlu0 %v1758
        %v1790 = vpop.xlane.xlu0 %1789
        %1791 = vadd.xlane.f32.xlu0 %v1760
        %v1792 = vpop.xlane.xlu0 %1791
        %1793 = vadd.xlane.f32.xlu0 %v1762
        %v1794 = vpop.xlane.xlu0 %1793
        %1795 = vadd.xlane.f32.xlu0 %v1764
        %v1796 = vpop.xlane.xlu0 %1795
        %1797 = vadd.xlane.f32.xlu0 %v1766
        %v1798 = vpop.xlane.xlu0 %1797
        %1799 = vadd.xlane.f32.xlu0 %v1768
        %v1800 = vpop.xlane.xlu0 %1799
        %1801 = vadd.xlane.f32.xlu0 %v1770
        %v1802 = vpop.xlane.xlu0 %1801
        %1803 = vadd.xlane.f32.xlu0 %v1772
        %v1804 = vpop.xlane.xlu0 %1803
        %v1805 = vrcp.pop %v1774
        %v1806 = vmul.f32 %v1742, %v1805
        %v1807 = vrcp.pop %v1776
        %v1808 = vmul.f32 %v1744, %v1807
        %v1809 = vrcp.pop %v1778
        %v1810 = vmul.f32 %v1746, %v1809
        %v1811 = vrcp.pop %v1780
        %v1812 = vmul.f32 %v1748, %v1811
        %v1813 = vrcp.pop %v1782
        %v1814 = vmul.f32 %v1750, %v1813
        %v1815 = vrcp.pop %v1784
        %v1816 = vmul.f32 %v1752, %v1815
        %v1817 = vrcp.pop %v1786
        %v1818 = vmul.f32 %v1754, %v1817
        %v1819 = vrcp.pop %v1788
        %v1820 = vmul.f32 %v1756, %v1819
        %v1821 = vrcp.pop %v1790
        %v1822 = vmul.f32 %v1758, %v1821
        %v1823 = vrcp.pop %v1792
        %v1824 = vmul.f32 %v1760, %v1823
        %v1825 = vrcp.pop %v1794
        %v1826 = vmul.f32 %v1762, %v1825
        %v1827 = vrcp.pop %v1796
        %v1828 = vmul.f32 %v1764, %v1827
        %v1829 = vrcp.pop %v1798
        %v1830 = vmul.f32 %v1766, %v1829
        %v1831 = vrcp.pop %v1800
        %v1832 = vmul.f32 %v1768, %v1831
        %v1833 = vrcp.pop %v1802
        %v1834 = vmul.f32 %v1770, %v1833
        %v1835 = vrcp.pop %v1804
        %v1836 = vmul.f32 %v1772, %v1835
        %1837 = vst [vmem:[%s691] sm:$0xff] %v1806
        %1838 = vst [vmem:[%s691 + $0x8] sm:$0xff] %v1808
        %1839 = vst [vmem:[%s691 + $0x10] sm:$0xff] %v1810
        %1840 = vst [vmem:[%s691 + $0x18] sm:$0xff] %v1812
        %1841 = vst [vmem:[%s691 + $0x20] sm:$0xff] %v1814
        %1842 = vst [vmem:[%s691 + $0x28] sm:$0xff] %v1816
        %1843 = vst [vmem:[%s691 + $0x30] sm:$0xff] %v1818
        %1844 = vst [vmem:[%s691 + $0x38] sm:$0xff] %v1820
        %1845 = vst [vmem:[%s691 + $0x40] sm:$0xff] %v1822
        %1846 = vst [vmem:[%s691 + $0x48] sm:$0xff] %v1824
        %1847 = vst [vmem:[%s691 + $0x50] sm:$0xff] %v1826
        %1848 = vst [vmem:[%s691 + $0x58] sm:$0xff] %v1828
        %1849 = vst [vmem:[%s691 + $0x60] sm:$0xff] %v1830
        %1850 = vst [vmem:[%s691 + $0x68] sm:$0xff] %v1832
        %1851 = vst [vmem:[%s691 + $0x70] sm:$0xff] %v1834
        %1852 = vst [vmem:[%s691 + $0x78] sm:$0xff] %v1836
        %1853 = vmatprep.subr.mxu0 0.0
        %1854 = vmatpush1.msra.mxu0 %v1357
        %1855 = vmatprep.subr.mxu0 0.0
        %1856 = vmatpush1.msra.mxu0 %v1362
        %1857 = vmatprep.subr.mxu0 0.0
        %1858 = vmatpush1.msra.mxu0 %v1367
        %1859 = vmatprep.subr.mxu0 0.0
        %1860 = vmatpush1.msra.mxu0 %v1372
        %1861 = vmatprep.subr.mxu0 0.0
        %1862 = vmatpush1.msra.mxu0 %v1377
        %1863 = vmatprep.subr.mxu0 0.0
        %1864 = vmatpush1.msra.mxu0 %v1382
        %1865 = vmatprep.subr.mxu0 0.0
        %1866 = vmatpush1.msra.mxu0 %v1387
        %1867 = vmatprep.subr.mxu0 0.0
        %1868 = vmatpush1.msra.mxu0 %v1392
        %1869 = vmatprep.subr.mxu0 0.0
        %1870 = vmatpush1.msra.mxu0 %v1397
        %1871 = vmatprep.subr.mxu0 0.0
        %1872 = vmatpush1.msra.mxu0 %v1402
        %1873 = vmatprep.subr.mxu0 0.0
        %1874 = vmatpush1.msra.mxu0 %v1407
        %1875 = vmatprep.subr.mxu0 0.0
        %1876 = vmatpush1.msra.mxu0 %v1412
        %1877 = vmatprep.subr.mxu0 0.0
        %1878 = vmatpush1.msra.mxu0 %v1417
        %1879 = vmatprep.subr.mxu0 0.0
        %1880 = vmatpush1.msra.mxu0 %v1422
        %1881 = vmatprep.subr.mxu0 0.0
        %1882 = vmatpush1.msra.mxu0 %v1427
        %1883 = vmatprep.subr.mxu0 0.0
        %1884 = vmatpush1.msra.mxu0 %v1432
        %1885 = vmatprep.subr.mxu0 0.0
        %1886 = vmatpush1.msra.mxu0 0.0
        %1887 = vmatprep.subr.mxu0 0.0
        %1888 = vmatpush1.msra.mxu0 0.0
        %1889 = vmatprep.subr.mxu0 0.0
        %1890 = vmatpush1.msra.mxu0 0.0
        %1891 = vmatprep.subr.mxu0 0.0
        %1892 = vmatpush1.msra.mxu0 0.0
        %1893 = vmatprep.subr.mxu0 0.0
        %1894 = vmatpush1.msra.mxu0 0.0
        %1895 = vmatprep.subr.mxu0 0.0
        %1896 = vmatpush1.msra.mxu0 0.0
        %1897 = vmatprep.subr.mxu0 0.0
        %1898 = vmatpush1.msra.mxu0 0.0
        %1899 = vmatprep.subr.mxu0 0.0
        %1900 = vmatpush1.msra.mxu0 0.0
        %1901 = vmatprep.subr.mxu0 0.0
        %1902 = vmatpush1.msra.mxu0 0.0
        %1903 = vmatprep.subr.mxu0 0.0
        %1904 = vmatpush1.msra.mxu0 0.0
        %1905 = vmatprep.subr.mxu0 0.0
        %1906 = vmatpush1.msra.mxu0 0.0
        %1907 = vmatprep.subr.mxu0 0.0
        %1908 = vmatpush1.msra.mxu0 0.0
        %1909 = vmatprep.subr.mxu0 0.0
        %1910 = vmatpush1.msra.mxu0 0.0
        %1911 = vmatprep.subr.mxu0 0.0
        %1912 = vmatpush1.msra.mxu0 0.0
        %1913 = vmatprep.subr.mxu0 0.0
        %1914 = vmatpush1.msra.mxu0 0.0
        %1915 = vmatprep.subr.mxu0 0.0
        %1916 = vmatpush1.msra.mxu0 0.0
        %1917 = vmatprep.mubr.f32.mxu0 0.0
        %1918 = vmatmul.mubr.f32.gmra.mrb[0].mxu0 %v1806
        %v1919 = vpop.f32.mrb[0].mxu0
        %v1920 = vadd.f32 0.0, %v1919
        %v1921 = vpop.f32.mrb[0].mxu0
        %1922 = vmatprep.mubr.f32.mxu0 0.0
        %1923 = vmatmul.mubr.f32.gmra.mrb[0].mxu0 %v1808
        %v1924 = vpop.f32.mrb[0].mxu0
        %v1925 = vadd.f32 0.0, %v1924
        %v1926 = vpop.f32.mrb[0].mxu0
        %1927 = vmatprep.mubr.f32.mxu0 0.0
        %1928 = vmatmul.mubr.f32.gmra.mrb[0].mxu0 %v1810
        %v1929 = vpop.f32.mrb[0].mxu0
        %v1930 = vadd.f32 0.0, %v1929
        %v1931 = vpop.f32.mrb[0].mxu0
        %1932 = vmatprep.mubr.f32.mxu0 0.0
        %1933 = vmatmul.mubr.f32.gmra.mrb[0].mxu0 %v1812
        %v1934 = vpop.f32.mrb[0].mxu0
        %v1935 = vadd.f32 0.0, %v1934
        %v1936 = vpop.f32.mrb[0].mxu0
        %1937 = vmatprep.mubr.f32.mxu0 0.0
        %1938 = vmatmul.mubr.f32.gmra.mrb[0].mxu0 %v1814
        %v1939 = vpop.f32.mrb[0].mxu0
        %v1940 = vadd.f32 0.0, %v1939
        %v1941 = vpop.f32.mrb[0].mxu0
        %1942 = vmatprep.mubr.f32.mxu0 0.0
        %1943 = vmatmul.mubr.f32.gmra.mrb[0].mxu0 %v1816
        %v1944 = vpop.f32.mrb[0].mxu0
        %v1945 = vadd.f32 0.0, %v1944
        %v1946 = vpop.f32.mrb[0].mxu0
        %1947 = vmatprep.mubr.f32.mxu0 0.0
        %1948 = vmatmul.mubr.f32.gmra.mrb[0].mxu0 %v1818
        %v1949 = vpop.f32.mrb[0].mxu0
        %v1950 = vadd.f32 0.0, %v1949
        %v1951 = vpop.f32.mrb[0].mxu0
        %1952 = vmatprep.mubr.f32.mxu0 0.0
        %1953 = vmatmul.mubr.f32.gmra.mrb[0].mxu0 %v1820
        %v1954 = vpop.f32.mrb[0].mxu0
        %v1955 = vadd.f32 0.0, %v1954
        %v1956 = vpop.f32.mrb[0].mxu0
        %1957 = vmatprep.mubr.f32.mxu0 0.0
        %1958 = vmatmul.mubr.f32.gmra.mrb[0].mxu0 %v1822
        %v1959 = vpop.f32.mrb[0].mxu0
        %v1960 = vadd.f32 0.0, %v1959
        %v1961 = vpop.f32.mrb[0].mxu0
        %1962 = vmatprep.mubr.f32.mxu0 0.0
        %1963 = vmatmul.mubr.f32.gmra.mrb[0].mxu0 %v1824
        %v1964 = vpop.f32.mrb[0].mxu0
        %v1965 = vadd.f32 0.0, %v1964
        %v1966 = vpop.f32.mrb[0].mxu0
        %1967 = vmatprep.mubr.f32.mxu0 0.0
        %1968 = vmatmul.mubr.f32.gmra.mrb[0].mxu0 %v1826
        %v1969 = vpop.f32.mrb[0].mxu0
        %v1970 = vadd.f32 0.0, %v1969
        %v1971 = vpop.f32.mrb[0].mxu0
        %1972 = vmatprep.mubr.f32.mxu0 0.0
        %1973 = vmatmul.mubr.f32.gmra.mrb[0].mxu0 %v1828
        %v1974 = vpop.f32.mrb[0].mxu0
        %v1975 = vadd.f32 0.0, %v1974
        %v1976 = vpop.f32.mrb[0].mxu0
        %1977 = vmatprep.mubr.f32.mxu0 0.0
        %1978 = vmatmul.mubr.f32.gmra.mrb[0].mxu0 %v1830
        %v1979 = vpop.f32.mrb[0].mxu0
        %v1980 = vadd.f32 0.0, %v1979
        %v1981 = vpop.f32.mrb[0].mxu0
        %1982 = vmatprep.mubr.f32.mxu0 0.0
        %1983 = vmatmul.mubr.f32.gmra.mrb[0].mxu0 %v1832
        %v1984 = vpop.f32.mrb[0].mxu0
        %v1985 = vadd.f32 0.0, %v1984
        %v1986 = vpop.f32.mrb[0].mxu0
        %1987 = vmatprep.mubr.f32.mxu0 0.0
        %1988 = vmatmul.mubr.f32.gmra.mrb[0].mxu0 %v1834
        %v1989 = vpop.f32.mrb[0].mxu0
        %v1990 = vadd.f32 0.0, %v1989
        %v1991 = vpop.f32.mrb[0].mxu0
        %1992 = vmatprep.mubr.f32.mxu0 0.0
        %1993 = vmatmul.mubr.f32.gmra.mrb[0].mxu0 %v1836
        %v1994 = vpop.f32.mrb[0].mxu0
        %v1995 = vadd.f32 0.0, %v1994
        %v1996 = vpop.f32.mrb[0].mxu0
        %1997 = vdwg.mxu0
        %1998 = vrot.lane.b32.xlu0 %v1021, 96
        %v1999 = vpop.permute.xlu0 %1998
        %2000 = vrot.lane.b32.xlu0 %v1026, 96
        %v2001 = vpop.permute.xlu0 %2000
        %2002 = vrot.lane.b32.xlu0 %v1031, 96
        %v2003 = vpop.permute.xlu0 %2002
        %2004 = vrot.lane.b32.xlu0 %v1036, 96
        %v2005 = vpop.permute.xlu0 %2004
        %2006 = vrot.lane.b32.xlu0 %v1041, 96
        %v2007 = vpop.permute.xlu0 %2006
        %2008 = vrot.lane.b32.xlu0 %v1046, 96
        %v2009 = vpop.permute.xlu0 %2008
        %2010 = vrot.lane.b32.xlu0 %v1051, 96
        %v2011 = vpop.permute.xlu0 %2010
        %2012 = vrot.lane.b32.xlu0 %v1056, 96
        %v2013 = vpop.permute.xlu0 %2012
        %2014 = vrot.lane.b32.xlu0 %v1061, 96
        %v2015 = vpop.permute.xlu0 %2014
        %2016 = vrot.lane.b32.xlu0 %v1066, 96
        %v2017 = vpop.permute.xlu0 %2016
        %2018 = vrot.lane.b32.xlu0 %v1071, 96
        %v2019 = vpop.permute.xlu0 %2018
        %2020 = vrot.lane.b32.xlu0 %v1076, 96
        %v2021 = vpop.permute.xlu0 %2020
        %2022 = vrot.lane.b32.xlu0 %v1081, 96
        %v2023 = vpop.permute.xlu0 %2022
        %2024 = vrot.lane.b32.xlu0 %v1086, 96
        %v2025 = vpop.permute.xlu0 %2024
        %2026 = vrot.lane.b32.xlu0 %v1091, 96
        %v2027 = vpop.permute.xlu0 %2026
        %2028 = vrot.lane.b32.xlu0 %v1096, 96
        %v2029 = vpop.permute.xlu0 %2028
        %2030 = vrot.lane.b32.xlu0 %v1189, 96
        %v2031 = vpop.permute.xlu0 %2030
        %2032 = vrot.lane.b32.xlu0 %v1194, 96
        %v2033 = vpop.permute.xlu0 %2032
        %2034 = vrot.lane.b32.xlu0 %v1199, 96
        %v2035 = vpop.permute.xlu0 %2034
        %2036 = vrot.lane.b32.xlu0 %v1204, 96
        %v2037 = vpop.permute.xlu0 %2036
        %2038 = vrot.lane.b32.xlu0 %v1209, 96
        %v2039 = vpop.permute.xlu0 %2038
        %2040 = vrot.lane.b32.xlu0 %v1214, 96
        %v2041 = vpop.permute.xlu0 %2040
        %2042 = vrot.lane.b32.xlu0 %v1219, 96
        %v2043 = vpop.permute.xlu0 %2042
        %2044 = vrot.lane.b32.xlu0 %v1224, 96
        %v2045 = vpop.permute.xlu0 %2044
        %2046 = vrot.lane.b32.xlu0 %v1229, 96
        %v2047 = vpop.permute.xlu0 %2046
        %2048 = vrot.lane.b32.xlu0 %v1234, 96
        %v2049 = vpop.permute.xlu0 %2048
        %2050 = vrot.lane.b32.xlu0 %v1239, 96
        %v2051 = vpop.permute.xlu0 %2050
        %2052 = vrot.lane.b32.xlu0 %v1244, 96
        %v2053 = vpop.permute.xlu0 %2052
        %2054 = vrot.lane.b32.xlu0 %v1249, 96
        %v2055 = vpop.permute.xlu0 %2054
        %2056 = vrot.lane.b32.xlu0 %v1254, 96
        %v2057 = vpop.permute.xlu0 %2056
        %2058 = vrot.lane.b32.xlu0 %v1259, 96
        %v2059 = vpop.permute.xlu0 %2058
        %2060 = vrot.lane.b32.xlu0 %v1264, 96
        %v2061 = vpop.permute.xlu0 %2060
        %v2062 = vsel %vm1435, %v1999, 0
        %v2064 = vsel %vm1435, %v2001, 0
        %v2066 = vsel %vm1435, %v2003, 0
        %v2068 = vsel %vm1435, %v2005, 0
        %v2070 = vsel %vm1435, %v2007, 0
        %v2072 = vsel %vm1435, %v2009, 0
        %v2074 = vsel %vm1435, %v2011, 0
        %v2076 = vsel %vm1435, %v2013, 0
        %v2078 = vsel %vm1435, %v2015, 0
        %v2080 = vsel %vm1435, %v2017, 0
        %v2082 = vsel %vm1435, %v2019, 0
        %v2084 = vsel %vm1435, %v2021, 0
        %v2086 = vsel %vm1435, %v2023, 0
        %v2088 = vsel %vm1435, %v2025, 0
        %v2090 = vsel %vm1435, %v2027, 0
        %v2092 = vsel %vm1435, %v2029, 0
        %v2094 = vsel %vm1435, %v2031, 0
        %v2096 = vsel %vm1435, %v2033, 0
        %v2098 = vsel %vm1435, %v2035, 0
        %v2100 = vsel %vm1435, %v2037, 0
        %v2102 = vsel %vm1435, %v2039, 0
        %v2104 = vsel %vm1435, %v2041, 0
        %v2106 = vsel %vm1435, %v2043, 0
        %v2108 = vsel %vm1435, %v2045, 0
        %v2110 = vsel %vm1435, %v2047, 0
        %v2112 = vsel %vm1435, %v2049, 0
        %v2114 = vsel %vm1435, %v2051, 0
        %v2116 = vsel %vm1435, %v2053, 0
        %v2118 = vsel %vm1435, %v2055, 0
        %v2120 = vsel %vm1435, %v2057, 0
        %v2122 = vsel %vm1435, %v2059, 0
        %v2124 = vsel %vm1435, %v2061, 0
        %2126 = vmatprep.subr.mxu0 0.0
        %2127 = vmatpush1.xpose.msra.mxu0 %v2094
        %2128 = vmatprep.subr.mxu0 0.0
        %2129 = vmatpush1.xpose.msra.mxu0 %v2096
        %2130 = vmatprep.subr.mxu0 0.0
        %2131 = vmatpush1.xpose.msra.mxu0 %v2098
        %2132 = vmatprep.subr.mxu0 0.0
        %2133 = vmatpush1.xpose.msra.mxu0 %v2100
        %2134 = vmatprep.subr.mxu0 0.0
        %2135 = vmatpush1.xpose.msra.mxu0 %v2102
        %2136 = vmatprep.subr.mxu0 0.0
        %2137 = vmatpush1.xpose.msra.mxu0 %v2104
        %2138 = vmatprep.subr.mxu0 0.0
        %2139 = vmatpush1.xpose.msra.mxu0 %v2106
        %2140 = vmatprep.subr.mxu0 0.0
        %2141 = vmatpush1.xpose.msra.mxu0 %v2108
        %2142 = vmatprep.subr.mxu0 0.0
        %2143 = vmatpush1.xpose.msra.mxu0 %v2110
        %2144 = vmatprep.subr.mxu0 0.0
        %2145 = vmatpush1.xpose.msra.mxu0 %v2112
        %2146 = vmatprep.subr.mxu0 0.0
        %2147 = vmatpush1.xpose.msra.mxu0 %v2114
        %2148 = vmatprep.subr.mxu0 0.0
        %2149 = vmatpush1.xpose.msra.mxu0 %v2116
        %2150 = vmatprep.subr.mxu0 0.0
        %2151 = vmatpush1.xpose.msra.mxu0 %v2118
        %2152 = vmatprep.subr.mxu0 0.0
        %2153 = vmatpush1.xpose.msra.mxu0 %v2120
        %2154 = vmatprep.subr.mxu0 0.0
        %2155 = vmatpush1.xpose.msra.mxu0 %v2122
        %2156 = vmatprep.subr.mxu0 0.0
        %2157 = vmatpush1.xpose.msra.mxu0 %v2124
        %2158 = vmatprep.subr.mxu0 0.0
        %2159 = vmatpush1.xpose.msra.mxu0 0.0
        %2160 = vmatprep.subr.mxu0 0.0
        %2161 = vmatpush1.xpose.msra.mxu0 0.0
        %2162 = vmatprep.subr.mxu0 0.0
        %2163 = vmatpush1.xpose.msra.mxu0 0.0
        %2164 = vmatprep.subr.mxu0 0.0
        %2165 = vmatpush1.xpose.msra.mxu0 0.0
        %2166 = vmatprep.subr.mxu0 0.0
        %2167 = vmatpush1.xpose.msra.mxu0 0.0
        %2168 = vmatprep.subr.mxu0 0.0
        %2169 = vmatpush1.xpose.msra.mxu0 0.0
        %2170 = vmatprep.subr.mxu0 0.0
        %2171 = vmatpush1.xpose.msra.mxu0 0.0
        %2172 = vmatprep.subr.mxu0 0.0
        %2173 = vmatpush1.xpose.msra.mxu0 0.0
        %2174 = vmatprep.subr.mxu0 0.0
        %2175 = vmatpush1.xpose.msra.mxu0 0.0
        %2176 = vmatprep.subr.mxu0 0.0
        %2177 = vmatpush1.xpose.msra.mxu0 0.0
        %2178 = vmatprep.subr.mxu0 0.0
        %2179 = vmatpush1.xpose.msra.mxu0 0.0
        %2180 = vmatprep.subr.mxu0 0.0
        %2181 = vmatpush1.xpose.msra.mxu0 0.0
        %2182 = vmatprep.subr.mxu0 0.0
        %2183 = vmatpush1.xpose.msra.mxu0 0.0
        %2184 = vmatprep.subr.mxu0 0.0
        %2185 = vmatpush1.xpose.msra.mxu0 0.0
        %2186 = vmatprep.subr.mxu0 0.0
        %2187 = vmatpush1.xpose.msra.mxu0 0.0
        %2188 = vmatprep.subr.mxu0 0.0
        %2189 = vmatpush1.xpose.msra.mxu0 0.0
        %2190 = vmatprep.mubr.f32.mxu0 0.0
        %2191 = vmatmul.mubr.f32.gmra.mrb[0].mxu0 %v2062
        %v2192 = vpop.f32.mrb[0].mxu0
        %v2193 = vadd.f32 0.0, %v2192
        %v2194 = vpop.f32.mrb[0].mxu0
        %2195 = vmatprep.mubr.f32.mxu0 0.0
        %2196 = vmatmul.mubr.f32.gmra.mrb[0].mxu0 %v2064
        %v2197 = vpop.f32.mrb[0].mxu0
        %v2198 = vadd.f32 0.0, %v2197
        %v2199 = vpop.f32.mrb[0].mxu0
        %2200 = vmatprep.mubr.f32.mxu0 0.0
        %2201 = vmatmul.mubr.f32.gmra.mrb[0].mxu0 %v2066
        %v2202 = vpop.f32.mrb[0].mxu0
        %v2203 = vadd.f32 0.0, %v2202
        %v2204 = vpop.f32.mrb[0].mxu0
        %2205 = vmatprep.mubr.f32.mxu0 0.0
        %2206 = vmatmul.mubr.f32.gmra.mrb[0].mxu0 %v2068
        %v2207 = vpop.f32.mrb[0].mxu0
        %v2208 = vadd.f32 0.0, %v2207
        %v2209 = vpop.f32.mrb[0].mxu0
        %2210 = vmatprep.mubr.f32.mxu0 0.0
        %2211 = vmatmul.mubr.f32.gmra.mrb[0].mxu0 %v2070
        %v2212 = vpop.f32.mrb[0].mxu0
        %v2213 = vadd.f32 0.0, %v2212
        %v2214 = vpop.f32.mrb[0].mxu0
        %2215 = vmatprep.mubr.f32.mxu0 0.0
        %2216 = vmatmul.mubr.f32.gmra.mrb[0].mxu0 %v2072
        %v2217 = vpop.f32.mrb[0].mxu0
        %v2218 = vadd.f32 0.0, %v2217
        %v2219 = vpop.f32.mrb[0].mxu0
        %2220 = vmatprep.mubr.f32.mxu0 0.0
        %2221 = vmatmul.mubr.f32.gmra.mrb[0].mxu0 %v2074
        %v2222 = vpop.f32.mrb[0].mxu0
        %v2223 = vadd.f32 0.0, %v2222
        %v2224 = vpop.f32.mrb[0].mxu0
        %2225 = vmatprep.mubr.f32.mxu0 0.0
        %2226 = vmatmul.mubr.f32.gmra.mrb[0].mxu0 %v2076
        %v2227 = vpop.f32.mrb[0].mxu0
        %v2228 = vadd.f32 0.0, %v2227
        %v2229 = vpop.f32.mrb[0].mxu0
        %2230 = vmatprep.mubr.f32.mxu0 0.0
        %2231 = vmatmul.mubr.f32.gmra.mrb[0].mxu0 %v2078
        %v2232 = vpop.f32.mrb[0].mxu0
        %v2233 = vadd.f32 0.0, %v2232
        %v2234 = vpop.f32.mrb[0].mxu0
        %2235 = vmatprep.mubr.f32.mxu0 0.0
        %2236 = vmatmul.mubr.f32.gmra.mrb[0].mxu0 %v2080
        %v2237 = vpop.f32.mrb[0].mxu0
        %v2238 = vadd.f32 0.0, %v2237
        %v2239 = vpop.f32.mrb[0].mxu0
        %2240 = vmatprep.mubr.f32.mxu0 0.0
        %2241 = vmatmul.mubr.f32.gmra.mrb[0].mxu0 %v2082
        %v2242 = vpop.f32.mrb[0].mxu0
        %v2243 = vadd.f32 0.0, %v2242
        %v2244 = vpop.f32.mrb[0].mxu0
        %2245 = vmatprep.mubr.f32.mxu0 0.0
        %2246 = vmatmul.mubr.f32.gmra.mrb[0].mxu0 %v2084
        %v2247 = vpop.f32.mrb[0].mxu0
        %v2248 = vadd.f32 0.0, %v2247
        %v2249 = vpop.f32.mrb[0].mxu0
        %2250 = vmatprep.mubr.f32.mxu0 0.0
        %2251 = vmatmul.mubr.f32.gmra.mrb[0].mxu0 %v2086
        %v2252 = vpop.f32.mrb[0].mxu0
        %v2253 = vadd.f32 0.0, %v2252
        %v2254 = vpop.f32.mrb[0].mxu0
        %2255 = vmatprep.mubr.f32.mxu0 0.0
        %2256 = vmatmul.mubr.f32.gmra.mrb[0].mxu0 %v2088
        %v2257 = vpop.f32.mrb[0].mxu0
        %v2258 = vadd.f32 0.0, %v2257
        %v2259 = vpop.f32.mrb[0].mxu0
        %2260 = vmatprep.mubr.f32.mxu0 0.0
        %2261 = vmatmul.mubr.f32.gmra.mrb[0].mxu0 %v2090
        %v2262 = vpop.f32.mrb[0].mxu0
        %v2263 = vadd.f32 0.0, %v2262
        %v2264 = vpop.f32.mrb[0].mxu0
        %2265 = vmatprep.mubr.f32.mxu0 0.0
        %2266 = vmatmul.mubr.f32.gmra.mrb[0].mxu0 %v2092
        %v2267 = vpop.f32.mrb[0].mxu0
        %v2268 = vadd.f32 0.0, %v2267
        %v2269 = vpop.f32.mrb[0].mxu0
        %2270 = vdwg.mxu0
        %v2271 = vmul.f32 %v2193, 0.17677669
        %v2272 = vmul.f32 %v2198, 0.17677669
        %v2273 = vmul.f32 %v2203, 0.17677669
        %v2274 = vmul.f32 %v2208, 0.17677669
        %v2275 = vmul.f32 %v2213, 0.17677669
        %v2276 = vmul.f32 %v2218, 0.17677669
        %v2277 = vmul.f32 %v2223, 0.17677669
        %v2278 = vmul.f32 %v2228, 0.17677669
        %v2279 = vmul.f32 %v2233, 0.17677669
        %v2280 = vmul.f32 %v2238, 0.17677669
        %v2281 = vmul.f32 %v2243, 0.17677669
        %v2282 = vmul.f32 %v2248, 0.17677669
        %v2283 = vmul.f32 %v2253, 0.17677669
        %v2284 = vmul.f32 %v2258, 0.17677669
        %v2285 = vmul.f32 %v2263, 0.17677669
        %v2286 = vmul.f32 %v2268, 0.17677669
        %2287 = vmax.xlane.f32.xlu0 %v2271
        %v2288 = vpop.xlane.xlu0 %2287
        %2289 = vmax.xlane.f32.xlu0 %v2272
        %v2290 = vpop.xlane.xlu0 %2289
        %2291 = vmax.xlane.f32.xlu0 %v2273
        %v2292 = vpop.xlane.xlu0 %2291
        %2293 = vmax.xlane.f32.xlu0 %v2274
        %v2294 = vpop.xlane.xlu0 %2293
        %2295 = vmax.xlane.f32.xlu0 %v2275
        %v2296 = vpop.xlane.xlu0 %2295
        %2297 = vmax.xlane.f32.xlu0 %v2276
        %v2298 = vpop.xlane.xlu0 %2297
        %2299 = vmax.xlane.f32.xlu0 %v2277
        %v2300 = vpop.xlane.xlu0 %2299
        %2301 = vmax.xlane.f32.xlu0 %v2278
        %v2302 = vpop.xlane.xlu0 %2301
        %2303 = vmax.xlane.f32.xlu0 %v2279
        %v2304 = vpop.xlane.xlu0 %2303
        %2305 = vmax.xlane.f32.xlu0 %v2280
        %v2306 = vpop.xlane.xlu0 %2305
        %2307 = vmax.xlane.f32.xlu0 %v2281
        %v2308 = vpop.xlane.xlu0 %2307
        %2309 = vmax.xlane.f32.xlu0 %v2282
        %v2310 = vpop.xlane.xlu0 %2309
        %2311 = vmax.xlane.f32.xlu0 %v2283
        %v2312 = vpop.xlane.xlu0 %2311
        %2313 = vmax.xlane.f32.xlu0 %v2284
        %v2314 = vpop.xlane.xlu0 %2313
        %2315 = vmax.xlane.f32.xlu0 %v2285
        %v2316 = vpop.xlane.xlu0 %2315
        %2317 = vmax.xlane.f32.xlu0 %v2286
        %v2318 = vpop.xlane.xlu0 %2317
        %v2319 = vsub.f32 %v2271, %v2288
        %v2320 = vsub.f32 %v2272, %v2290
        %v2321 = vsub.f32 %v2273, %v2292
        %v2322 = vsub.f32 %v2274, %v2294
        %v2323 = vsub.f32 %v2275, %v2296
        %v2324 = vsub.f32 %v2276, %v2298
        %v2325 = vsub.f32 %v2277, %v2300
        %v2326 = vsub.f32 %v2278, %v2302
        %v2327 = vsub.f32 %v2279, %v2304
        %v2328 = vsub.f32 %v2280, %v2306
        %v2329 = vsub.f32 %v2281, %v2308
        %v2330 = vsub.f32 %v2282, %v2310
        %v2331 = vsub.f32 %v2283, %v2312
        %v2332 = vsub.f32 %v2284, %v2314
        %v2333 = vsub.f32 %v2285, %v2316
        %v2334 = vsub.f32 %v2286, %v2318
        %v2335 = vmul.f32 %v2319, 1.442695
        %v2336 = vpow.pop %v2335
        %v2337 = vmul.f32 %v2320, 1.442695
        %v2338 = vpow.pop %v2337
        %v2339 = vmul.f32 %v2321, 1.442695
        %v2340 = vpow.pop %v2339
        %v2341 = vmul.f32 %v2322, 1.442695
        %v2342 = vpow.pop %v2341
        %v2343 = vmul.f32 %v2323, 1.442695
        %v2344 = vpow.pop %v2343
        %v2345 = vmul.f32 %v2324, 1.442695
        %v2346 = vpow.pop %v2345
        %v2347 = vmul.f32 %v2325, 1.442695
        %v2348 = vpow.pop %v2347
        %v2349 = vmul.f32 %v2326, 1.442695
        %v2350 = vpow.pop %v2349
        %v2351 = vmul.f32 %v2327, 1.442695
        %v2352 = vpow.pop %v2351
        %v2353 = vmul.f32 %v2328, 1.442695
        %v2354 = vpow.pop %v2353
        %v2355 = vmul.f32 %v2329, 1.442695
        %v2356 = vpow.pop %v2355
        %v2357 = vmul.f32 %v2330, 1.442695
        %v2358 = vpow.pop %v2357
        %v2359 = vmul.f32 %v2331, 1.442695
        %v2360 = vpow.pop %v2359
        %v2361 = vmul.f32 %v2332, 1.442695
        %v2362 = vpow.pop %v2361
        %v2363 = vmul.f32 %v2333, 1.442695
        %v2364 = vpow.pop %v2363
        %v2365 = vmul.f32 %v2334, 1.442695
        %v2366 = vpow.pop %v2365
        %2367 = vadd.xlane.f32.xlu0 %v2336
        %v2368 = vpop.xlane.xlu0 %2367
        %2369 = vadd.xlane.f32.xlu0 %v2338
        %v2370 = vpop.xlane.xlu0 %2369
        %2371 = vadd.xlane.f32.xlu0 %v2340
        %v2372 = vpop.xlane.xlu0 %2371
        %2373 = vadd.xlane.f32.xlu0 %v2342
        %v2374 = vpop.xlane.xlu0 %2373
        %2375 = vadd.xlane.f32.xlu0 %v2344
        %v2376 = vpop.xlane.xlu0 %2375
        %2377 = vadd.xlane.f32.xlu0 %v2346
        %v2378 = vpop.xlane.xlu0 %2377
        %2379 = vadd.xlane.f32.xlu0 %v2348
        %v2380 = vpop.xlane.xlu0 %2379
        %2381 = vadd.xlane.f32.xlu0 %v2350
        %v2382 = vpop.xlane.xlu0 %2381
        %2383 = vadd.xlane.f32.xlu0 %v2352
        %v2384 = vpop.xlane.xlu0 %2383
        %2385 = vadd.xlane.f32.xlu0 %v2354
        %v2386 = vpop.xlane.xlu0 %2385
        %2387 = vadd.xlane.f32.xlu0 %v2356
        %v2388 = vpop.xlane.xlu0 %2387
        %2389 = vadd.xlane.f32.xlu0 %v2358
        %v2390 = vpop.xlane.xlu0 %2389
        %2391 = vadd.xlane.f32.xlu0 %v2360
        %v2392 = vpop.xlane.xlu0 %2391
        %2393 = vadd.xlane.f32.xlu0 %v2362
        %v2394 = vpop.xlane.xlu0 %2393
        %2395 = vadd.xlane.f32.xlu0 %v2364
        %v2396 = vpop.xlane.xlu0 %2395
        %2397 = vadd.xlane.f32.xlu0 %v2366
        %v2398 = vpop.xlane.xlu0 %2397
        %v2399 = vrcp.pop %v2368
        %v2400 = vmul.f32 %v2336, %v2399
        %v2401 = vrcp.pop %v2370
        %v2402 = vmul.f32 %v2338, %v2401
        %v2403 = vrcp.pop %v2372
        %v2404 = vmul.f32 %v2340, %v2403
        %v2405 = vrcp.pop %v2374
        %v2406 = vmul.f32 %v2342, %v2405
        %v2407 = vrcp.pop %v2376
        %v2408 = vmul.f32 %v2344, %v2407
        %v2409 = vrcp.pop %v2378
        %v2410 = vmul.f32 %v2346, %v2409
        %v2411 = vrcp.pop %v2380
        %v2412 = vmul.f32 %v2348, %v2411
        %v2413 = vrcp.pop %v2382
        %v2414 = vmul.f32 %v2350, %v2413
        %v2415 = vrcp.pop %v2384
        %v2416 = vmul.f32 %v2352, %v2415
        %v2417 = vrcp.pop %v2386
        %v2418 = vmul.f32 %v2354, %v2417
        %v2419 = vrcp.pop %v2388
        %v2420 = vmul.f32 %v2356, %v2419
        %v2421 = vrcp.pop %v2390
        %v2422 = vmul.f32 %v2358, %v2421
        %v2423 = vrcp.pop %v2392
        %v2424 = vmul.f32 %v2360, %v2423
        %v2425 = vrcp.pop %v2394
        %v2426 = vmul.f32 %v2362, %v2425
        %v2427 = vrcp.pop %v2396
        %v2428 = vmul.f32 %v2364, %v2427
        %v2429 = vrcp.pop %v2398
        %v2430 = vmul.f32 %v2366, %v2429
        %s2431 = scalar_lea.vmem %s691, 128 [#allocation15]
        %2432 = vst [vmem:[%s2431] sm:$0xff] %v2400
        %2433 = vst [vmem:[%s2431 + $0x8] sm:$0xff] %v2402
        %2434 = vst [vmem:[%s2431 + $0x10] sm:$0xff] %v2404
        %2435 = vst [vmem:[%s2431 + $0x18] sm:$0xff] %v2406
        %2436 = vst [vmem:[%s2431 + $0x20] sm:$0xff] %v2408
        %2437 = vst [vmem:[%s2431 + $0x28] sm:$0xff] %v2410
        %2438 = vst [vmem:[%s2431 + $0x30] sm:$0xff] %v2412
        %2439 = vst [vmem:[%s2431 + $0x38] sm:$0xff] %v2414
        %2440 = vst [vmem:[%s2431 + $0x40] sm:$0xff] %v2416
        %2441 = vst [vmem:[%s2431 + $0x48] sm:$0xff] %v2418
        %2442 = vst [vmem:[%s2431 + $0x50] sm:$0xff] %v2420
        %2443 = vst [vmem:[%s2431 + $0x58] sm:$0xff] %v2422
        %2444 = vst [vmem:[%s2431 + $0x60] sm:$0xff] %v2424
        %2445 = vst [vmem:[%s2431 + $0x68] sm:$0xff] %v2426
        %2446 = vst [vmem:[%s2431 + $0x70] sm:$0xff] %v2428
        %2447 = vst [vmem:[%s2431 + $0x78] sm:$0xff] %v2430
        %2464 = vrot.lane.b32.xlu0 %v1357, 96
        %v2465 = vpop.permute.xlu0 %2464
        %2466 = vrot.lane.b32.xlu0 %v1362, 96
        %v2467 = vpop.permute.xlu0 %2466
        %2468 = vrot.lane.b32.xlu0 %v1367, 96
        %v2469 = vpop.permute.xlu0 %2468
        %2470 = vrot.lane.b32.xlu0 %v1372, 96
        %v2471 = vpop.permute.xlu0 %2470
        %2472 = vrot.lane.b32.xlu0 %v1377, 96
        %v2473 = vpop.permute.xlu0 %2472
        %2474 = vrot.lane.b32.xlu0 %v1382, 96
        %v2475 = vpop.permute.xlu0 %2474
        %2476 = vrot.lane.b32.xlu0 %v1387, 96
        %v2477 = vpop.permute.xlu0 %2476
        %2478 = vrot.lane.b32.xlu0 %v1392, 96
        %v2479 = vpop.permute.xlu0 %2478
        %2480 = vrot.lane.b32.xlu0 %v1397, 96
        %v2481 = vpop.permute.xlu0 %2480
        %2482 = vrot.lane.b32.xlu0 %v1402, 96
        %v2483 = vpop.permute.xlu0 %2482
        %2484 = vrot.lane.b32.xlu0 %v1407, 96
        %v2485 = vpop.permute.xlu0 %2484
        %2486 = vrot.lane.b32.xlu0 %v1412, 96
        %v2487 = vpop.permute.xlu0 %2486
        %2488 = vrot.lane.b32.xlu0 %v1417, 96
        %v2489 = vpop.permute.xlu0 %2488
        %2490 = vrot.lane.b32.xlu0 %v1422, 96
        %v2491 = vpop.permute.xlu0 %2490
        %2492 = vrot.lane.b32.xlu0 %v1427, 96
        %v2493 = vpop.permute.xlu0 %2492
        %2494 = vrot.lane.b32.xlu0 %v1432, 96
        %v2495 = vpop.permute.xlu0 %2494
        %2512 = vmatprep.subr.mxu0 0.0
        %2513 = vmatpush1.msra.mxu0 %v2465
        %2514 = vmatprep.subr.mxu0 0.0
        %2515 = vmatpush1.msra.mxu0 %v2467
        %2516 = vmatprep.subr.mxu0 0.0
        %2517 = vmatpush1.msra.mxu0 %v2469
        %2518 = vmatprep.subr.mxu0 0.0
        %2519 = vmatpush1.msra.mxu0 %v2471
        %2520 = vmatprep.subr.mxu0 0.0
        %2521 = vmatpush1.msra.mxu0 %v2473
        %2522 = vmatprep.subr.mxu0 0.0
        %2523 = vmatpush1.msra.mxu0 %v2475
        %2524 = vmatprep.subr.mxu0 0.0
        %2525 = vmatpush1.msra.mxu0 %v2477
        %2526 = vmatprep.subr.mxu0 0.0
        %2527 = vmatpush1.msra.mxu0 %v2479
        %2528 = vmatprep.subr.mxu0 0.0
        %2529 = vmatpush1.msra.mxu0 %v2481
        %2530 = vmatprep.subr.mxu0 0.0
        %2531 = vmatpush1.msra.mxu0 %v2483
        %2532 = vmatprep.subr.mxu0 0.0
        %2533 = vmatpush1.msra.mxu0 %v2485
        %2534 = vmatprep.subr.mxu0 0.0
        %2535 = vmatpush1.msra.mxu0 %v2487
        %2536 = vmatprep.subr.mxu0 0.0
        %2537 = vmatpush1.msra.mxu0 %v2489
        %2538 = vmatprep.subr.mxu0 0.0
        %2539 = vmatpush1.msra.mxu0 %v2491
        %2540 = vmatprep.subr.mxu0 0.0
        %2541 = vmatpush1.msra.mxu0 %v2493
        %2542 = vmatprep.subr.mxu0 0.0
        %2543 = vmatpush1.msra.mxu0 %v2495
        %2544 = vmatprep.subr.mxu0 0.0
        %2545 = vmatpush1.msra.mxu0 0.0
        %2546 = vmatprep.subr.mxu0 0.0
        %2547 = vmatpush1.msra.mxu0 0.0
        %2548 = vmatprep.subr.mxu0 0.0
        %2549 = vmatpush1.msra.mxu0 0.0
        %2550 = vmatprep.subr.mxu0 0.0
        %2551 = vmatpush1.msra.mxu0 0.0
        %2552 = vmatprep.subr.mxu0 0.0
        %2553 = vmatpush1.msra.mxu0 0.0
        %2554 = vmatprep.subr.mxu0 0.0
        %2555 = vmatpush1.msra.mxu0 0.0
        %2556 = vmatprep.subr.mxu0 0.0
        %2557 = vmatpush1.msra.mxu0 0.0
        %2558 = vmatprep.subr.mxu0 0.0
        %2559 = vmatpush1.msra.mxu0 0.0
        %2560 = vmatprep.subr.mxu0 0.0
        %2561 = vmatpush1.msra.mxu0 0.0
        %2562 = vmatprep.subr.mxu0 0.0
        %2563 = vmatpush1.msra.mxu0 0.0
        %2564 = vmatprep.subr.mxu0 0.0
        %2565 = vmatpush1.msra.mxu0 0.0
        %2566 = vmatprep.subr.mxu0 0.0
        %2567 = vmatpush1.msra.mxu0 0.0
        %2568 = vmatprep.subr.mxu0 0.0
        %2569 = vmatpush1.msra.mxu0 0.0
        %2570 = vmatprep.subr.mxu0 0.0
        %2571 = vmatpush1.msra.mxu0 0.0
        %2572 = vmatprep.subr.mxu0 0.0
        %2573 = vmatpush1.msra.mxu0 0.0
        %2574 = vmatprep.subr.mxu0 0.0
        %2575 = vmatpush1.msra.mxu0 0.0
        %2576 = vmatprep.mubr.f32.mxu0 0.0
        %2577 = vmatmul.mubr.f32.gmra.mrb[0].mxu0 %v2400
        %v2578 = vpop.f32.mrb[0].mxu0
        %v2579 = vadd.f32 0.0, %v2578
        %v2580 = vpop.f32.mrb[0].mxu0
        %2581 = vmatprep.mubr.f32.mxu0 0.0
        %2582 = vmatmul.mubr.f32.gmra.mrb[0].mxu0 %v2402
        %v2583 = vpop.f32.mrb[0].mxu0
        %v2584 = vadd.f32 0.0, %v2583
        %v2585 = vpop.f32.mrb[0].mxu0
        %2586 = vmatprep.mubr.f32.mxu0 0.0
        %2587 = vmatmul.mubr.f32.gmra.mrb[0].mxu0 %v2404
        %v2588 = vpop.f32.mrb[0].mxu0
        %v2589 = vadd.f32 0.0, %v2588
        %v2590 = vpop.f32.mrb[0].mxu0
        %2591 = vmatprep.mubr.f32.mxu0 0.0
        %2592 = vmatmul.mubr.f32.gmra.mrb[0].mxu0 %v2406
        %v2593 = vpop.f32.mrb[0].mxu0
        %v2594 = vadd.f32 0.0, %v2593
        %v2595 = vpop.f32.mrb[0].mxu0
        %2596 = vmatprep.mubr.f32.mxu0 0.0
        %2597 = vmatmul.mubr.f32.gmra.mrb[0].mxu0 %v2408
        %v2598 = vpop.f32.mrb[0].mxu0
        %v2599 = vadd.f32 0.0, %v2598
        %v2600 = vpop.f32.mrb[0].mxu0
        %2601 = vmatprep.mubr.f32.mxu0 0.0
        %2602 = vmatmul.mubr.f32.gmra.mrb[0].mxu0 %v2410
        %v2603 = vpop.f32.mrb[0].mxu0
        %v2604 = vadd.f32 0.0, %v2603
        %v2605 = vpop.f32.mrb[0].mxu0
        %2606 = vmatprep.mubr.f32.mxu0 0.0
        %2607 = vmatmul.mubr.f32.gmra.mrb[0].mxu0 %v2412
        %v2608 = vpop.f32.mrb[0].mxu0
        %v2609 = vadd.f32 0.0, %v2608
        %v2610 = vpop.f32.mrb[0].mxu0
        %2611 = vmatprep.mubr.f32.mxu0 0.0
        %2612 = vmatmul.mubr.f32.gmra.mrb[0].mxu0 %v2414
        %v2613 = vpop.f32.mrb[0].mxu0
        %v2614 = vadd.f32 0.0, %v2613
        %v2615 = vpop.f32.mrb[0].mxu0
        %2616 = vmatprep.mubr.f32.mxu0 0.0
        %2617 = vmatmul.mubr.f32.gmra.mrb[0].mxu0 %v2416
        %v2618 = vpop.f32.mrb[0].mxu0
        %v2619 = vadd.f32 0.0, %v2618
        %v2620 = vpop.f32.mrb[0].mxu0
        %2621 = vmatprep.mubr.f32.mxu0 0.0
        %2622 = vmatmul.mubr.f32.gmra.mrb[0].mxu0 %v2418
        %v2623 = vpop.f32.mrb[0].mxu0
        %v2624 = vadd.f32 0.0, %v2623
        %v2625 = vpop.f32.mrb[0].mxu0
        %2626 = vmatprep.mubr.f32.mxu0 0.0
        %2627 = vmatmul.mubr.f32.gmra.mrb[0].mxu0 %v2420
        %v2628 = vpop.f32.mrb[0].mxu0
        %v2629 = vadd.f32 0.0, %v2628
        %v2630 = vpop.f32.mrb[0].mxu0
        %2631 = vmatprep.mubr.f32.mxu0 0.0
        %2632 = vmatmul.mubr.f32.gmra.mrb[0].mxu0 %v2422
        %v2633 = vpop.f32.mrb[0].mxu0
        %v2634 = vadd.f32 0.0, %v2633
        %v2635 = vpop.f32.mrb[0].mxu0
        %2636 = vmatprep.mubr.f32.mxu0 0.0
        %2637 = vmatmul.mubr.f32.gmra.mrb[0].mxu0 %v2424
        %v2638 = vpop.f32.mrb[0].mxu0
        %v2639 = vadd.f32 0.0, %v2638
        %v2640 = vpop.f32.mrb[0].mxu0
        %2641 = vmatprep.mubr.f32.mxu0 0.0
        %2642 = vmatmul.mubr.f32.gmra.mrb[0].mxu0 %v2426
        %v2643 = vpop.f32.mrb[0].mxu0
        %v2644 = vadd.f32 0.0, %v2643
        %v2645 = vpop.f32.mrb[0].mxu0
        %2646 = vmatprep.mubr.f32.mxu0 0.0
        %2647 = vmatmul.mubr.f32.gmra.mrb[0].mxu0 %v2428
        %v2648 = vpop.f32.mrb[0].mxu0
        %v2649 = vadd.f32 0.0, %v2648
        %v2650 = vpop.f32.mrb[0].mxu0
        %2651 = vmatprep.mubr.f32.mxu0 0.0
        %2652 = vmatmul.mubr.f32.gmra.mrb[0].mxu0 %v2430
        %v2653 = vpop.f32.mrb[0].mxu0
        %v2654 = vadd.f32 0.0, %v2653
        %v2655 = vpop.f32.mrb[0].mxu0
        %2656 = vdwg.mxu0
        %2657 = vrot.lane.b32.xlu0 %v1021, 64
        %v2658 = vpop.permute.xlu0 %2657
        %2659 = vrot.lane.b32.xlu0 %v1026, 64
        %v2660 = vpop.permute.xlu0 %2659
        %2661 = vrot.lane.b32.xlu0 %v1031, 64
        %v2662 = vpop.permute.xlu0 %2661
        %2663 = vrot.lane.b32.xlu0 %v1036, 64
        %v2664 = vpop.permute.xlu0 %2663
        %2665 = vrot.lane.b32.xlu0 %v1041, 64
        %v2666 = vpop.permute.xlu0 %2665
        %2667 = vrot.lane.b32.xlu0 %v1046, 64
        %v2668 = vpop.permute.xlu0 %2667
        %2669 = vrot.lane.b32.xlu0 %v1051, 64
        %v2670 = vpop.permute.xlu0 %2669
        %2671 = vrot.lane.b32.xlu0 %v1056, 64
        %v2672 = vpop.permute.xlu0 %2671
        %2673 = vrot.lane.b32.xlu0 %v1061, 64
        %v2674 = vpop.permute.xlu0 %2673
        %2675 = vrot.lane.b32.xlu0 %v1066, 64
        %v2676 = vpop.permute.xlu0 %2675
        %2677 = vrot.lane.b32.xlu0 %v1071, 64
        %v2678 = vpop.permute.xlu0 %2677
        %2679 = vrot.lane.b32.xlu0 %v1076, 64
        %v2680 = vpop.permute.xlu0 %2679
        %2681 = vrot.lane.b32.xlu0 %v1081, 64
        %v2682 = vpop.permute.xlu0 %2681
        %2683 = vrot.lane.b32.xlu0 %v1086, 64
        %v2684 = vpop.permute.xlu0 %2683
        %2685 = vrot.lane.b32.xlu0 %v1091, 64
        %v2686 = vpop.permute.xlu0 %2685
        %2687 = vrot.lane.b32.xlu0 %v1096, 64
        %v2688 = vpop.permute.xlu0 %2687
        %2689 = vrot.lane.b32.xlu0 %v1189, 64
        %v2690 = vpop.permute.xlu0 %2689
        %2691 = vrot.lane.b32.xlu0 %v1194, 64
        %v2692 = vpop.permute.xlu0 %2691
        %2693 = vrot.lane.b32.xlu0 %v1199, 64
        %v2694 = vpop.permute.xlu0 %2693
        %2695 = vrot.lane.b32.xlu0 %v1204, 64
        %v2696 = vpop.permute.xlu0 %2695
        %2697 = vrot.lane.b32.xlu0 %v1209, 64
        %v2698 = vpop.permute.xlu0 %2697
        %2699 = vrot.lane.b32.xlu0 %v1214, 64
        %v2700 = vpop.permute.xlu0 %2699
        %2701 = vrot.lane.b32.xlu0 %v1219, 64
        %v2702 = vpop.permute.xlu0 %2701
        %2703 = vrot.lane.b32.xlu0 %v1224, 64
        %v2704 = vpop.permute.xlu0 %2703
        %2705 = vrot.lane.b32.xlu0 %v1229, 64
        %v2706 = vpop.permute.xlu0 %2705
        %2707 = vrot.lane.b32.xlu0 %v1234, 64
        %v2708 = vpop.permute.xlu0 %2707
        %2709 = vrot.lane.b32.xlu0 %v1239, 64
        %v2710 = vpop.permute.xlu0 %2709
        %2711 = vrot.lane.b32.xlu0 %v1244, 64
        %v2712 = vpop.permute.xlu0 %2711
        %2713 = vrot.lane.b32.xlu0 %v1249, 64
        %v2714 = vpop.permute.xlu0 %2713
        %2715 = vrot.lane.b32.xlu0 %v1254, 64
        %v2716 = vpop.permute.xlu0 %2715
        %2717 = vrot.lane.b32.xlu0 %v1259, 64
        %v2718 = vpop.permute.xlu0 %2717
        %2719 = vrot.lane.b32.xlu0 %v1264, 64
        %v2720 = vpop.permute.xlu0 %2719
        %v2721 = vsel %vm1435, %v2658, 0
        %v2723 = vsel %vm1435, %v2660, 0
        %v2725 = vsel %vm1435, %v2662, 0
        %v2727 = vsel %vm1435, %v2664, 0
        %v2729 = vsel %vm1435, %v2666, 0
        %v2731 = vsel %vm1435, %v2668, 0
        %v2733 = vsel %vm1435, %v2670, 0
        %v2735 = vsel %vm1435, %v2672, 0
        %v2737 = vsel %vm1435, %v2674, 0
        %v2739 = vsel %vm1435, %v2676, 0
        %v2741 = vsel %vm1435, %v2678, 0
        %v2743 = vsel %vm1435, %v2680, 0
        %v2745 = vsel %vm1435, %v2682, 0
        %v2747 = vsel %vm1435, %v2684, 0
        %v2749 = vsel %vm1435, %v2686, 0
        %v2751 = vsel %vm1435, %v2688, 0
        %v2753 = vsel %vm1435, %v2690, 0
        %v2755 = vsel %vm1435, %v2692, 0
        %v2757 = vsel %vm1435, %v2694, 0
        %v2759 = vsel %vm1435, %v2696, 0
        %v2761 = vsel %vm1435, %v2698, 0
        %v2763 = vsel %vm1435, %v2700, 0
        %v2765 = vsel %vm1435, %v2702, 0
        %v2767 = vsel %vm1435, %v2704, 0
        %v2769 = vsel %vm1435, %v2706, 0
        %v2771 = vsel %vm1435, %v2708, 0
        %v2773 = vsel %vm1435, %v2710, 0
        %v2775 = vsel %vm1435, %v2712, 0
        %v2777 = vsel %vm1435, %v2714, 0
        %v2779 = vsel %vm1435, %v2716, 0
        %v2781 = vsel %vm1435, %v2718, 0
        %v2783 = vsel %vm1435, %v2720, 0
        %2785 = vmatprep.subr.mxu0 0.0
        %2786 = vmatpush1.xpose.msra.mxu0 %v2753
        %2787 = vmatprep.subr.mxu0 0.0
        %2788 = vmatpush1.xpose.msra.mxu0 %v2755
        %2789 = vmatprep.subr.mxu0 0.0
        %2790 = vmatpush1.xpose.msra.mxu0 %v2757
        %2791 = vmatprep.subr.mxu0 0.0
        %2792 = vmatpush1.xpose.msra.mxu0 %v2759
        %2793 = vmatprep.subr.mxu0 0.0
        %2794 = vmatpush1.xpose.msra.mxu0 %v2761
        %2795 = vmatprep.subr.mxu0 0.0
        %2796 = vmatpush1.xpose.msra.mxu0 %v2763
        %2797 = vmatprep.subr.mxu0 0.0
        %2798 = vmatpush1.xpose.msra.mxu0 %v2765
        %2799 = vmatprep.subr.mxu0 0.0
        %2800 = vmatpush1.xpose.msra.mxu0 %v2767
        %2801 = vmatprep.subr.mxu0 0.0
        %2802 = vmatpush1.xpose.msra.mxu0 %v2769
        %2803 = vmatprep.subr.mxu0 0.0
        %2804 = vmatpush1.xpose.msra.mxu0 %v2771
        %2805 = vmatprep.subr.mxu0 0.0
        %2806 = vmatpush1.xpose.msra.mxu0 %v2773
        %2807 = vmatprep.subr.mxu0 0.0
        %2808 = vmatpush1.xpose.msra.mxu0 %v2775
        %2809 = vmatprep.subr.mxu0 0.0
        %2810 = vmatpush1.xpose.msra.mxu0 %v2777
        %2811 = vmatprep.subr.mxu0 0.0
        %2812 = vmatpush1.xpose.msra.mxu0 %v2779
        %2813 = vmatprep.subr.mxu0 0.0
        %2814 = vmatpush1.xpose.msra.mxu0 %v2781
        %2815 = vmatprep.subr.mxu0 0.0
        %2816 = vmatpush1.xpose.msra.mxu0 %v2783
        %2817 = vmatprep.subr.mxu0 0.0
        %2818 = vmatpush1.xpose.msra.mxu0 0.0
        %2819 = vmatprep.subr.mxu0 0.0
        %2820 = vmatpush1.xpose.msra.mxu0 0.0
        %2821 = vmatprep.subr.mxu0 0.0
        %2822 = vmatpush1.xpose.msra.mxu0 0.0
        %2823 = vmatprep.subr.mxu0 0.0
        %2824 = vmatpush1.xpose.msra.mxu0 0.0
        %2825 = vmatprep.subr.mxu0 0.0
        %2826 = vmatpush1.xpose.msra.mxu0 0.0
        %2827 = vmatprep.subr.mxu0 0.0
        %2828 = vmatpush1.xpose.msra.mxu0 0.0
        %2829 = vmatprep.subr.mxu0 0.0
        %2830 = vmatpush1.xpose.msra.mxu0 0.0
        %2831 = vmatprep.subr.mxu0 0.0
        %2832 = vmatpush1.xpose.msra.mxu0 0.0
        %2833 = vmatprep.subr.mxu0 0.0
        %2834 = vmatpush1.xpose.msra.mxu0 0.0
        %2835 = vmatprep.subr.mxu0 0.0
        %2836 = vmatpush1.xpose.msra.mxu0 0.0
        %2837 = vmatprep.subr.mxu0 0.0
        %2838 = vmatpush1.xpose.msra.mxu0 0.0
        %2839 = vmatprep.subr.mxu0 0.0
        %2840 = vmatpush1.xpose.msra.mxu0 0.0
        %2841 = vmatprep.subr.mxu0 0.0
        %2842 = vmatpush1.xpose.msra.mxu0 0.0
        %2843 = vmatprep.subr.mxu0 0.0
        %2844 = vmatpush1.xpose.msra.mxu0 0.0
        %2845 = vmatprep.subr.mxu0 0.0
        %2846 = vmatpush1.xpose.msra.mxu0 0.0
        %2847 = vmatprep.subr.mxu0 0.0
        %2848 = vmatpush1.xpose.msra.mxu0 0.0
        %2849 = vmatprep.mubr.f32.mxu0 0.0
        %2850 = vmatmul.mubr.f32.gmra.mrb[0].mxu0 %v2721
        %v2851 = vpop.f32.mrb[0].mxu0
        %v2852 = vadd.f32 0.0, %v2851
        %v2853 = vpop.f32.mrb[0].mxu0
        %2854 = vmatprep.mubr.f32.mxu0 0.0
        %2855 = vmatmul.mubr.f32.gmra.mrb[0].mxu0 %v2723
        %v2856 = vpop.f32.mrb[0].mxu0
        %v2857 = vadd.f32 0.0, %v2856
        %v2858 = vpop.f32.mrb[0].mxu0
        %2859 = vmatprep.mubr.f32.mxu0 0.0
        %2860 = vmatmul.mubr.f32.gmra.mrb[0].mxu0 %v2725
        %v2861 = vpop.f32.mrb[0].mxu0
        %v2862 = vadd.f32 0.0, %v2861
        %v2863 = vpop.f32.mrb[0].mxu0
        %2864 = vmatprep.mubr.f32.mxu0 0.0
        %2865 = vmatmul.mubr.f32.gmra.mrb[0].mxu0 %v2727
        %v2866 = vpop.f32.mrb[0].mxu0
        %v2867 = vadd.f32 0.0, %v2866
        %v2868 = vpop.f32.mrb[0].mxu0
        %2869 = vmatprep.mubr.f32.mxu0 0.0
        %2870 = vmatmul.mubr.f32.gmra.mrb[0].mxu0 %v2729
        %v2871 = vpop.f32.mrb[0].mxu0
        %v2872 = vadd.f32 0.0, %v2871
        %v2873 = vpop.f32.mrb[0].mxu0
        %2874 = vmatprep.mubr.f32.mxu0 0.0
        %2875 = vmatmul.mubr.f32.gmra.mrb[0].mxu0 %v2731
        %v2876 = vpop.f32.mrb[0].mxu0
        %v2877 = vadd.f32 0.0, %v2876
        %v2878 = vpop.f32.mrb[0].mxu0
        %2879 = vmatprep.mubr.f32.mxu0 0.0
        %2880 = vmatmul.mubr.f32.gmra.mrb[0].mxu0 %v2733
        %v2881 = vpop.f32.mrb[0].mxu0
        %v2882 = vadd.f32 0.0, %v2881
        %v2883 = vpop.f32.mrb[0].mxu0
        %2884 = vmatprep.mubr.f32.mxu0 0.0
        %2885 = vmatmul.mubr.f32.gmra.mrb[0].mxu0 %v2735
        %v2886 = vpop.f32.mrb[0].mxu0
        %v2887 = vadd.f32 0.0, %v2886
        %v2888 = vpop.f32.mrb[0].mxu0
        %2889 = vmatprep.mubr.f32.mxu0 0.0
        %2890 = vmatmul.mubr.f32.gmra.mrb[0].mxu0 %v2737
        %v2891 = vpop.f32.mrb[0].mxu0
        %v2892 = vadd.f32 0.0, %v2891
        %v2893 = vpop.f32.mrb[0].mxu0
        %2894 = vmatprep.mubr.f32.mxu0 0.0
        %2895 = vmatmul.mubr.f32.gmra.mrb[0].mxu0 %v2739
        %v2896 = vpop.f32.mrb[0].mxu0
        %v2897 = vadd.f32 0.0, %v2896
        %v2898 = vpop.f32.mrb[0].mxu0
        %2899 = vmatprep.mubr.f32.mxu0 0.0
        %2900 = vmatmul.mubr.f32.gmra.mrb[0].mxu0 %v2741
        %v2901 = vpop.f32.mrb[0].mxu0
        %v2902 = vadd.f32 0.0, %v2901
        %v2903 = vpop.f32.mrb[0].mxu0
        %2904 = vmatprep.mubr.f32.mxu0 0.0
        %2905 = vmatmul.mubr.f32.gmra.mrb[0].mxu0 %v2743
        %v2906 = vpop.f32.mrb[0].mxu0
        %v2907 = vadd.f32 0.0, %v2906
        %v2908 = vpop.f32.mrb[0].mxu0
        %2909 = vmatprep.mubr.f32.mxu0 0.0
        %2910 = vmatmul.mubr.f32.gmra.mrb[0].mxu0 %v2745
        %v2911 = vpop.f32.mrb[0].mxu0
        %v2912 = vadd.f32 0.0, %v2911
        %v2913 = vpop.f32.mrb[0].mxu0
        %2914 = vmatprep.mubr.f32.mxu0 0.0
        %2915 = vmatmul.mubr.f32.gmra.mrb[0].mxu0 %v2747
        %v2916 = vpop.f32.mrb[0].mxu0
        %v2917 = vadd.f32 0.0, %v2916
        %v2918 = vpop.f32.mrb[0].mxu0
        %2919 = vmatprep.mubr.f32.mxu0 0.0
        %2920 = vmatmul.mubr.f32.gmra.mrb[0].mxu0 %v2749
        %v2921 = vpop.f32.mrb[0].mxu0
        %v2922 = vadd.f32 0.0, %v2921
        %v2923 = vpop.f32.mrb[0].mxu0
        %2924 = vmatprep.mubr.f32.mxu0 0.0
        %2925 = vmatmul.mubr.f32.gmra.mrb[0].mxu0 %v2751
        %v2926 = vpop.f32.mrb[0].mxu0
        %v2927 = vadd.f32 0.0, %v2926
        %v2928 = vpop.f32.mrb[0].mxu0
        %2929 = vdwg.mxu0
        %v2930 = vmul.f32 %v2852, 0.17677669
        %v2931 = vmul.f32 %v2857, 0.17677669
        %v2932 = vmul.f32 %v2862, 0.17677669
        %v2933 = vmul.f32 %v2867, 0.17677669
        %v2934 = vmul.f32 %v2872, 0.17677669
        %v2935 = vmul.f32 %v2877, 0.17677669
        %v2936 = vmul.f32 %v2882, 0.17677669
        %v2937 = vmul.f32 %v2887, 0.17677669
        %v2938 = vmul.f32 %v2892, 0.17677669
        %v2939 = vmul.f32 %v2897, 0.17677669
        %v2940 = vmul.f32 %v2902, 0.17677669
        %v2941 = vmul.f32 %v2907, 0.17677669
        %v2942 = vmul.f32 %v2912, 0.17677669
        %v2943 = vmul.f32 %v2917, 0.17677669
        %v2944 = vmul.f32 %v2922, 0.17677669
        %v2945 = vmul.f32 %v2927, 0.17677669
        %2946 = vmax.xlane.f32.xlu0 %v2930
        %v2947 = vpop.xlane.xlu0 %2946
        %2948 = vmax.xlane.f32.xlu0 %v2931
        %v2949 = vpop.xlane.xlu0 %2948
        %2950 = vmax.xlane.f32.xlu0 %v2932
        %v2951 = vpop.xlane.xlu0 %2950
        %2952 = vmax.xlane.f32.xlu0 %v2933
        %v2953 = vpop.xlane.xlu0 %2952
        %2954 = vmax.xlane.f32.xlu0 %v2934
        %v2955 = vpop.xlane.xlu0 %2954
        %2956 = vmax.xlane.f32.xlu0 %v2935
        %v2957 = vpop.xlane.xlu0 %2956
        %2958 = vmax.xlane.f32.xlu0 %v2936
        %v2959 = vpop.xlane.xlu0 %2958
        %2960 = vmax.xlane.f32.xlu0 %v2937
        %v2961 = vpop.xlane.xlu0 %2960
        %2962 = vmax.xlane.f32.xlu0 %v2938
        %v2963 = vpop.xlane.xlu0 %2962
        %2964 = vmax.xlane.f32.xlu0 %v2939
        %v2965 = vpop.xlane.xlu0 %2964
        %2966 = vmax.xlane.f32.xlu0 %v2940
        %v2967 = vpop.xlane.xlu0 %2966
        %2968 = vmax.xlane.f32.xlu0 %v2941
        %v2969 = vpop.xlane.xlu0 %2968
        %2970 = vmax.xlane.f32.xlu0 %v2942
        %v2971 = vpop.xlane.xlu0 %2970
        %2972 = vmax.xlane.f32.xlu0 %v2943
        %v2973 = vpop.xlane.xlu0 %2972
        %2974 = vmax.xlane.f32.xlu0 %v2944
        %v2975 = vpop.xlane.xlu0 %2974
        %2976 = vmax.xlane.f32.xlu0 %v2945
        %v2977 = vpop.xlane.xlu0 %2976
        %v2978 = vsub.f32 %v2930, %v2947
        %v2979 = vsub.f32 %v2931, %v2949
        %v2980 = vsub.f32 %v2932, %v2951
        %v2981 = vsub.f32 %v2933, %v2953
        %v2982 = vsub.f32 %v2934, %v2955
        %v2983 = vsub.f32 %v2935, %v2957
        %v2984 = vsub.f32 %v2936, %v2959
        %v2985 = vsub.f32 %v2937, %v2961
        %v2986 = vsub.f32 %v2938, %v2963
        %v2987 = vsub.f32 %v2939, %v2965
        %v2988 = vsub.f32 %v2940, %v2967
        %v2989 = vsub.f32 %v2941, %v2969
        %v2990 = vsub.f32 %v2942, %v2971
        %v2991 = vsub.f32 %v2943, %v2973
        %v2992 = vsub.f32 %v2944, %v2975
        %v2993 = vsub.f32 %v2945, %v2977
        %v2994 = vmul.f32 %v2978, 1.442695
        %v2995 = vpow.pop %v2994
        %v2996 = vmul.f32 %v2979, 1.442695
        %v2997 = vpow.pop %v2996
        %v2998 = vmul.f32 %v2980, 1.442695
        %v2999 = vpow.pop %v2998
        %v3000 = vmul.f32 %v2981, 1.442695
        %v3001 = vpow.pop %v3000
        %v3002 = vmul.f32 %v2982, 1.442695
        %v3003 = vpow.pop %v3002
        %v3004 = vmul.f32 %v2983, 1.442695
        %v3005 = vpow.pop %v3004
        %v3006 = vmul.f32 %v2984, 1.442695
        %v3007 = vpow.pop %v3006
        %v3008 = vmul.f32 %v2985, 1.442695
        %v3009 = vpow.pop %v3008
        %v3010 = vmul.f32 %v2986, 1.442695
        %v3011 = vpow.pop %v3010
        %v3012 = vmul.f32 %v2987, 1.442695
        %v3013 = vpow.pop %v3012
        %v3014 = vmul.f32 %v2988, 1.442695
        %v3015 = vpow.pop %v3014
        %v3016 = vmul.f32 %v2989, 1.442695
        %v3017 = vpow.pop %v3016
        %v3018 = vmul.f32 %v2990, 1.442695
        %v3019 = vpow.pop %v3018
        %v3020 = vmul.f32 %v2991, 1.442695
        %v3021 = vpow.pop %v3020
        %v3022 = vmul.f32 %v2992, 1.442695
        %v3023 = vpow.pop %v3022
        %v3024 = vmul.f32 %v2993, 1.442695
        %v3025 = vpow.pop %v3024
        %3026 = vadd.xlane.f32.xlu0 %v2995
        %v3027 = vpop.xlane.xlu0 %3026
        %3028 = vadd.xlane.f32.xlu0 %v2997
        %v3029 = vpop.xlane.xlu0 %3028
        %3030 = vadd.xlane.f32.xlu0 %v2999
        %v3031 = vpop.xlane.xlu0 %3030
        %3032 = vadd.xlane.f32.xlu0 %v3001
        %v3033 = vpop.xlane.xlu0 %3032
        %3034 = vadd.xlane.f32.xlu0 %v3003
        %v3035 = vpop.xlane.xlu0 %3034
        %3036 = vadd.xlane.f32.xlu0 %v3005
        %v3037 = vpop.xlane.xlu0 %3036
        %3038 = vadd.xlane.f32.xlu0 %v3007
        %v3039 = vpop.xlane.xlu0 %3038
        %3040 = vadd.xlane.f32.xlu0 %v3009
        %v3041 = vpop.xlane.xlu0 %3040
        %3042 = vadd.xlane.f32.xlu0 %v3011
        %v3043 = vpop.xlane.xlu0 %3042
        %3044 = vadd.xlane.f32.xlu0 %v3013
        %v3045 = vpop.xlane.xlu0 %3044
        %3046 = vadd.xlane.f32.xlu0 %v3015
        %v3047 = vpop.xlane.xlu0 %3046
        %3048 = vadd.xlane.f32.xlu0 %v3017
        %v3049 = vpop.xlane.xlu0 %3048
        %3050 = vadd.xlane.f32.xlu0 %v3019
        %v3051 = vpop.xlane.xlu0 %3050
        %3052 = vadd.xlane.f32.xlu0 %v3021
        %v3053 = vpop.xlane.xlu0 %3052
        %3054 = vadd.xlane.f32.xlu0 %v3023
        %v3055 = vpop.xlane.xlu0 %3054
        %3056 = vadd.xlane.f32.xlu0 %v3025
        %v3057 = vpop.xlane.xlu0 %3056
        %v3058 = vrcp.pop %v3027
        %v3059 = vmul.f32 %v2995, %v3058
        %v3060 = vrcp.pop %v3029
        %v3061 = vmul.f32 %v2997, %v3060
        %v3062 = vrcp.pop %v3031
        %v3063 = vmul.f32 %v2999, %v3062
        %v3064 = vrcp.pop %v3033
        %v3065 = vmul.f32 %v3001, %v3064
        %v3066 = vrcp.pop %v3035
        %v3067 = vmul.f32 %v3003, %v3066
        %v3068 = vrcp.pop %v3037
        %v3069 = vmul.f32 %v3005, %v3068
        %v3070 = vrcp.pop %v3039
        %v3071 = vmul.f32 %v3007, %v3070
        %v3072 = vrcp.pop %v3041
        %v3073 = vmul.f32 %v3009, %v3072
        %v3074 = vrcp.pop %v3043
        %v3075 = vmul.f32 %v3011, %v3074
        %v3076 = vrcp.pop %v3045
        %v3077 = vmul.f32 %v3013, %v3076
        %v3078 = vrcp.pop %v3047
        %v3079 = vmul.f32 %v3015, %v3078
        %v3080 = vrcp.pop %v3049
        %v3081 = vmul.f32 %v3017, %v3080
        %v3082 = vrcp.pop %v3051
        %v3083 = vmul.f32 %v3019, %v3082
        %v3084 = vrcp.pop %v3053
        %v3085 = vmul.f32 %v3021, %v3084
        %v3086 = vrcp.pop %v3055
        %v3087 = vmul.f32 %v3023, %v3086
        %v3088 = vrcp.pop %v3057
        %v3089 = vmul.f32 %v3025, %v3088
        %s3090 = scalar_lea.vmem %s691, 256 [#allocation15]
        %3091 = vst [vmem:[%s3090] sm:$0xff] %v3059
        %3092 = vst [vmem:[%s3090 + $0x8] sm:$0xff] %v3061
        %3093 = vst [vmem:[%s3090 + $0x10] sm:$0xff] %v3063
        %3094 = vst [vmem:[%s3090 + $0x18] sm:$0xff] %v3065
        %3095 = vst [vmem:[%s3090 + $0x20] sm:$0xff] %v3067
        %3096 = vst [vmem:[%s3090 + $0x28] sm:$0xff] %v3069
        %3097 = vst [vmem:[%s3090 + $0x30] sm:$0xff] %v3071
        %3098 = vst [vmem:[%s3090 + $0x38] sm:$0xff] %v3073
        %3099 = vst [vmem:[%s3090 + $0x40] sm:$0xff] %v3075
        %3100 = vst [vmem:[%s3090 + $0x48] sm:$0xff] %v3077
        %3101 = vst [vmem:[%s3090 + $0x50] sm:$0xff] %v3079
        %3102 = vst [vmem:[%s3090 + $0x58] sm:$0xff] %v3081
        %3103 = vst [vmem:[%s3090 + $0x60] sm:$0xff] %v3083
        %3104 = vst [vmem:[%s3090 + $0x68] sm:$0xff] %v3085
        %3105 = vst [vmem:[%s3090 + $0x70] sm:$0xff] %v3087
        %3106 = vst [vmem:[%s3090 + $0x78] sm:$0xff] %v3089
        %3107 = vrot.lane.b32.xlu0 %v1357, 64
        %v3108 = vpop.permute.xlu0 %3107
        %3109 = vrot.lane.b32.xlu0 %v1362, 64
        %v3110 = vpop.permute.xlu0 %3109
        %3111 = vrot.lane.b32.xlu0 %v1367, 64
        %v3112 = vpop.permute.xlu0 %3111
        %3113 = vrot.lane.b32.xlu0 %v1372, 64
        %v3114 = vpop.permute.xlu0 %3113
        %3115 = vrot.lane.b32.xlu0 %v1377, 64
        %v3116 = vpop.permute.xlu0 %3115
        %3117 = vrot.lane.b32.xlu0 %v1382, 64
        %v3118 = vpop.permute.xlu0 %3117
        %3119 = vrot.lane.b32.xlu0 %v1387, 64
        %v3120 = vpop.permute.xlu0 %3119
        %3121 = vrot.lane.b32.xlu0 %v1392, 64
        %v3122 = vpop.permute.xlu0 %3121
        %3123 = vrot.lane.b32.xlu0 %v1397, 64
        %v3124 = vpop.permute.xlu0 %3123
        %3125 = vrot.lane.b32.xlu0 %v1402, 64
        %v3126 = vpop.permute.xlu0 %3125
        %3127 = vrot.lane.b32.xlu0 %v1407, 64
        %v3128 = vpop.permute.xlu0 %3127
        %3129 = vrot.lane.b32.xlu0 %v1412, 64
        %v3130 = vpop.permute.xlu0 %3129
        %3131 = vrot.lane.b32.xlu0 %v1417, 64
        %v3132 = vpop.permute.xlu0 %3131
        %3133 = vrot.lane.b32.xlu0 %v1422, 64
        %v3134 = vpop.permute.xlu0 %3133
        %3135 = vrot.lane.b32.xlu0 %v1427, 64
        %v3136 = vpop.permute.xlu0 %3135
        %3137 = vrot.lane.b32.xlu0 %v1432, 64
        %v3138 = vpop.permute.xlu0 %3137
        %3155 = vmatprep.subr.mxu0 0.0
        %3156 = vmatpush1.msra.mxu0 %v3108
        %3157 = vmatprep.subr.mxu0 0.0
        %3158 = vmatpush1.msra.mxu0 %v3110
        %3159 = vmatprep.subr.mxu0 0.0
        %3160 = vmatpush1.msra.mxu0 %v3112
        %3161 = vmatprep.subr.mxu0 0.0
        %3162 = vmatpush1.msra.mxu0 %v3114
        %3163 = vmatprep.subr.mxu0 0.0
        %3164 = vmatpush1.msra.mxu0 %v3116
        %3165 = vmatprep.subr.mxu0 0.0
        %3166 = vmatpush1.msra.mxu0 %v3118
        %3167 = vmatprep.subr.mxu0 0.0
        %3168 = vmatpush1.msra.mxu0 %v3120
        %3169 = vmatprep.subr.mxu0 0.0
        %3170 = vmatpush1.msra.mxu0 %v3122
        %3171 = vmatprep.subr.mxu0 0.0
        %3172 = vmatpush1.msra.mxu0 %v3124
        %3173 = vmatprep.subr.mxu0 0.0
        %3174 = vmatpush1.msra.mxu0 %v3126
        %3175 = vmatprep.subr.mxu0 0.0
        %3176 = vmatpush1.msra.mxu0 %v3128
        %3177 = vmatprep.subr.mxu0 0.0
        %3178 = vmatpush1.msra.mxu0 %v3130
        %3179 = vmatprep.subr.mxu0 0.0
        %3180 = vmatpush1.msra.mxu0 %v3132
        %3181 = vmatprep.subr.mxu0 0.0
        %3182 = vmatpush1.msra.mxu0 %v3134
        %3183 = vmatprep.subr.mxu0 0.0
        %3184 = vmatpush1.msra.mxu0 %v3136
        %3185 = vmatprep.subr.mxu0 0.0
        %3186 = vmatpush1.msra.mxu0 %v3138
        %3187 = vmatprep.subr.mxu0 0.0
        %3188 = vmatpush1.msra.mxu0 0.0
        %3189 = vmatprep.subr.mxu0 0.0
        %3190 = vmatpush1.msra.mxu0 0.0
        %3191 = vmatprep.subr.mxu0 0.0
        %3192 = vmatpush1.msra.mxu0 0.0
        %3193 = vmatprep.subr.mxu0 0.0
        %3194 = vmatpush1.msra.mxu0 0.0
        %3195 = vmatprep.subr.mxu0 0.0
        %3196 = vmatpush1.msra.mxu0 0.0
        %3197 = vmatprep.subr.mxu0 0.0
        %3198 = vmatpush1.msra.mxu0 0.0
        %3199 = vmatprep.subr.mxu0 0.0
        %3200 = vmatpush1.msra.mxu0 0.0
        %3201 = vmatprep.subr.mxu0 0.0
        %3202 = vmatpush1.msra.mxu0 0.0
        %3203 = vmatprep.subr.mxu0 0.0
        %3204 = vmatpush1.msra.mxu0 0.0
        %3205 = vmatprep.subr.mxu0 0.0
        %3206 = vmatpush1.msra.mxu0 0.0
        %3207 = vmatprep.subr.mxu0 0.0
        %3208 = vmatpush1.msra.mxu0 0.0
        %3209 = vmatprep.subr.mxu0 0.0
        %3210 = vmatpush1.msra.mxu0 0.0
        %3211 = vmatprep.subr.mxu0 0.0
        %3212 = vmatpush1.msra.mxu0 0.0
        %3213 = vmatprep.subr.mxu0 0.0
        %3214 = vmatpush1.msra.mxu0 0.0
        %3215 = vmatprep.subr.mxu0 0.0
        %3216 = vmatpush1.msra.mxu0 0.0
        %3217 = vmatprep.subr.mxu0 0.0
        %3218 = vmatpush1.msra.mxu0 0.0
        %3219 = vmatprep.mubr.f32.mxu0 0.0
        %3220 = vmatmul.mubr.f32.gmra.mrb[0].mxu0 %v3059
        %v3221 = vpop.f32.mrb[0].mxu0
        %v3222 = vadd.f32 0.0, %v3221
        %v3223 = vpop.f32.mrb[0].mxu0
        %3224 = vmatprep.mubr.f32.mxu0 0.0
        %3225 = vmatmul.mubr.f32.gmra.mrb[0].mxu0 %v3061
        %v3226 = vpop.f32.mrb[0].mxu0
        %v3227 = vadd.f32 0.0, %v3226
        %v3228 = vpop.f32.mrb[0].mxu0
        %3229 = vmatprep.mubr.f32.mxu0 0.0
        %3230 = vmatmul.mubr.f32.gmra.mrb[0].mxu0 %v3063
        %v3231 = vpop.f32.mrb[0].mxu0
        %v3232 = vadd.f32 0.0, %v3231
        %v3233 = vpop.f32.mrb[0].mxu0
        %3234 = vmatprep.mubr.f32.mxu0 0.0
        %3235 = vmatmul.mubr.f32.gmra.mrb[0].mxu0 %v3065
        %v3236 = vpop.f32.mrb[0].mxu0
        %v3237 = vadd.f32 0.0, %v3236
        %v3238 = vpop.f32.mrb[0].mxu0
        %3239 = vmatprep.mubr.f32.mxu0 0.0
        %3240 = vmatmul.mubr.f32.gmra.mrb[0].mxu0 %v3067
        %v3241 = vpop.f32.mrb[0].mxu0
        %v3242 = vadd.f32 0.0, %v3241
        %v3243 = vpop.f32.mrb[0].mxu0
        %3244 = vmatprep.mubr.f32.mxu0 0.0
        %3245 = vmatmul.mubr.f32.gmra.mrb[0].mxu0 %v3069
        %v3246 = vpop.f32.mrb[0].mxu0
        %v3247 = vadd.f32 0.0, %v3246
        %v3248 = vpop.f32.mrb[0].mxu0
        %3249 = vmatprep.mubr.f32.mxu0 0.0
        %3250 = vmatmul.mubr.f32.gmra.mrb[0].mxu0 %v3071
        %v3251 = vpop.f32.mrb[0].mxu0
        %v3252 = vadd.f32 0.0, %v3251
        %v3253 = vpop.f32.mrb[0].mxu0
        %3254 = vmatprep.mubr.f32.mxu0 0.0
        %3255 = vmatmul.mubr.f32.gmra.mrb[0].mxu0 %v3073
        %v3256 = vpop.f32.mrb[0].mxu0
        %v3257 = vadd.f32 0.0, %v3256
        %v3258 = vpop.f32.mrb[0].mxu0
        %3259 = vmatprep.mubr.f32.mxu0 0.0
        %3260 = vmatmul.mubr.f32.gmra.mrb[0].mxu0 %v3075
        %v3261 = vpop.f32.mrb[0].mxu0
        %v3262 = vadd.f32 0.0, %v3261
        %v3263 = vpop.f32.mrb[0].mxu0
        %3264 = vmatprep.mubr.f32.mxu0 0.0
        %3265 = vmatmul.mubr.f32.gmra.mrb[0].mxu0 %v3077
        %v3266 = vpop.f32.mrb[0].mxu0
        %v3267 = vadd.f32 0.0, %v3266
        %v3268 = vpop.f32.mrb[0].mxu0
        %3269 = vmatprep.mubr.f32.mxu0 0.0
        %3270 = vmatmul.mubr.f32.gmra.mrb[0].mxu0 %v3079
        %v3271 = vpop.f32.mrb[0].mxu0
        %v3272 = vadd.f32 0.0, %v3271
        %v3273 = vpop.f32.mrb[0].mxu0
        %3274 = vmatprep.mubr.f32.mxu0 0.0
        %3275 = vmatmul.mubr.f32.gmra.mrb[0].mxu0 %v3081
        %v3276 = vpop.f32.mrb[0].mxu0
        %v3277 = vadd.f32 0.0, %v3276
        %v3278 = vpop.f32.mrb[0].mxu0
        %3279 = vmatprep.mubr.f32.mxu0 0.0
        %3280 = vmatmul.mubr.f32.gmra.mrb[0].mxu0 %v3083
        %v3281 = vpop.f32.mrb[0].mxu0
        %v3282 = vadd.f32 0.0, %v3281
        %v3283 = vpop.f32.mrb[0].mxu0
        %3284 = vmatprep.mubr.f32.mxu0 0.0
        %3285 = vmatmul.mubr.f32.gmra.mrb[0].mxu0 %v3085
        %v3286 = vpop.f32.mrb[0].mxu0
        %v3287 = vadd.f32 0.0, %v3286
        %v3288 = vpop.f32.mrb[0].mxu0
        %3289 = vmatprep.mubr.f32.mxu0 0.0
        %3290 = vmatmul.mubr.f32.gmra.mrb[0].mxu0 %v3087
        %v3291 = vpop.f32.mrb[0].mxu0
        %v3292 = vadd.f32 0.0, %v3291
        %v3293 = vpop.f32.mrb[0].mxu0
        %3294 = vmatprep.mubr.f32.mxu0 0.0
        %3295 = vmatmul.mubr.f32.gmra.mrb[0].mxu0 %v3089
        %v3296 = vpop.f32.mrb[0].mxu0
        %v3297 = vadd.f32 0.0, %v3296
        %v3298 = vpop.f32.mrb[0].mxu0
        %3299 = vdwg.mxu0
        %3300 = vrot.lane.b32.xlu0 %v1021, 32
        %v3301 = vpop.permute.xlu0 %3300
        %3302 = vrot.lane.b32.xlu0 %v1026, 32
        %v3303 = vpop.permute.xlu0 %3302
        %3304 = vrot.lane.b32.xlu0 %v1031, 32
        %v3305 = vpop.permute.xlu0 %3304
        %3306 = vrot.lane.b32.xlu0 %v1036, 32
        %v3307 = vpop.permute.xlu0 %3306
        %3308 = vrot.lane.b32.xlu0 %v1041, 32
        %v3309 = vpop.permute.xlu0 %3308
        %3310 = vrot.lane.b32.xlu0 %v1046, 32
        %v3311 = vpop.permute.xlu0 %3310
        %3312 = vrot.lane.b32.xlu0 %v1051, 32
        %v3313 = vpop.permute.xlu0 %3312
        %3314 = vrot.lane.b32.xlu0 %v1056, 32
        %v3315 = vpop.permute.xlu0 %3314
        %3316 = vrot.lane.b32.xlu0 %v1061, 32
        %v3317 = vpop.permute.xlu0 %3316
        %3318 = vrot.lane.b32.xlu0 %v1066, 32
        %v3319 = vpop.permute.xlu0 %3318
        %3320 = vrot.lane.b32.xlu0 %v1071, 32
        %v3321 = vpop.permute.xlu0 %3320
        %3322 = vrot.lane.b32.xlu0 %v1076, 32
        %v3323 = vpop.permute.xlu0 %3322
        %3324 = vrot.lane.b32.xlu0 %v1081, 32
        %v3325 = vpop.permute.xlu0 %3324
        %3326 = vrot.lane.b32.xlu0 %v1086, 32
        %v3327 = vpop.permute.xlu0 %3326
        %3328 = vrot.lane.b32.xlu0 %v1091, 32
        %v3329 = vpop.permute.xlu0 %3328
        %3330 = vrot.lane.b32.xlu0 %v1096, 32
        %v3331 = vpop.permute.xlu0 %3330
        %3332 = vrot.lane.b32.xlu0 %v1189, 32
        %v3333 = vpop.permute.xlu0 %3332
        %3334 = vrot.lane.b32.xlu0 %v1194, 32
        %v3335 = vpop.permute.xlu0 %3334
        %3336 = vrot.lane.b32.xlu0 %v1199, 32
        %v3337 = vpop.permute.xlu0 %3336
        %3338 = vrot.lane.b32.xlu0 %v1204, 32
        %v3339 = vpop.permute.xlu0 %3338
        %3340 = vrot.lane.b32.xlu0 %v1209, 32
        %v3341 = vpop.permute.xlu0 %3340
        %3342 = vrot.lane.b32.xlu0 %v1214, 32
        %v3343 = vpop.permute.xlu0 %3342
        %3344 = vrot.lane.b32.xlu0 %v1219, 32
        %v3345 = vpop.permute.xlu0 %3344
        %3346 = vrot.lane.b32.xlu0 %v1224, 32
        %v3347 = vpop.permute.xlu0 %3346
        %3348 = vrot.lane.b32.xlu0 %v1229, 32
        %v3349 = vpop.permute.xlu0 %3348
        %3350 = vrot.lane.b32.xlu0 %v1234, 32
        %v3351 = vpop.permute.xlu0 %3350
        %3352 = vrot.lane.b32.xlu0 %v1239, 32
        %v3353 = vpop.permute.xlu0 %3352
        %3354 = vrot.lane.b32.xlu0 %v1244, 32
        %v3355 = vpop.permute.xlu0 %3354
        %3356 = vrot.lane.b32.xlu0 %v1249, 32
        %v3357 = vpop.permute.xlu0 %3356
        %3358 = vrot.lane.b32.xlu0 %v1254, 32
        %v3359 = vpop.permute.xlu0 %3358
        %3360 = vrot.lane.b32.xlu0 %v1259, 32
        %v3361 = vpop.permute.xlu0 %3360
        %3362 = vrot.lane.b32.xlu0 %v1264, 32
        %v3363 = vpop.permute.xlu0 %3362
        %v3364 = vsel %vm1435, %v3301, 0
        %v3366 = vsel %vm1435, %v3303, 0
        %v3368 = vsel %vm1435, %v3305, 0
        %v3370 = vsel %vm1435, %v3307, 0
        %v3372 = vsel %vm1435, %v3309, 0
        %v3374 = vsel %vm1435, %v3311, 0
        %v3376 = vsel %vm1435, %v3313, 0
        %v3378 = vsel %vm1435, %v3315, 0
        %v3380 = vsel %vm1435, %v3317, 0
        %v3382 = vsel %vm1435, %v3319, 0
        %v3384 = vsel %vm1435, %v3321, 0
        %v3386 = vsel %vm1435, %v3323, 0
        %v3388 = vsel %vm1435, %v3325, 0
        %v3390 = vsel %vm1435, %v3327, 0
        %v3392 = vsel %vm1435, %v3329, 0
        %v3394 = vsel %vm1435, %v3331, 0
        %v3396 = vsel %vm1435, %v3333, 0
        %v3398 = vsel %vm1435, %v3335, 0
        %v3400 = vsel %vm1435, %v3337, 0
        %v3402 = vsel %vm1435, %v3339, 0
        %v3404 = vsel %vm1435, %v3341, 0
        %v3406 = vsel %vm1435, %v3343, 0
        %v3408 = vsel %vm1435, %v3345, 0
        %v3410 = vsel %vm1435, %v3347, 0
        %v3412 = vsel %vm1435, %v3349, 0
        %v3414 = vsel %vm1435, %v3351, 0
        %v3416 = vsel %vm1435, %v3353, 0
        %v3418 = vsel %vm1435, %v3355, 0
        %v3420 = vsel %vm1435, %v3357, 0
        %v3422 = vsel %vm1435, %v3359, 0
        %v3424 = vsel %vm1435, %v3361, 0
        %v3426 = vsel %vm1435, %v3363, 0
        %3428 = vmatprep.subr.mxu0 0.0
        %3429 = vmatpush1.xpose.msra.mxu0 %v3396
        %3430 = vmatprep.subr.mxu0 0.0
        %3431 = vmatpush1.xpose.msra.mxu0 %v3398
        %3432 = vmatprep.subr.mxu0 0.0
        %3433 = vmatpush1.xpose.msra.mxu0 %v3400
        %3434 = vmatprep.subr.mxu0 0.0
        %3435 = vmatpush1.xpose.msra.mxu0 %v3402
        %3436 = vmatprep.subr.mxu0 0.0
        %3437 = vmatpush1.xpose.msra.mxu0 %v3404
        %3438 = vmatprep.subr.mxu0 0.0
        %3439 = vmatpush1.xpose.msra.mxu0 %v3406
        %3440 = vmatprep.subr.mxu0 0.0
        %3441 = vmatpush1.xpose.msra.mxu0 %v3408
        %3442 = vmatprep.subr.mxu0 0.0
        %3443 = vmatpush1.xpose.msra.mxu0 %v3410
        %3444 = vmatprep.subr.mxu0 0.0
        %3445 = vmatpush1.xpose.msra.mxu0 %v3412
        %3446 = vmatprep.subr.mxu0 0.0
        %3447 = vmatpush1.xpose.msra.mxu0 %v3414
        %3448 = vmatprep.subr.mxu0 0.0
        %3449 = vmatpush1.xpose.msra.mxu0 %v3416
        %3450 = vmatprep.subr.mxu0 0.0
        %3451 = vmatpush1.xpose.msra.mxu0 %v3418
        %3452 = vmatprep.subr.mxu0 0.0
        %3453 = vmatpush1.xpose.msra.mxu0 %v3420
        %3454 = vmatprep.subr.mxu0 0.0
        %3455 = vmatpush1.xpose.msra.mxu0 %v3422
        %3456 = vmatprep.subr.mxu0 0.0
        %3457 = vmatpush1.xpose.msra.mxu0 %v3424
        %3458 = vmatprep.subr.mxu0 0.0
        %3459 = vmatpush1.xpose.msra.mxu0 %v3426
        %3460 = vmatprep.subr.mxu0 0.0
        %3461 = vmatpush1.xpose.msra.mxu0 0.0
        %3462 = vmatprep.subr.mxu0 0.0
        %3463 = vmatpush1.xpose.msra.mxu0 0.0
        %3464 = vmatprep.subr.mxu0 0.0
        %3465 = vmatpush1.xpose.msra.mxu0 0.0
        %3466 = vmatprep.subr.mxu0 0.0
        %3467 = vmatpush1.xpose.msra.mxu0 0.0
        %3468 = vmatprep.subr.mxu0 0.0
        %3469 = vmatpush1.xpose.msra.mxu0 0.0
        %3470 = vmatprep.subr.mxu0 0.0
        %3471 = vmatpush1.xpose.msra.mxu0 0.0
        %3472 = vmatprep.subr.mxu0 0.0
        %3473 = vmatpush1.xpose.msra.mxu0 0.0
        %3474 = vmatprep.subr.mxu0 0.0
        %3475 = vmatpush1.xpose.msra.mxu0 0.0
        %3476 = vmatprep.subr.mxu0 0.0
        %3477 = vmatpush1.xpose.msra.mxu0 0.0
        %3478 = vmatprep.subr.mxu0 0.0
        %3479 = vmatpush1.xpose.msra.mxu0 0.0
        %3480 = vmatprep.subr.mxu0 0.0
        %3481 = vmatpush1.xpose.msra.mxu0 0.0
        %3482 = vmatprep.subr.mxu0 0.0
        %3483 = vmatpush1.xpose.msra.mxu0 0.0
        %3484 = vmatprep.subr.mxu0 0.0
        %3485 = vmatpush1.xpose.msra.mxu0 0.0
        %3486 = vmatprep.subr.mxu0 0.0
        %3487 = vmatpush1.xpose.msra.mxu0 0.0
        %3488 = vmatprep.subr.mxu0 0.0
        %3489 = vmatpush1.xpose.msra.mxu0 0.0
        %3490 = vmatprep.subr.mxu0 0.0
        %3491 = vmatpush1.xpose.msra.mxu0 0.0
        %3492 = vmatprep.mubr.f32.mxu0 0.0
        %3493 = vmatmul.mubr.f32.gmra.mrb[0].mxu0 %v3364
        %v3494 = vpop.f32.mrb[0].mxu0
        %v3495 = vadd.f32 0.0, %v3494
        %v3496 = vpop.f32.mrb[0].mxu0
        %3497 = vmatprep.mubr.f32.mxu0 0.0
        %3498 = vmatmul.mubr.f32.gmra.mrb[0].mxu0 %v3366
        %v3499 = vpop.f32.mrb[0].mxu0
        %v3500 = vadd.f32 0.0, %v3499
        %v3501 = vpop.f32.mrb[0].mxu0
        %3502 = vmatprep.mubr.f32.mxu0 0.0
        %3503 = vmatmul.mubr.f32.gmra.mrb[0].mxu0 %v3368
        %v3504 = vpop.f32.mrb[0].mxu0
        %v3505 = vadd.f32 0.0, %v3504
        %v3506 = vpop.f32.mrb[0].mxu0
        %3507 = vmatprep.mubr.f32.mxu0 0.0
        %3508 = vmatmul.mubr.f32.gmra.mrb[0].mxu0 %v3370
        %v3509 = vpop.f32.mrb[0].mxu0
        %v3510 = vadd.f32 0.0, %v3509
        %v3511 = vpop.f32.mrb[0].mxu0
        %3512 = vmatprep.mubr.f32.mxu0 0.0
        %3513 = vmatmul.mubr.f32.gmra.mrb[0].mxu0 %v3372
        %v3514 = vpop.f32.mrb[0].mxu0
        %v3515 = vadd.f32 0.0, %v3514
        %v3516 = vpop.f32.mrb[0].mxu0
        %3517 = vmatprep.mubr.f32.mxu0 0.0
        %3518 = vmatmul.mubr.f32.gmra.mrb[0].mxu0 %v3374
        %v3519 = vpop.f32.mrb[0].mxu0
        %v3520 = vadd.f32 0.0, %v3519
        %v3521 = vpop.f32.mrb[0].mxu0
        %3522 = vmatprep.mubr.f32.mxu0 0.0
        %3523 = vmatmul.mubr.f32.gmra.mrb[0].mxu0 %v3376
        %v3524 = vpop.f32.mrb[0].mxu0
        %v3525 = vadd.f32 0.0, %v3524
        %v3526 = vpop.f32.mrb[0].mxu0
        %3527 = vmatprep.mubr.f32.mxu0 0.0
        %3528 = vmatmul.mubr.f32.gmra.mrb[0].mxu0 %v3378
        %v3529 = vpop.f32.mrb[0].mxu0
        %v3530 = vadd.f32 0.0, %v3529
        %v3531 = vpop.f32.mrb[0].mxu0
        %3532 = vmatprep.mubr.f32.mxu0 0.0
        %3533 = vmatmul.mubr.f32.gmra.mrb[0].mxu0 %v3380
        %v3534 = vpop.f32.mrb[0].mxu0
        %v3535 = vadd.f32 0.0, %v3534
        %v3536 = vpop.f32.mrb[0].mxu0
        %3537 = vmatprep.mubr.f32.mxu0 0.0
        %3538 = vmatmul.mubr.f32.gmra.mrb[0].mxu0 %v3382
        %v3539 = vpop.f32.mrb[0].mxu0
        %v3540 = vadd.f32 0.0, %v3539
        %v3541 = vpop.f32.mrb[0].mxu0
        %3542 = vmatprep.mubr.f32.mxu0 0.0
        %3543 = vmatmul.mubr.f32.gmra.mrb[0].mxu0 %v3384
        %v3544 = vpop.f32.mrb[0].mxu0
        %v3545 = vadd.f32 0.0, %v3544
        %v3546 = vpop.f32.mrb[0].mxu0
        %3547 = vmatprep.mubr.f32.mxu0 0.0
        %3548 = vmatmul.mubr.f32.gmra.mrb[0].mxu0 %v3386
        %v3549 = vpop.f32.mrb[0].mxu0
        %v3550 = vadd.f32 0.0, %v3549
        %v3551 = vpop.f32.mrb[0].mxu0
        %3552 = vmatprep.mubr.f32.mxu0 0.0
        %3553 = vmatmul.mubr.f32.gmra.mrb[0].mxu0 %v3388
        %v3554 = vpop.f32.mrb[0].mxu0
        %v3555 = vadd.f32 0.0, %v3554
        %v3556 = vpop.f32.mrb[0].mxu0
        %3557 = vmatprep.mubr.f32.mxu0 0.0
        %3558 = vmatmul.mubr.f32.gmra.mrb[0].mxu0 %v3390
        %v3559 = vpop.f32.mrb[0].mxu0
        %v3560 = vadd.f32 0.0, %v3559
        %v3561 = vpop.f32.mrb[0].mxu0
        %3562 = vmatprep.mubr.f32.mxu0 0.0
        %3563 = vmatmul.mubr.f32.gmra.mrb[0].mxu0 %v3392
        %v3564 = vpop.f32.mrb[0].mxu0
        %v3565 = vadd.f32 0.0, %v3564
        %v3566 = vpop.f32.mrb[0].mxu0
        %3567 = vmatprep.mubr.f32.mxu0 0.0
        %3568 = vmatmul.mubr.f32.gmra.mrb[0].mxu0 %v3394
        %v3569 = vpop.f32.mrb[0].mxu0
        %v3570 = vadd.f32 0.0, %v3569
        %v3571 = vpop.f32.mrb[0].mxu0
        %3572 = vdwg.mxu0
        %v3573 = vmul.f32 %v3495, 0.17677669
        %v3574 = vmul.f32 %v3500, 0.17677669
        %v3575 = vmul.f32 %v3505, 0.17677669
        %v3576 = vmul.f32 %v3510, 0.17677669
        %v3577 = vmul.f32 %v3515, 0.17677669
        %v3578 = vmul.f32 %v3520, 0.17677669
        %v3579 = vmul.f32 %v3525, 0.17677669
        %v3580 = vmul.f32 %v3530, 0.17677669
        %v3581 = vmul.f32 %v3535, 0.17677669
        %v3582 = vmul.f32 %v3540, 0.17677669
        %v3583 = vmul.f32 %v3545, 0.17677669
        %v3584 = vmul.f32 %v3550, 0.17677669
        %v3585 = vmul.f32 %v3555, 0.17677669
        %v3586 = vmul.f32 %v3560, 0.17677669
        %v3587 = vmul.f32 %v3565, 0.17677669
        %v3588 = vmul.f32 %v3570, 0.17677669
        %3589 = vmax.xlane.f32.xlu0 %v3573
        %v3590 = vpop.xlane.xlu0 %3589
        %3591 = vmax.xlane.f32.xlu0 %v3574
        %v3592 = vpop.xlane.xlu0 %3591
        %3593 = vmax.xlane.f32.xlu0 %v3575
        %v3594 = vpop.xlane.xlu0 %3593
        %3595 = vmax.xlane.f32.xlu0 %v3576
        %v3596 = vpop.xlane.xlu0 %3595
        %3597 = vmax.xlane.f32.xlu0 %v3577
        %v3598 = vpop.xlane.xlu0 %3597
        %3599 = vmax.xlane.f32.xlu0 %v3578
        %v3600 = vpop.xlane.xlu0 %3599
        %3601 = vmax.xlane.f32.xlu0 %v3579
        %v3602 = vpop.xlane.xlu0 %3601
        %3603 = vmax.xlane.f32.xlu0 %v3580
        %v3604 = vpop.xlane.xlu0 %3603
        %3605 = vmax.xlane.f32.xlu0 %v3581
        %v3606 = vpop.xlane.xlu0 %3605
        %3607 = vmax.xlane.f32.xlu0 %v3582
        %v3608 = vpop.xlane.xlu0 %3607
        %3609 = vmax.xlane.f32.xlu0 %v3583
        %v3610 = vpop.xlane.xlu0 %3609
        %3611 = vmax.xlane.f32.xlu0 %v3584
        %v3612 = vpop.xlane.xlu0 %3611
        %3613 = vmax.xlane.f32.xlu0 %v3585
        %v3614 = vpop.xlane.xlu0 %3613
        %3615 = vmax.xlane.f32.xlu0 %v3586
        %v3616 = vpop.xlane.xlu0 %3615
        %3617 = vmax.xlane.f32.xlu0 %v3587
        %v3618 = vpop.xlane.xlu0 %3617
        %3619 = vmax.xlane.f32.xlu0 %v3588
        %v3620 = vpop.xlane.xlu0 %3619
        %v3621 = vsub.f32 %v3573, %v3590
        %v3622 = vsub.f32 %v3574, %v3592
        %v3623 = vsub.f32 %v3575, %v3594
        %v3624 = vsub.f32 %v3576, %v3596
        %v3625 = vsub.f32 %v3577, %v3598
        %v3626 = vsub.f32 %v3578, %v3600
        %v3627 = vsub.f32 %v3579, %v3602
        %v3628 = vsub.f32 %v3580, %v3604
        %v3629 = vsub.f32 %v3581, %v3606
        %v3630 = vsub.f32 %v3582, %v3608
        %v3631 = vsub.f32 %v3583, %v3610
        %v3632 = vsub.f32 %v3584, %v3612
        %v3633 = vsub.f32 %v3585, %v3614
        %v3634 = vsub.f32 %v3586, %v3616
        %v3635 = vsub.f32 %v3587, %v3618
        %v3636 = vsub.f32 %v3588, %v3620
        %v3637 = vmul.f32 %v3621, 1.442695
        %v3638 = vpow.pop %v3637
        %v3639 = vmul.f32 %v3622, 1.442695
        %v3640 = vpow.pop %v3639
        %v3641 = vmul.f32 %v3623, 1.442695
        %v3642 = vpow.pop %v3641
        %v3643 = vmul.f32 %v3624, 1.442695
        %v3644 = vpow.pop %v3643
        %v3645 = vmul.f32 %v3625, 1.442695
        %v3646 = vpow.pop %v3645
        %v3647 = vmul.f32 %v3626, 1.442695
        %v3648 = vpow.pop %v3647
        %v3649 = vmul.f32 %v3627, 1.442695
        %v3650 = vpow.pop %v3649
        %v3651 = vmul.f32 %v3628, 1.442695
        %v3652 = vpow.pop %v3651
        %v3653 = vmul.f32 %v3629, 1.442695
        %v3654 = vpow.pop %v3653
        %v3655 = vmul.f32 %v3630, 1.442695
        %v3656 = vpow.pop %v3655
        %v3657 = vmul.f32 %v3631, 1.442695
        %v3658 = vpow.pop %v3657
        %v3659 = vmul.f32 %v3632, 1.442695
        %v3660 = vpow.pop %v3659
        %v3661 = vmul.f32 %v3633, 1.442695
        %v3662 = vpow.pop %v3661
        %v3663 = vmul.f32 %v3634, 1.442695
        %v3664 = vpow.pop %v3663
        %v3665 = vmul.f32 %v3635, 1.442695
        %v3666 = vpow.pop %v3665
        %v3667 = vmul.f32 %v3636, 1.442695
        %v3668 = vpow.pop %v3667
        %3669 = vadd.xlane.f32.xlu0 %v3638
        %v3670 = vpop.xlane.xlu0 %3669
        %3671 = vadd.xlane.f32.xlu0 %v3640
        %v3672 = vpop.xlane.xlu0 %3671
        %3673 = vadd.xlane.f32.xlu0 %v3642
        %v3674 = vpop.xlane.xlu0 %3673
        %3675 = vadd.xlane.f32.xlu0 %v3644
        %v3676 = vpop.xlane.xlu0 %3675
        %3677 = vadd.xlane.f32.xlu0 %v3646
        %v3678 = vpop.xlane.xlu0 %3677
        %3679 = vadd.xlane.f32.xlu0 %v3648
        %v3680 = vpop.xlane.xlu0 %3679
        %3681 = vadd.xlane.f32.xlu0 %v3650
        %v3682 = vpop.xlane.xlu0 %3681
        %3683 = vadd.xlane.f32.xlu0 %v3652
        %v3684 = vpop.xlane.xlu0 %3683
        %3685 = vadd.xlane.f32.xlu0 %v3654
        %v3686 = vpop.xlane.xlu0 %3685
        %3687 = vadd.xlane.f32.xlu0 %v3656
        %v3688 = vpop.xlane.xlu0 %3687
        %3689 = vadd.xlane.f32.xlu0 %v3658
        %v3690 = vpop.xlane.xlu0 %3689
        %3691 = vadd.xlane.f32.xlu0 %v3660
        %v3692 = vpop.xlane.xlu0 %3691
        %3693 = vadd.xlane.f32.xlu0 %v3662
        %v3694 = vpop.xlane.xlu0 %3693
        %3695 = vadd.xlane.f32.xlu0 %v3664
        %v3696 = vpop.xlane.xlu0 %3695
        %3697 = vadd.xlane.f32.xlu0 %v3666
        %v3698 = vpop.xlane.xlu0 %3697
        %3699 = vadd.xlane.f32.xlu0 %v3668
        %v3700 = vpop.xlane.xlu0 %3699
        %v3701 = vrcp.pop %v3670
        %v3702 = vmul.f32 %v3638, %v3701
        %v3703 = vrcp.pop %v3672
        %v3704 = vmul.f32 %v3640, %v3703
        %v3705 = vrcp.pop %v3674
        %v3706 = vmul.f32 %v3642, %v3705
        %v3707 = vrcp.pop %v3676
        %v3708 = vmul.f32 %v3644, %v3707
        %v3709 = vrcp.pop %v3678
        %v3710 = vmul.f32 %v3646, %v3709
        %v3711 = vrcp.pop %v3680
        %v3712 = vmul.f32 %v3648, %v3711
        %v3713 = vrcp.pop %v3682
        %v3714 = vmul.f32 %v3650, %v3713
        %v3715 = vrcp.pop %v3684
        %v3716 = vmul.f32 %v3652, %v3715
        %v3717 = vrcp.pop %v3686
        %v3718 = vmul.f32 %v3654, %v3717
        %v3719 = vrcp.pop %v3688
        %v3720 = vmul.f32 %v3656, %v3719
        %v3721 = vrcp.pop %v3690
        %v3722 = vmul.f32 %v3658, %v3721
        %v3723 = vrcp.pop %v3692
        %v3724 = vmul.f32 %v3660, %v3723
        %v3725 = vrcp.pop %v3694
        %v3726 = vmul.f32 %v3662, %v3725
        %v3727 = vrcp.pop %v3696
        %v3728 = vmul.f32 %v3664, %v3727
        %v3729 = vrcp.pop %v3698
        %v3730 = vmul.f32 %v3666, %v3729
        %v3731 = vrcp.pop %v3700
        %v3732 = vmul.f32 %v3668, %v3731
        %s3733 = scalar_lea.vmem %s691, 384 [#allocation15]
        %3734 = vst [vmem:[%s3733] sm:$0xff] %v3702
        %3735 = vst [vmem:[%s3733 + $0x8] sm:$0xff] %v3704
        %3736 = vst [vmem:[%s3733 + $0x10] sm:$0xff] %v3706
        %3737 = vst [vmem:[%s3733 + $0x18] sm:$0xff] %v3708
        %3738 = vst [vmem:[%s3733 + $0x20] sm:$0xff] %v3710
        %3739 = vst [vmem:[%s3733 + $0x28] sm:$0xff] %v3712
        %3740 = vst [vmem:[%s3733 + $0x30] sm:$0xff] %v3714
        %3741 = vst [vmem:[%s3733 + $0x38] sm:$0xff] %v3716
        %3742 = vst [vmem:[%s3733 + $0x40] sm:$0xff] %v3718
        %3743 = vst [vmem:[%s3733 + $0x48] sm:$0xff] %v3720
        %3744 = vst [vmem:[%s3733 + $0x50] sm:$0xff] %v3722
        %3745 = vst [vmem:[%s3733 + $0x58] sm:$0xff] %v3724
        %3746 = vst [vmem:[%s3733 + $0x60] sm:$0xff] %v3726
        %3747 = vst [vmem:[%s3733 + $0x68] sm:$0xff] %v3728
        %3748 = vst [vmem:[%s3733 + $0x70] sm:$0xff] %v3730
        %3749 = vst [vmem:[%s3733 + $0x78] sm:$0xff] %v3732
        %3750 = vrot.lane.b32.xlu0 %v1357, 32
        %v3751 = vpop.permute.xlu0 %3750
        %3752 = vrot.lane.b32.xlu0 %v1362, 32
        %v3753 = vpop.permute.xlu0 %3752
        %3754 = vrot.lane.b32.xlu0 %v1367, 32
        %v3755 = vpop.permute.xlu0 %3754
        %3756 = vrot.lane.b32.xlu0 %v1372, 32
        %v3757 = vpop.permute.xlu0 %3756
        %3758 = vrot.lane.b32.xlu0 %v1377, 32
        %v3759 = vpop.permute.xlu0 %3758
        %3760 = vrot.lane.b32.xlu0 %v1382, 32
        %v3761 = vpop.permute.xlu0 %3760
        %3762 = vrot.lane.b32.xlu0 %v1387, 32
        %v3763 = vpop.permute.xlu0 %3762
        %3764 = vrot.lane.b32.xlu0 %v1392, 32
        %v3765 = vpop.permute.xlu0 %3764
        %3766 = vrot.lane.b32.xlu0 %v1397, 32
        %v3767 = vpop.permute.xlu0 %3766
        %3768 = vrot.lane.b32.xlu0 %v1402, 32
        %v3769 = vpop.permute.xlu0 %3768
        %3770 = vrot.lane.b32.xlu0 %v1407, 32
        %v3771 = vpop.permute.xlu0 %3770
        %3772 = vrot.lane.b32.xlu0 %v1412, 32
        %v3773 = vpop.permute.xlu0 %3772
        %3774 = vrot.lane.b32.xlu0 %v1417, 32
        %v3775 = vpop.permute.xlu0 %3774
        %3776 = vrot.lane.b32.xlu0 %v1422, 32
        %v3777 = vpop.permute.xlu0 %3776
        %3778 = vrot.lane.b32.xlu0 %v1427, 32
        %v3779 = vpop.permute.xlu0 %3778
        %3780 = vrot.lane.b32.xlu0 %v1432, 32
        %v3781 = vpop.permute.xlu0 %3780
        %3798 = vmatprep.subr.mxu0 0.0
        %3799 = vmatpush1.msra.mxu0 %v3751
        %3800 = vmatprep.subr.mxu0 0.0
        %3801 = vmatpush1.msra.mxu0 %v3753
        %3802 = vmatprep.subr.mxu0 0.0
        %3803 = vmatpush1.msra.mxu0 %v3755
        %3804 = vmatprep.subr.mxu0 0.0
        %3805 = vmatpush1.msra.mxu0 %v3757
        %3806 = vmatprep.subr.mxu0 0.0
        %3807 = vmatpush1.msra.mxu0 %v3759
        %3808 = vmatprep.subr.mxu0 0.0
        %3809 = vmatpush1.msra.mxu0 %v3761
        %3810 = vmatprep.subr.mxu0 0.0
        %3811 = vmatpush1.msra.mxu0 %v3763
        %3812 = vmatprep.subr.mxu0 0.0
        %3813 = vmatpush1.msra.mxu0 %v3765
        %3814 = vmatprep.subr.mxu0 0.0
        %3815 = vmatpush1.msra.mxu0 %v3767
        %3816 = vmatprep.subr.mxu0 0.0
        %3817 = vmatpush1.msra.mxu0 %v3769
        %3818 = vmatprep.subr.mxu0 0.0
        %3819 = vmatpush1.msra.mxu0 %v3771
        %3820 = vmatprep.subr.mxu0 0.0
        %3821 = vmatpush1.msra.mxu0 %v3773
        %3822 = vmatprep.subr.mxu0 0.0
        %3823 = vmatpush1.msra.mxu0 %v3775
        %3824 = vmatprep.subr.mxu0 0.0
        %3825 = vmatpush1.msra.mxu0 %v3777
        %3826 = vmatprep.subr.mxu0 0.0
        %3827 = vmatpush1.msra.mxu0 %v3779
        %3828 = vmatprep.subr.mxu0 0.0
        %3829 = vmatpush1.msra.mxu0 %v3781
        %3830 = vmatprep.subr.mxu0 0.0
        %3831 = vmatpush1.msra.mxu0 0.0
        %3832 = vmatprep.subr.mxu0 0.0
        %3833 = vmatpush1.msra.mxu0 0.0
        %3834 = vmatprep.subr.mxu0 0.0
        %3835 = vmatpush1.msra.mxu0 0.0
        %3836 = vmatprep.subr.mxu0 0.0
        %3837 = vmatpush1.msra.mxu0 0.0
        %3838 = vmatprep.subr.mxu0 0.0
        %3839 = vmatpush1.msra.mxu0 0.0
        %3840 = vmatprep.subr.mxu0 0.0
        %3841 = vmatpush1.msra.mxu0 0.0
        %3842 = vmatprep.subr.mxu0 0.0
        %3843 = vmatpush1.msra.mxu0 0.0
        %3844 = vmatprep.subr.mxu0 0.0
        %3845 = vmatpush1.msra.mxu0 0.0
        %3846 = vmatprep.subr.mxu0 0.0
        %3847 = vmatpush1.msra.mxu0 0.0
        %3848 = vmatprep.subr.mxu0 0.0
        %3849 = vmatpush1.msra.mxu0 0.0
        %3850 = vmatprep.subr.mxu0 0.0
        %3851 = vmatpush1.msra.mxu0 0.0
        %3852 = vmatprep.subr.mxu0 0.0
        %3853 = vmatpush1.msra.mxu0 0.0
        %3854 = vmatprep.subr.mxu0 0.0
        %3855 = vmatpush1.msra.mxu0 0.0
        %3856 = vmatprep.subr.mxu0 0.0
        %3857 = vmatpush1.msra.mxu0 0.0
        %3858 = vmatprep.subr.mxu0 0.0
        %3859 = vmatpush1.msra.mxu0 0.0
        %3860 = vmatprep.subr.mxu0 0.0
        %3861 = vmatpush1.msra.mxu0 0.0
        %3862 = vmatprep.mubr.f32.mxu0 0.0
        %3863 = vmatmul.mubr.f32.gmra.mrb[0].mxu0 %v3702
        %v3864 = vpop.f32.mrb[0].mxu0
        %v3865 = vadd.f32 0.0, %v3864
        %v3866 = vpop.f32.mrb[0].mxu0
        %3867 = vmatprep.mubr.f32.mxu0 0.0
        %3868 = vmatmul.mubr.f32.gmra.mrb[0].mxu0 %v3704
        %v3869 = vpop.f32.mrb[0].mxu0
        %v3870 = vadd.f32 0.0, %v3869
        %v3871 = vpop.f32.mrb[0].mxu0
        %3872 = vmatprep.mubr.f32.mxu0 0.0
        %3873 = vmatmul.mubr.f32.gmra.mrb[0].mxu0 %v3706
        %v3874 = vpop.f32.mrb[0].mxu0
        %v3875 = vadd.f32 0.0, %v3874
        %v3876 = vpop.f32.mrb[0].mxu0
        %3877 = vmatprep.mubr.f32.mxu0 0.0
        %3878 = vmatmul.mubr.f32.gmra.mrb[0].mxu0 %v3708
        %v3879 = vpop.f32.mrb[0].mxu0
        %v3880 = vadd.f32 0.0, %v3879
        %v3881 = vpop.f32.mrb[0].mxu0
        %3882 = vmatprep.mubr.f32.mxu0 0.0
        %3883 = vmatmul.mubr.f32.gmra.mrb[0].mxu0 %v3710
        %v3884 = vpop.f32.mrb[0].mxu0
        %v3885 = vadd.f32 0.0, %v3884
        %v3886 = vpop.f32.mrb[0].mxu0
        %3887 = vmatprep.mubr.f32.mxu0 0.0
        %3888 = vmatmul.mubr.f32.gmra.mrb[0].mxu0 %v3712
        %v3889 = vpop.f32.mrb[0].mxu0
        %v3890 = vadd.f32 0.0, %v3889
        %v3891 = vpop.f32.mrb[0].mxu0
        %3892 = vmatprep.mubr.f32.mxu0 0.0
        %3893 = vmatmul.mubr.f32.gmra.mrb[0].mxu0 %v3714
        %v3894 = vpop.f32.mrb[0].mxu0
        %v3895 = vadd.f32 0.0, %v3894
        %v3896 = vpop.f32.mrb[0].mxu0
        %3897 = vmatprep.mubr.f32.mxu0 0.0
        %3898 = vmatmul.mubr.f32.gmra.mrb[0].mxu0 %v3716
        %v3899 = vpop.f32.mrb[0].mxu0
        %v3900 = vadd.f32 0.0, %v3899
        %v3901 = vpop.f32.mrb[0].mxu0
        %3902 = vmatprep.mubr.f32.mxu0 0.0
        %3903 = vmatmul.mubr.f32.gmra.mrb[0].mxu0 %v3718
        %v3904 = vpop.f32.mrb[0].mxu0
        %v3905 = vadd.f32 0.0, %v3904
        %v3906 = vpop.f32.mrb[0].mxu0
        %3907 = vmatprep.mubr.f32.mxu0 0.0
        %3908 = vmatmul.mubr.f32.gmra.mrb[0].mxu0 %v3720
        %v3909 = vpop.f32.mrb[0].mxu0
        %v3910 = vadd.f32 0.0, %v3909
        %v3911 = vpop.f32.mrb[0].mxu0
        %3912 = vmatprep.mubr.f32.mxu0 0.0
        %3913 = vmatmul.mubr.f32.gmra.mrb[0].mxu0 %v3722
        %v3914 = vpop.f32.mrb[0].mxu0
        %v3915 = vadd.f32 0.0, %v3914
        %v3916 = vpop.f32.mrb[0].mxu0
        %3917 = vmatprep.mubr.f32.mxu0 0.0
        %3918 = vmatmul.mubr.f32.gmra.mrb[0].mxu0 %v3724
        %v3919 = vpop.f32.mrb[0].mxu0
        %v3920 = vadd.f32 0.0, %v3919
        %v3921 = vpop.f32.mrb[0].mxu0
        %3922 = vmatprep.mubr.f32.mxu0 0.0
        %3923 = vmatmul.mubr.f32.gmra.mrb[0].mxu0 %v3726
        %v3924 = vpop.f32.mrb[0].mxu0
        %v3925 = vadd.f32 0.0, %v3924
        %v3926 = vpop.f32.mrb[0].mxu0
        %3927 = vmatprep.mubr.f32.mxu0 0.0
        %3928 = vmatmul.mubr.f32.gmra.mrb[0].mxu0 %v3728
        %v3929 = vpop.f32.mrb[0].mxu0
        %v3930 = vadd.f32 0.0, %v3929
        %v3931 = vpop.f32.mrb[0].mxu0
        %3932 = vmatprep.mubr.f32.mxu0 0.0
        %3933 = vmatmul.mubr.f32.gmra.mrb[0].mxu0 %v3730
        %v3934 = vpop.f32.mrb[0].mxu0
        %v3935 = vadd.f32 0.0, %v3934
        %v3936 = vpop.f32.mrb[0].mxu0
        %3937 = vmatprep.mubr.f32.mxu0 0.0
        %3938 = vmatmul.mubr.f32.gmra.mrb[0].mxu0 %v3732
        %v3939 = vpop.f32.mrb[0].mxu0
        %v3940 = vadd.f32 0.0, %v3939
        %v3941 = vpop.f32.mrb[0].mxu0
        %3942 = vdwg.mxu0
        %3959 = vrot.lane.b32.xlu0 %v2579, 32
        %v3960 = vpop.permute.xlu0 %3959
        %3961 = vrot.lane.b32.xlu0 %v2584, 32
        %v3962 = vpop.permute.xlu0 %3961
        %3963 = vrot.lane.b32.xlu0 %v2589, 32
        %v3964 = vpop.permute.xlu0 %3963
        %3965 = vrot.lane.b32.xlu0 %v2594, 32
        %v3966 = vpop.permute.xlu0 %3965
        %3967 = vrot.lane.b32.xlu0 %v2599, 32
        %v3968 = vpop.permute.xlu0 %3967
        %3969 = vrot.lane.b32.xlu0 %v2604, 32
        %v3970 = vpop.permute.xlu0 %3969
        %3971 = vrot.lane.b32.xlu0 %v2609, 32
        %v3972 = vpop.permute.xlu0 %3971
        %3973 = vrot.lane.b32.xlu0 %v2614, 32
        %v3974 = vpop.permute.xlu0 %3973
        %3975 = vrot.lane.b32.xlu0 %v2619, 32
        %v3976 = vpop.permute.xlu0 %3975
        %3977 = vrot.lane.b32.xlu0 %v2624, 32
        %v3978 = vpop.permute.xlu0 %3977
        %3979 = vrot.lane.b32.xlu0 %v2629, 32
        %v3980 = vpop.permute.xlu0 %3979
        %3981 = vrot.lane.b32.xlu0 %v2634, 32
        %v3982 = vpop.permute.xlu0 %3981
        %3983 = vrot.lane.b32.xlu0 %v2639, 32
        %v3984 = vpop.permute.xlu0 %3983
        %3985 = vrot.lane.b32.xlu0 %v2644, 32
        %v3986 = vpop.permute.xlu0 %3985
        %3987 = vrot.lane.b32.xlu0 %v2649, 32
        %v3988 = vpop.permute.xlu0 %3987
        %3989 = vrot.lane.b32.xlu0 %v2654, 32
        %v3990 = vpop.permute.xlu0 %3989
        %4023 = vrot.lane.b32.xlu0 %v3222, 64
        %v4024 = vpop.permute.xlu0 %4023
        %4025 = vrot.lane.b32.xlu0 %v3227, 64
        %v4026 = vpop.permute.xlu0 %4025
        %4027 = vrot.lane.b32.xlu0 %v3232, 64
        %v4028 = vpop.permute.xlu0 %4027
        %4029 = vrot.lane.b32.xlu0 %v3237, 64
        %v4030 = vpop.permute.xlu0 %4029
        %4031 = vrot.lane.b32.xlu0 %v3242, 64
        %v4032 = vpop.permute.xlu0 %4031
        %4033 = vrot.lane.b32.xlu0 %v3247, 64
        %v4034 = vpop.permute.xlu0 %4033
        %4035 = vrot.lane.b32.xlu0 %v3252, 64
        %v4036 = vpop.permute.xlu0 %4035
        %4037 = vrot.lane.b32.xlu0 %v3257, 64
        %v4038 = vpop.permute.xlu0 %4037
        %4039 = vrot.lane.b32.xlu0 %v3262, 64
        %v4040 = vpop.permute.xlu0 %4039
        %4041 = vrot.lane.b32.xlu0 %v3267, 64
        %v4042 = vpop.permute.xlu0 %4041
        %4043 = vrot.lane.b32.xlu0 %v3272, 64
        %v4044 = vpop.permute.xlu0 %4043
        %4045 = vrot.lane.b32.xlu0 %v3277, 64
        %v4046 = vpop.permute.xlu0 %4045
        %4047 = vrot.lane.b32.xlu0 %v3282, 64
        %v4048 = vpop.permute.xlu0 %4047
        %4049 = vrot.lane.b32.xlu0 %v3287, 64
        %v4050 = vpop.permute.xlu0 %4049
        %4051 = vrot.lane.b32.xlu0 %v3292, 64
        %v4052 = vpop.permute.xlu0 %4051
        %4053 = vrot.lane.b32.xlu0 %v3297, 64
        %v4054 = vpop.permute.xlu0 %4053
        %4087 = vrot.lane.b32.xlu0 %v3865, 96
        %v4088 = vpop.permute.xlu0 %4087
        %4089 = vrot.lane.b32.xlu0 %v3870, 96
        %v4090 = vpop.permute.xlu0 %4089
        %4091 = vrot.lane.b32.xlu0 %v3875, 96
        %v4092 = vpop.permute.xlu0 %4091
        %4093 = vrot.lane.b32.xlu0 %v3880, 96
        %v4094 = vpop.permute.xlu0 %4093
        %4095 = vrot.lane.b32.xlu0 %v3885, 96
        %v4096 = vpop.permute.xlu0 %4095
        %4097 = vrot.lane.b32.xlu0 %v3890, 96
        %v4098 = vpop.permute.xlu0 %4097
        %4099 = vrot.lane.b32.xlu0 %v3895, 96
        %v4100 = vpop.permute.xlu0 %4099
        %4101 = vrot.lane.b32.xlu0 %v3900, 96
        %v4102 = vpop.permute.xlu0 %4101
        %4103 = vrot.lane.b32.xlu0 %v3905, 96
        %v4104 = vpop.permute.xlu0 %4103
        %4105 = vrot.lane.b32.xlu0 %v3910, 96
        %v4106 = vpop.permute.xlu0 %4105
        %4107 = vrot.lane.b32.xlu0 %v3915, 96
        %v4108 = vpop.permute.xlu0 %4107
        %4109 = vrot.lane.b32.xlu0 %v3920, 96
        %v4110 = vpop.permute.xlu0 %4109
        %4111 = vrot.lane.b32.xlu0 %v3925, 96
        %v4112 = vpop.permute.xlu0 %4111
        %4113 = vrot.lane.b32.xlu0 %v3930, 96
        %v4114 = vpop.permute.xlu0 %4113
        %4115 = vrot.lane.b32.xlu0 %v3935, 96
        %v4116 = vpop.permute.xlu0 %4115
        %4117 = vrot.lane.b32.xlu0 %v3940, 96
        %v4118 = vpop.permute.xlu0 %4117
        %v4135 = vsel %vm1435, %v1920, %v3960
        %v4136 = vsel %vm1435, %v1925, %v3962
        %v4137 = vsel %vm1435, %v1930, %v3964
        %v4138 = vsel %vm1435, %v1935, %v3966
        %v4139 = vsel %vm1435, %v1940, %v3968
        %v4140 = vsel %vm1435, %v1945, %v3970
        %v4141 = vsel %vm1435, %v1950, %v3972
        %v4142 = vsel %vm1435, %v1955, %v3974
        %v4143 = vsel %vm1435, %v1960, %v3976
        %v4144 = vsel %vm1435, %v1965, %v3978
        %v4145 = vsel %vm1435, %v1970, %v3980
        %v4146 = vsel %vm1435, %v1975, %v3982
        %v4147 = vsel %vm1435, %v1980, %v3984
        %v4148 = vsel %vm1435, %v1985, %v3986
        %v4149 = vsel %vm1435, %v1990, %v3988
        %v4150 = vsel %vm1435, %v1995, %v3990
        %vm4151 = vcmask 523264
        %v4152 = vsel %vm4151, %v4135, %v4024
        %v4153 = vsel %vm4151, %v4136, %v4026
        %v4154 = vsel %vm4151, %v4137, %v4028
        %v4155 = vsel %vm4151, %v4138, %v4030
        %v4156 = vsel %vm4151, %v4139, %v4032
        %v4157 = vsel %vm4151, %v4140, %v4034
        %v4158 = vsel %vm4151, %v4141, %v4036
        %v4159 = vsel %vm4151, %v4142, %v4038
        %v4160 = vsel %vm4151, %v4143, %v4040
        %v4161 = vsel %vm4151, %v4144, %v4042
        %v4162 = vsel %vm4151, %v4145, %v4044
        %v4163 = vsel %vm4151, %v4146, %v4046
        %v4164 = vsel %vm4151, %v4147, %v4048
        %v4165 = vsel %vm4151, %v4148, %v4050
        %v4166 = vsel %vm4151, %v4149, %v4052
        %v4167 = vsel %vm4151, %v4150, %v4054
        %vm4168 = vcmask 785408
        %v4169 = vsel %vm4168, %v4152, %v4088
        %v4170 = vsel %vm4168, %v4153, %v4090
        %v4171 = vsel %vm4168, %v4154, %v4092
        %v4172 = vsel %vm4168, %v4155, %v4094
        %v4173 = vsel %vm4168, %v4156, %v4096
        %v4174 = vsel %vm4168, %v4157, %v4098
        %v4175 = vsel %vm4168, %v4158, %v4100
        %v4176 = vsel %vm4168, %v4159, %v4102
        %v4177 = vsel %vm4168, %v4160, %v4104
        %v4178 = vsel %vm4168, %v4161, %v4106
        %v4179 = vsel %vm4168, %v4162, %v4108
        %v4180 = vsel %vm4168, %v4163, %v4110
        %v4181 = vsel %vm4168, %v4164, %v4112
        %v4182 = vsel %vm4168, %v4165, %v4114
        %v4183 = vsel %vm4168, %v4166, %v4116
        %v4184 = vsel %vm4168, %v4167, %v4118
        %v4185 = vld [vmem:[#allocation10] sm:$0xff]
        %v4186 = vld [vmem:[#allocation10 + $0x8] sm:$0xff]
        %v4187 = vld [vmem:[#allocation10 + $0x10] sm:$0xff]
        %v4188 = vld [vmem:[#allocation10 + $0x18] sm:$0xff]
        %v4189 = vld [vmem:[#allocation10 + $0x20] sm:$0xff]
        %v4190 = vld [vmem:[#allocation10 + $0x28] sm:$0xff]
        %v4191 = vld [vmem:[#allocation10 + $0x30] sm:$0xff]
        %v4192 = vld [vmem:[#allocation10 + $0x38] sm:$0xff]
        %v4193 = vld [vmem:[#allocation10 + $0x40] sm:$0xff]
        %v4194 = vld [vmem:[#allocation10 + $0x48] sm:$0xff]
        %v4195 = vld [vmem:[#allocation10 + $0x50] sm:$0xff]
        %v4196 = vld [vmem:[#allocation10 + $0x58] sm:$0xff]
        %v4197 = vld [vmem:[#allocation10 + $0x60] sm:$0xff]
        %v4198 = vld [vmem:[#allocation10 + $0x68] sm:$0xff]
        %v4199 = vld [vmem:[#allocation10 + $0x70] sm:$0xff]
        %v4200 = vld [vmem:[#allocation10 + $0x78] sm:$0xff]
        %v4201 = vld [vmem:[%s10] sm:$0x1]
        %v4203 = vlaneseq
        %v4204 = vshrl.u32 %v4203, 7
        %v4205 = vsub.s32 0, %v4204
        %v4206 = vrot.slane %v4201, %v4205
        %4208 = vmatprep.subr.mxu0 0.0
        %4209 = vmatpush1.msra.mxu0 %v4185
        %4210 = vmatprep.subr.mxu0 0.0
        %4211 = vmatpush1.msra.mxu0 %v4186
        %4212 = vmatprep.subr.mxu0 0.0
        %4213 = vmatpush1.msra.mxu0 %v4187
        %4214 = vmatprep.subr.mxu0 0.0
        %4215 = vmatpush1.msra.mxu0 %v4188
        %4216 = vmatprep.subr.mxu0 0.0
        %4217 = vmatpush1.msra.mxu0 %v4189
        %4218 = vmatprep.subr.mxu0 0.0
        %4219 = vmatpush1.msra.mxu0 %v4190
        %4220 = vmatprep.subr.mxu0 0.0
        %4221 = vmatpush1.msra.mxu0 %v4191
        %4222 = vmatprep.subr.mxu0 0.0
        %4223 = vmatpush1.msra.mxu0 %v4192
        %4224 = vmatprep.subr.mxu0 0.0
        %4225 = vmatpush1.msra.mxu0 %v4193
        %4226 = vmatprep.subr.mxu0 0.0
        %4227 = vmatpush1.msra.mxu0 %v4194
        %4228 = vmatprep.subr.mxu0 0.0
        %4229 = vmatpush1.msra.mxu0 %v4195
        %4230 = vmatprep.subr.mxu0 0.0
        %4231 = vmatpush1.msra.mxu0 %v4196
        %4232 = vmatprep.subr.mxu0 0.0
        %4233 = vmatpush1.msra.mxu0 %v4197
        %4234 = vmatprep.subr.mxu0 0.0
        %4235 = vmatpush1.msra.mxu0 %v4198
        %4236 = vmatprep.subr.mxu0 0.0
        %4237 = vmatpush1.msra.mxu0 %v4199
        %4238 = vmatprep.subr.mxu0 0.0
        %4239 = vmatpush1.msra.mxu0 %v4200
        %4240 = vmatprep.subr.mxu0 0.0
        %4241 = vmatpush1.msra.mxu0 0.0
        %4242 = vmatprep.subr.mxu0 0.0
        %4243 = vmatpush1.msra.mxu0 0.0
        %4244 = vmatprep.subr.mxu0 0.0
        %4245 = vmatpush1.msra.mxu0 0.0
        %4246 = vmatprep.subr.mxu0 0.0
        %4247 = vmatpush1.msra.mxu0 0.0
        %4248 = vmatprep.subr.mxu0 0.0
        %4249 = vmatpush1.msra.mxu0 0.0
        %4250 = vmatprep.subr.mxu0 0.0
        %4251 = vmatpush1.msra.mxu0 0.0
        %4252 = vmatprep.subr.mxu0 0.0
        %4253 = vmatpush1.msra.mxu0 0.0
        %4254 = vmatprep.subr.mxu0 0.0
        %4255 = vmatpush1.msra.mxu0 0.0
        %4256 = vmatprep.subr.mxu0 0.0
        %4257 = vmatpush1.msra.mxu0 0.0
        %4258 = vmatprep.subr.mxu0 0.0
        %4259 = vmatpush1.msra.mxu0 0.0
        %4260 = vmatprep.subr.mxu0 0.0
        %4261 = vmatpush1.msra.mxu0 0.0
        %4262 = vmatprep.subr.mxu0 0.0
        %4263 = vmatpush1.msra.mxu0 0.0
        %4264 = vmatprep.subr.mxu0 0.0
        %4265 = vmatpush1.msra.mxu0 0.0
        %4266 = vmatprep.subr.mxu0 0.0
        %4267 = vmatpush1.msra.mxu0 0.0
        %4268 = vmatprep.subr.mxu0 0.0
        %4269 = vmatpush1.msra.mxu0 0.0
        %4270 = vmatprep.subr.mxu0 0.0
        %4271 = vmatpush1.msra.mxu0 0.0
        %4272 = vmatprep.mubr.f32.mxu0 0.0
        %4273 = vmatmul.mubr.f32.gmra.mrb[0].mxu0 %v4169
        %v4274 = vpop.f32.mrb[0].mxu0
        %v4275 = vadd.f32 %v4206, %v4274
        %v4276 = vpop.f32.mrb[0].mxu0
        %4277 = vmatprep.mubr.f32.mxu0 0.0
        %4278 = vmatmul.mubr.f32.gmra.mrb[0].mxu0 %v4170
        %v4279 = vpop.f32.mrb[0].mxu0
        %v4280 = vadd.f32 %v4206, %v4279
        %v4281 = vpop.f32.mrb[0].mxu0
        %4282 = vmatprep.mubr.f32.mxu0 0.0
        %4283 = vmatmul.mubr.f32.gmra.mrb[0].mxu0 %v4171
        %v4284 = vpop.f32.mrb[0].mxu0
        %v4285 = vadd.f32 %v4206, %v4284
        %v4286 = vpop.f32.mrb[0].mxu0
        %4287 = vmatprep.mubr.f32.mxu0 0.0
        %4288 = vmatmul.mubr.f32.gmra.mrb[0].mxu0 %v4172
        %v4289 = vpop.f32.mrb[0].mxu0
        %v4290 = vadd.f32 %v4206, %v4289
        %v4291 = vpop.f32.mrb[0].mxu0
        %4292 = vmatprep.mubr.f32.mxu0 0.0
        %4293 = vmatmul.mubr.f32.gmra.mrb[0].mxu0 %v4173
        %v4294 = vpop.f32.mrb[0].mxu0
        %v4295 = vadd.f32 %v4206, %v4294
        %v4296 = vpop.f32.mrb[0].mxu0
        %4297 = vmatprep.mubr.f32.mxu0 0.0
        %4298 = vmatmul.mubr.f32.gmra.mrb[0].mxu0 %v4174
        %v4299 = vpop.f32.mrb[0].mxu0
        %v4300 = vadd.f32 %v4206, %v4299
        %v4301 = vpop.f32.mrb[0].mxu0
        %4302 = vmatprep.mubr.f32.mxu0 0.0
        %4303 = vmatmul.mubr.f32.gmra.mrb[0].mxu0 %v4175
        %v4304 = vpop.f32.mrb[0].mxu0
        %v4305 = vadd.f32 %v4206, %v4304
        %v4306 = vpop.f32.mrb[0].mxu0
        %4307 = vmatprep.mubr.f32.mxu0 0.0
        %4308 = vmatmul.mubr.f32.gmra.mrb[0].mxu0 %v4176
        %v4309 = vpop.f32.mrb[0].mxu0
        %v4310 = vadd.f32 %v4206, %v4309
        %v4311 = vpop.f32.mrb[0].mxu0
        %4312 = vmatprep.mubr.f32.mxu0 0.0
        %4313 = vmatmul.mubr.f32.gmra.mrb[0].mxu0 %v4177
        %v4314 = vpop.f32.mrb[0].mxu0
        %v4315 = vadd.f32 %v4206, %v4314
        %v4316 = vpop.f32.mrb[0].mxu0
        %4317 = vmatprep.mubr.f32.mxu0 0.0
        %4318 = vmatmul.mubr.f32.gmra.mrb[0].mxu0 %v4178
        %v4319 = vpop.f32.mrb[0].mxu0
        %v4320 = vadd.f32 %v4206, %v4319
        %v4321 = vpop.f32.mrb[0].mxu0
        %4322 = vmatprep.mubr.f32.mxu0 0.0
        %4323 = vmatmul.mubr.f32.gmra.mrb[0].mxu0 %v4179
        %v4324 = vpop.f32.mrb[0].mxu0
        %v4325 = vadd.f32 %v4206, %v4324
        %v4326 = vpop.f32.mrb[0].mxu0
        %4327 = vmatprep.mubr.f32.mxu0 0.0
        %4328 = vmatmul.mubr.f32.gmra.mrb[0].mxu0 %v4180
        %v4329 = vpop.f32.mrb[0].mxu0
        %v4330 = vadd.f32 %v4206, %v4329
        %v4331 = vpop.f32.mrb[0].mxu0
        %4332 = vmatprep.mubr.f32.mxu0 0.0
        %4333 = vmatmul.mubr.f32.gmra.mrb[0].mxu0 %v4181
        %v4334 = vpop.f32.mrb[0].mxu0
        %v4335 = vadd.f32 %v4206, %v4334
        %v4336 = vpop.f32.mrb[0].mxu0
        %4337 = vmatprep.mubr.f32.mxu0 0.0
        %4338 = vmatmul.mubr.f32.gmra.mrb[0].mxu0 %v4182
        %v4339 = vpop.f32.mrb[0].mxu0
        %v4340 = vadd.f32 %v4206, %v4339
        %v4341 = vpop.f32.mrb[0].mxu0
        %4342 = vmatprep.mubr.f32.mxu0 0.0
        %4343 = vmatmul.mubr.f32.gmra.mrb[0].mxu0 %v4183
        %v4344 = vpop.f32.mrb[0].mxu0
        %v4345 = vadd.f32 %v4206, %v4344
        %v4346 = vpop.f32.mrb[0].mxu0
        %4347 = vmatprep.mubr.f32.mxu0 0.0
        %4348 = vmatmul.mubr.f32.gmra.mrb[0].mxu0 %v4184
        %v4349 = vpop.f32.mrb[0].mxu0
        %v4350 = vadd.f32 %v4206, %v4349
        %v4351 = vpop.f32.mrb[0].mxu0
        %4352 = vdwg.mxu0
        %v4353 = vadd.f32 %v692, %v4275
        %v4354 = vadd.f32 %v693, %v4280
        %v4355 = vadd.f32 %v694, %v4285
        %v4356 = vadd.f32 %v695, %v4290
        %v4357 = vadd.f32 %v696, %v4295
        %v4358 = vadd.f32 %v697, %v4300
        %v4359 = vadd.f32 %v698, %v4305
        %v4360 = vadd.f32 %v699, %v4310
        %v4361 = vadd.f32 %v700, %v4315
        %v4362 = vadd.f32 %v701, %v4320
        %v4363 = vadd.f32 %v702, %v4325
        %v4364 = vadd.f32 %v703, %v4330
        %v4365 = vadd.f32 %v704, %v4335
        %v4366 = vadd.f32 %v705, %v4340
        %v4367 = vadd.f32 %v706, %v4345
        %v4368 = vadd.f32 %v707, %v4350
        %v4369 = vld [vmem:[%s11] sm:$0x1]
        %v4370 = vld [vmem:[%s12] sm:$0x1]
        %4371 = vadd.xlane.f32.xlu0 %v4353
        %v4372 = vpop.xlane.xlu0 %4371
        %4373 = vadd.xlane.f32.xlu0 %v4354
        %v4374 = vpop.xlane.xlu0 %4373
        %4375 = vadd.xlane.f32.xlu0 %v4355
        %v4376 = vpop.xlane.xlu0 %4375
        %4377 = vadd.xlane.f32.xlu0 %v4356
        %v4378 = vpop.xlane.xlu0 %4377
        %4379 = vadd.xlane.f32.xlu0 %v4357
        %v4380 = vpop.xlane.xlu0 %4379
        %4381 = vadd.xlane.f32.xlu0 %v4358
        %v4382 = vpop.xlane.xlu0 %4381
        %4383 = vadd.xlane.f32.xlu0 %v4359
        %v4384 = vpop.xlane.xlu0 %4383
        %4385 = vadd.xlane.f32.xlu0 %v4360
        %v4386 = vpop.xlane.xlu0 %4385
        %4387 = vadd.xlane.f32.xlu0 %v4361
        %v4388 = vpop.xlane.xlu0 %4387
        %4389 = vadd.xlane.f32.xlu0 %v4362
        %v4390 = vpop.xlane.xlu0 %4389
        %4391 = vadd.xlane.f32.xlu0 %v4363
        %v4392 = vpop.xlane.xlu0 %4391
        %4393 = vadd.xlane.f32.xlu0 %v4364
        %v4394 = vpop.xlane.xlu0 %4393
        %4395 = vadd.xlane.f32.xlu0 %v4365
        %v4396 = vpop.xlane.xlu0 %4395
        %4397 = vadd.xlane.f32.xlu0 %v4366
        %v4398 = vpop.xlane.xlu0 %4397
        %4399 = vadd.xlane.f32.xlu0 %v4367
        %v4400 = vpop.xlane.xlu0 %4399
        %4401 = vadd.xlane.f32.xlu0 %v4368
        %v4402 = vpop.xlane.xlu0 %4401
        %v4403 = vmul.f32 %v4372, %v742
        %v4404 = vmul.f32 %v4374, %v742
        %v4405 = vmul.f32 %v4376, %v742
        %v4406 = vmul.f32 %v4378, %v742
        %v4407 = vmul.f32 %v4380, %v742
        %v4408 = vmul.f32 %v4382, %v742
        %v4409 = vmul.f32 %v4384, %v742
        %v4410 = vmul.f32 %v4386, %v742
        %v4411 = vmul.f32 %v4388, %v742
        %v4412 = vmul.f32 %v4390, %v742
        %v4413 = vmul.f32 %v4392, %v742
        %v4414 = vmul.f32 %v4394, %v742
        %v4415 = vmul.f32 %v4396, %v742
        %v4416 = vmul.f32 %v4398, %v742
        %v4417 = vmul.f32 %v4400, %v742
        %v4418 = vmul.f32 %v4402, %v742
        %v4419 = vsub.f32 %v4353, %v4403
        %v4420 = vsub.f32 %v4354, %v4404
        %v4421 = vsub.f32 %v4355, %v4405
        %v4422 = vsub.f32 %v4356, %v4406
        %v4423 = vsub.f32 %v4357, %v4407
        %v4424 = vsub.f32 %v4358, %v4408
        %v4425 = vsub.f32 %v4359, %v4409
        %v4426 = vsub.f32 %v4360, %v4410
        %v4427 = vsub.f32 %v4361, %v4411
        %v4428 = vsub.f32 %v4362, %v4412
        %v4429 = vsub.f32 %v4363, %v4413
        %v4430 = vsub.f32 %v4364, %v4414
        %v4431 = vsub.f32 %v4365, %v4415
        %v4432 = vsub.f32 %v4366, %v4416
        %v4433 = vsub.f32 %v4367, %v4417
        %v4434 = vsub.f32 %v4368, %v4418
        %v4435 = vmul.f32 %v4419, %v4419
        %v4436 = vmul.f32 %v4420, %v4420
        %v4437 = vmul.f32 %v4421, %v4421
        %v4438 = vmul.f32 %v4422, %v4422
        %v4439 = vmul.f32 %v4423, %v4423
        %v4440 = vmul.f32 %v4424, %v4424
        %v4441 = vmul.f32 %v4425, %v4425
        %v4442 = vmul.f32 %v4426, %v4426
        %v4443 = vmul.f32 %v4427, %v4427
        %v4444 = vmul.f32 %v4428, %v4428
        %v4445 = vmul.f32 %v4429, %v4429
        %v4446 = vmul.f32 %v4430, %v4430
        %v4447 = vmul.f32 %v4431, %v4431
        %v4448 = vmul.f32 %v4432, %v4432
        %v4449 = vmul.f32 %v4433, %v4433
        %v4450 = vmul.f32 %v4434, %v4434
        %4451 = vadd.xlane.f32.xlu0 %v4435
        %v4452 = vpop.xlane.xlu0 %4451
        %4453 = vadd.xlane.f32.xlu0 %v4436
        %v4454 = vpop.xlane.xlu0 %4453
        %4455 = vadd.xlane.f32.xlu0 %v4437
        %v4456 = vpop.xlane.xlu0 %4455
        %4457 = vadd.xlane.f32.xlu0 %v4438
        %v4458 = vpop.xlane.xlu0 %4457
        %4459 = vadd.xlane.f32.xlu0 %v4439
        %v4460 = vpop.xlane.xlu0 %4459
        %4461 = vadd.xlane.f32.xlu0 %v4440
        %v4462 = vpop.xlane.xlu0 %4461
        %4463 = vadd.xlane.f32.xlu0 %v4441
        %v4464 = vpop.xlane.xlu0 %4463
        %4465 = vadd.xlane.f32.xlu0 %v4442
        %v4466 = vpop.xlane.xlu0 %4465
        %4467 = vadd.xlane.f32.xlu0 %v4443
        %v4468 = vpop.xlane.xlu0 %4467
        %4469 = vadd.xlane.f32.xlu0 %v4444
        %v4470 = vpop.xlane.xlu0 %4469
        %4471 = vadd.xlane.f32.xlu0 %v4445
        %v4472 = vpop.xlane.xlu0 %4471
        %4473 = vadd.xlane.f32.xlu0 %v4446
        %v4474 = vpop.xlane.xlu0 %4473
        %4475 = vadd.xlane.f32.xlu0 %v4447
        %v4476 = vpop.xlane.xlu0 %4475
        %4477 = vadd.xlane.f32.xlu0 %v4448
        %v4478 = vpop.xlane.xlu0 %4477
        %4479 = vadd.xlane.f32.xlu0 %v4449
        %v4480 = vpop.xlane.xlu0 %4479
        %4481 = vadd.xlane.f32.xlu0 %v4450
        %v4482 = vpop.xlane.xlu0 %4481
        %v4483 = vmul.f32 %v4452, %v742
        %v4484 = vmul.f32 %v4454, %v742
        %v4485 = vmul.f32 %v4456, %v742
        %v4486 = vmul.f32 %v4458, %v742
        %v4487 = vmul.f32 %v4460, %v742
        %v4488 = vmul.f32 %v4462, %v742
        %v4489 = vmul.f32 %v4464, %v742
        %v4490 = vmul.f32 %v4466, %v742
        %v4491 = vmul.f32 %v4468, %v742
        %v4492 = vmul.f32 %v4470, %v742
        %v4493 = vmul.f32 %v4472, %v742
        %v4494 = vmul.f32 %v4474, %v742
        %v4495 = vmul.f32 %v4476, %v742
        %v4496 = vmul.f32 %v4478, %v742
        %v4497 = vmul.f32 %v4480, %v742
        %v4498 = vmul.f32 %v4482, %v742
        %v4499 = vadd.f32 %v4483, 1e-06
        %v4500 = vadd.f32 %v4484, 1e-06
        %v4501 = vadd.f32 %v4485, 1e-06
        %v4502 = vadd.f32 %v4486, 1e-06
        %v4503 = vadd.f32 %v4487, 1e-06
        %v4504 = vadd.f32 %v4488, 1e-06
        %v4505 = vadd.f32 %v4489, 1e-06
        %v4506 = vadd.f32 %v4490, 1e-06
        %v4507 = vadd.f32 %v4491, 1e-06
        %v4508 = vadd.f32 %v4492, 1e-06
        %v4509 = vadd.f32 %v4493, 1e-06
        %v4510 = vadd.f32 %v4494, 1e-06
        %v4511 = vadd.f32 %v4495, 1e-06
        %v4512 = vadd.f32 %v4496, 1e-06
        %v4513 = vadd.f32 %v4497, 1e-06
        %v4514 = vadd.f32 %v4498, 1e-06
        %v4515 = vrsqrt.pop %v4499
        %v4516 = vrsqrt.pop %v4500
        %v4517 = vrsqrt.pop %v4501
        %v4518 = vrsqrt.pop %v4502
        %v4519 = vrsqrt.pop %v4503
        %v4520 = vrsqrt.pop %v4504
        %v4521 = vrsqrt.pop %v4505
        %v4522 = vrsqrt.pop %v4506
        %v4523 = vrsqrt.pop %v4507
        %v4524 = vrsqrt.pop %v4508
        %v4525 = vrsqrt.pop %v4509
        %v4526 = vrsqrt.pop %v4510
        %v4527 = vrsqrt.pop %v4511
        %v4528 = vrsqrt.pop %v4512
        %v4529 = vrsqrt.pop %v4513
        %v4530 = vrsqrt.pop %v4514
        %v4531 = vmul.f32 %v4419, %v4515
        %v4532 = vmul.f32 %v4420, %v4516
        %v4533 = vmul.f32 %v4421, %v4517
        %v4534 = vmul.f32 %v4422, %v4518
        %v4535 = vmul.f32 %v4423, %v4519
        %v4536 = vmul.f32 %v4424, %v4520
        %v4537 = vmul.f32 %v4425, %v4521
        %v4538 = vmul.f32 %v4426, %v4522
        %v4539 = vmul.f32 %v4427, %v4523
        %v4540 = vmul.f32 %v4428, %v4524
        %v4541 = vmul.f32 %v4429, %v4525
        %v4542 = vmul.f32 %v4430, %v4526
        %v4543 = vmul.f32 %v4431, %v4527
        %v4544 = vmul.f32 %v4432, %v4528
        %v4545 = vmul.f32 %v4433, %v4529
        %v4546 = vmul.f32 %v4434, %v4530
        %v4548 = vlaneseq
        %v4549 = vshrl.u32 %v4548, 7
        %v4550 = vsub.s32 0, %v4549
        %v4551 = vrot.slane %v4369, %v4550
        %v4553 = vmul.f32 %v4531, %v4551
        %v4554 = vmul.f32 %v4532, %v4551
        %v4555 = vmul.f32 %v4533, %v4551
        %v4556 = vmul.f32 %v4534, %v4551
        %v4557 = vmul.f32 %v4535, %v4551
        %v4558 = vmul.f32 %v4536, %v4551
        %v4559 = vmul.f32 %v4537, %v4551
        %v4560 = vmul.f32 %v4538, %v4551
        %v4561 = vmul.f32 %v4539, %v4551
        %v4562 = vmul.f32 %v4540, %v4551
        %v4563 = vmul.f32 %v4541, %v4551
        %v4564 = vmul.f32 %v4542, %v4551
        %v4565 = vmul.f32 %v4543, %v4551
        %v4566 = vmul.f32 %v4544, %v4551
        %v4567 = vmul.f32 %v4545, %v4551
        %v4568 = vmul.f32 %v4546, %v4551
        %v4570 = vlaneseq
        %v4571 = vshrl.u32 %v4570, 7
        %v4572 = vsub.s32 0, %v4571
        %v4573 = vrot.slane %v4370, %v4572
        %v4575 = vadd.f32 %v4553, %v4573
        %v4576 = vadd.f32 %v4554, %v4573
        %v4577 = vadd.f32 %v4555, %v4573
        %v4578 = vadd.f32 %v4556, %v4573
        %v4579 = vadd.f32 %v4557, %v4573
        %v4580 = vadd.f32 %v4558, %v4573
        %v4581 = vadd.f32 %v4559, %v4573
        %v4582 = vadd.f32 %v4560, %v4573
        %v4583 = vadd.f32 %v4561, %v4573
        %v4584 = vadd.f32 %v4562, %v4573
        %v4585 = vadd.f32 %v4563, %v4573
        %v4586 = vadd.f32 %v4564, %v4573
        %v4587 = vadd.f32 %v4565, %v4573
        %v4588 = vadd.f32 %v4566, %v4573
        %v4589 = vadd.f32 %v4567, %v4573
        %v4590 = vadd.f32 %v4568, %v4573
        %v4591 = vld [vmem:[#allocation11] sm:$0xff]
        %v4592 = vld [vmem:[#allocation11 + $0x8] sm:$0xff]
        %v4593 = vld [vmem:[#allocation11 + $0x10] sm:$0xff]
        %v4594 = vld [vmem:[#allocation11 + $0x18] sm:$0xff]
        %v4595 = vld [vmem:[#allocation11 + $0x20] sm:$0xff]
        %v4596 = vld [vmem:[#allocation11 + $0x28] sm:$0xff]
        %v4597 = vld [vmem:[#allocation11 + $0x30] sm:$0xff]
        %v4598 = vld [vmem:[#allocation11 + $0x38] sm:$0xff]
        %v4599 = vld [vmem:[#allocation11 + $0x40] sm:$0xff]
        %v4600 = vld [vmem:[#allocation11 + $0x48] sm:$0xff]
        %v4601 = vld [vmem:[#allocation11 + $0x50] sm:$0xff]
        %v4602 = vld [vmem:[#allocation11 + $0x58] sm:$0xff]
        %v4603 = vld [vmem:[#allocation11 + $0x60] sm:$0xff]
        %v4604 = vld [vmem:[#allocation11 + $0x68] sm:$0xff]
        %v4605 = vld [vmem:[#allocation11 + $0x70] sm:$0xff]
        %v4606 = vld [vmem:[#allocation11 + $0x78] sm:$0xff]
        %v4607 = vld [vmem:[#allocation11 + $0x80] sm:$0xff]
        %v4608 = vld [vmem:[#allocation11 + $0x88] sm:$0xff]
        %v4609 = vld [vmem:[#allocation11 + $0x90] sm:$0xff]
        %v4610 = vld [vmem:[#allocation11 + $0x98] sm:$0xff]
        %v4611 = vld [vmem:[#allocation11 + $0xa0] sm:$0xff]
        %v4612 = vld [vmem:[#allocation11 + $0xa8] sm:$0xff]
        %v4613 = vld [vmem:[#allocation11 + $0xb0] sm:$0xff]
        %v4614 = vld [vmem:[#allocation11 + $0xb8] sm:$0xff]
        %v4615 = vld [vmem:[#allocation11 + $0xc0] sm:$0xff]
        %v4616 = vld [vmem:[#allocation11 + $0xc8] sm:$0xff]
        %v4617 = vld [vmem:[#allocation11 + $0xd0] sm:$0xff]
        %v4618 = vld [vmem:[#allocation11 + $0xd8] sm:$0xff]
        %v4619 = vld [vmem:[#allocation11 + $0xe0] sm:$0xff]
        %v4620 = vld [vmem:[#allocation11 + $0xe8] sm:$0xff]
        %v4621 = vld [vmem:[#allocation11 + $0xf0] sm:$0xff]
        %v4622 = vld [vmem:[#allocation11 + $0xf8] sm:$0xff]
        %v4623 = vld [vmem:[#allocation11 + $0x100] sm:$0xff]
        %v4624 = vld [vmem:[#allocation11 + $0x108] sm:$0xff]
        %v4625 = vld [vmem:[#allocation11 + $0x110] sm:$0xff]
        %v4626 = vld [vmem:[#allocation11 + $0x118] sm:$0xff]
        %v4627 = vld [vmem:[#allocation11 + $0x120] sm:$0xff]
        %v4628 = vld [vmem:[#allocation11 + $0x128] sm:$0xff]
        %v4629 = vld [vmem:[#allocation11 + $0x130] sm:$0xff]
        %v4630 = vld [vmem:[#allocation11 + $0x138] sm:$0xff]
        %v4631 = vld [vmem:[#allocation11 + $0x140] sm:$0xff]
        %v4632 = vld [vmem:[#allocation11 + $0x148] sm:$0xff]
        %v4633 = vld [vmem:[#allocation11 + $0x150] sm:$0xff]
        %v4634 = vld [vmem:[#allocation11 + $0x158] sm:$0xff]
        %v4635 = vld [vmem:[#allocation11 + $0x160] sm:$0xff]
        %v4636 = vld [vmem:[#allocation11 + $0x168] sm:$0xff]
        %v4637 = vld [vmem:[#allocation11 + $0x170] sm:$0xff]
        %v4638 = vld [vmem:[#allocation11 + $0x178] sm:$0xff]
        %v4639 = vld [vmem:[#allocation11 + $0x180] sm:$0xff]
        %v4640 = vld [vmem:[#allocation11 + $0x188] sm:$0xff]
        %v4641 = vld [vmem:[#allocation11 + $0x190] sm:$0xff]
        %v4642 = vld [vmem:[#allocation11 + $0x198] sm:$0xff]
        %v4643 = vld [vmem:[#allocation11 + $0x1a0] sm:$0xff]
        %v4644 = vld [vmem:[#allocation11 + $0x1a8] sm:$0xff]
        %v4645 = vld [vmem:[#allocation11 + $0x1b0] sm:$0xff]
        %v4646 = vld [vmem:[#allocation11 + $0x1b8] sm:$0xff]
        %v4647 = vld [vmem:[#allocation11 + $0x1c0] sm:$0xff]
        %v4648 = vld [vmem:[#allocation11 + $0x1c8] sm:$0xff]
        %v4649 = vld [vmem:[#allocation11 + $0x1d0] sm:$0xff]
        %v4650 = vld [vmem:[#allocation11 + $0x1d8] sm:$0xff]
        %v4651 = vld [vmem:[#allocation11 + $0x1e0] sm:$0xff]
        %v4652 = vld [vmem:[#allocation11 + $0x1e8] sm:$0xff]
        %v4653 = vld [vmem:[#allocation11 + $0x1f0] sm:$0xff]
        %v4654 = vld [vmem:[#allocation11 + $0x1f8] sm:$0xff]
        %v4655 = vld [vmem:[%s14] sm:$0xf]
        %v4657 = vlaneseq
        %v4658 = vshrl.u32 %v4657, 7
        %v4659 = vsub.s32 0, %v4658
        %v4660 = vrot.slane %v4655, %v4659
        %v4661 = vlaneseq
        %v4662 = vshrl.u32 %v4661, 7
        %v4663 = vsub.s32 1, %v4662
        %v4664 = vrot.slane %v4655, %v4663
        %v4665 = vlaneseq
        %v4666 = vshrl.u32 %v4665, 7
        %v4667 = vsub.s32 2, %v4666
        %v4668 = vrot.slane %v4655, %v4667
        %v4669 = vlaneseq
        %v4670 = vshrl.u32 %v4669, 7
        %v4671 = vsub.s32 3, %v4670
        %v4672 = vrot.slane %v4655, %v4671
        %4677 = vmatprep.subr.mxu0 %v4592
        %4678 = vmatpush1.msra.mxu0 %v4591
        %4679 = vmatprep.subr.mxu0 %v4596
        %4680 = vmatpush1.msra.mxu0 %v4595
        %4681 = vmatprep.subr.mxu0 %v4600
        %4682 = vmatpush1.msra.mxu0 %v4599
        %4683 = vmatprep.subr.mxu0 %v4604
        %4684 = vmatpush1.msra.mxu0 %v4603
        %4685 = vmatprep.subr.mxu0 %v4608
        %4686 = vmatpush1.msra.mxu0 %v4607
        %4687 = vmatprep.subr.mxu0 %v4612
        %4688 = vmatpush1.msra.mxu0 %v4611
        %4689 = vmatprep.subr.mxu0 %v4616
        %4690 = vmatpush1.msra.mxu0 %v4615
        %4691 = vmatprep.subr.mxu0 %v4620
        %4692 = vmatpush1.msra.mxu0 %v4619
        %4693 = vmatprep.subr.mxu0 %v4624
        %4694 = vmatpush1.msra.mxu0 %v4623
        %4695 = vmatprep.subr.mxu0 %v4628
        %4696 = vmatpush1.msra.mxu0 %v4627
        %4697 = vmatprep.subr.mxu0 %v4632
        %4698 = vmatpush1.msra.mxu0 %v4631
        %4699 = vmatprep.subr.mxu0 %v4636
        %4700 = vmatpush1.msra.mxu0 %v4635
        %4701 = vmatprep.subr.mxu0 %v4640
        %4702 = vmatpush1.msra.mxu0 %v4639
        %4703 = vmatprep.subr.mxu0 %v4644
        %4704 = vmatpush1.msra.mxu0 %v4643
        %4705 = vmatprep.subr.mxu0 %v4648
        %4706 = vmatpush1.msra.mxu0 %v4647
        %4707 = vmatprep.subr.mxu0 %v4652
        %4708 = vmatpush1.msra.mxu0 %v4651
        %4709 = vmatprep.subr.mxu0 0.0
        %4710 = vmatpush1.msra.mxu0 0.0
        %4711 = vmatprep.subr.mxu0 0.0
        %4712 = vmatpush1.msra.mxu0 0.0
        %4713 = vmatprep.subr.mxu0 0.0
        %4714 = vmatpush1.msra.mxu0 0.0
        %4715 = vmatprep.subr.mxu0 0.0
        %4716 = vmatpush1.msra.mxu0 0.0
        %4717 = vmatprep.subr.mxu0 0.0
        %4718 = vmatpush1.msra.mxu0 0.0
        %4719 = vmatprep.subr.mxu0 0.0
        %4720 = vmatpush1.msra.mxu0 0.0
        %4721 = vmatprep.subr.mxu0 0.0
        %4722 = vmatpush1.msra.mxu0 0.0
        %4723 = vmatprep.subr.mxu0 0.0
        %4724 = vmatpush1.msra.mxu0 0.0
        %4725 = vmatprep.subr.mxu0 0.0
        %4726 = vmatpush1.msra.mxu0 0.0
        %4727 = vmatprep.subr.mxu0 0.0
        %4728 = vmatpush1.msra.mxu0 0.0
        %4729 = vmatprep.subr.mxu0 0.0
        %4730 = vmatpush1.msra.mxu0 0.0
        %4731 = vmatprep.subr.mxu0 0.0
        %4732 = vmatpush1.msra.mxu0 0.0
        %4733 = vmatprep.subr.mxu0 0.0
        %4734 = vmatpush1.msra.mxu0 0.0
        %4735 = vmatprep.subr.mxu0 0.0
        %4736 = vmatpush1.msra.mxu0 0.0
        %4737 = vmatprep.subr.mxu0 0.0
        %4738 = vmatpush1.msra.mxu0 0.0
        %4739 = vmatprep.subr.mxu0 0.0
        %4740 = vmatpush1.msra.mxu0 0.0
        %4741 = vmatprep.mubr.f32.mxu0 0.0
        %4742 = vmatmul.mubr.f32.gmra.mrb[0].mxu0 %v4575
        %v4743 = vpop.f32.mrb[0].mxu0
        %v4744 = vadd.f32 %v4660, %v4743
        %v4745 = vpop.f32.mrb[0].mxu0
        %v4746 = vadd.f32 %v4664, %v4745
        %4747 = vmatprep.mubr.f32.mxu0 0.0
        %4748 = vmatmul.mubr.f32.gmra.mrb[0].mxu0 %v4576
        %v4749 = vpop.f32.mrb[0].mxu0
        %v4750 = vadd.f32 %v4660, %v4749
        %v4751 = vpop.f32.mrb[0].mxu0
        %v4752 = vadd.f32 %v4664, %v4751
        %4753 = vmatprep.mubr.f32.mxu0 0.0
        %4754 = vmatmul.mubr.f32.gmra.mrb[0].mxu0 %v4577
        %v4755 = vpop.f32.mrb[0].mxu0
        %v4756 = vadd.f32 %v4660, %v4755
        %v4757 = vpop.f32.mrb[0].mxu0
        %v4758 = vadd.f32 %v4664, %v4757
        %4759 = vmatprep.mubr.f32.mxu0 0.0
        %4760 = vmatmul.mubr.f32.gmra.mrb[0].mxu0 %v4578
        %v4761 = vpop.f32.mrb[0].mxu0
        %v4762 = vadd.f32 %v4660, %v4761
        %v4763 = vpop.f32.mrb[0].mxu0
        %v4764 = vadd.f32 %v4664, %v4763
        %4765 = vmatprep.mubr.f32.mxu0 0.0
        %4766 = vmatmul.mubr.f32.gmra.mrb[0].mxu0 %v4579
        %v4767 = vpop.f32.mrb[0].mxu0
        %v4768 = vadd.f32 %v4660, %v4767
        %v4769 = vpop.f32.mrb[0].mxu0
        %v4770 = vadd.f32 %v4664, %v4769
        %4771 = vmatprep.mubr.f32.mxu0 0.0
        %4772 = vmatmul.mubr.f32.gmra.mrb[0].mxu0 %v4580
        %v4773 = vpop.f32.mrb[0].mxu0
        %v4774 = vadd.f32 %v4660, %v4773
        %v4775 = vpop.f32.mrb[0].mxu0
        %v4776 = vadd.f32 %v4664, %v4775
        %4777 = vmatprep.mubr.f32.mxu0 0.0
        %4778 = vmatmul.mubr.f32.gmra.mrb[0].mxu0 %v4581
        %v4779 = vpop.f32.mrb[0].mxu0
        %v4780 = vadd.f32 %v4660, %v4779
        %v4781 = vpop.f32.mrb[0].mxu0
        %v4782 = vadd.f32 %v4664, %v4781
        %4783 = vmatprep.mubr.f32.mxu0 0.0
        %4784 = vmatmul.mubr.f32.gmra.mrb[0].mxu0 %v4582
        %v4785 = vpop.f32.mrb[0].mxu0
        %v4786 = vadd.f32 %v4660, %v4785
        %v4787 = vpop.f32.mrb[0].mxu0
        %v4788 = vadd.f32 %v4664, %v4787
        %4789 = vmatprep.mubr.f32.mxu0 0.0
        %4790 = vmatmul.mubr.f32.gmra.mrb[0].mxu0 %v4583
        %v4791 = vpop.f32.mrb[0].mxu0
        %v4792 = vadd.f32 %v4660, %v4791
        %v4793 = vpop.f32.mrb[0].mxu0
        %v4794 = vadd.f32 %v4664, %v4793
        %4795 = vmatprep.mubr.f32.mxu0 0.0
        %4796 = vmatmul.mubr.f32.gmra.mrb[0].mxu0 %v4584
        %v4797 = vpop.f32.mrb[0].mxu0
        %v4798 = vadd.f32 %v4660, %v4797
        %v4799 = vpop.f32.mrb[0].mxu0
        %v4800 = vadd.f32 %v4664, %v4799
        %4801 = vmatprep.mubr.f32.mxu0 0.0
        %4802 = vmatmul.mubr.f32.gmra.mrb[0].mxu0 %v4585
        %v4803 = vpop.f32.mrb[0].mxu0
        %v4804 = vadd.f32 %v4660, %v4803
        %v4805 = vpop.f32.mrb[0].mxu0
        %v4806 = vadd.f32 %v4664, %v4805
        %4807 = vmatprep.mubr.f32.mxu0 0.0
        %4808 = vmatmul.mubr.f32.gmra.mrb[0].mxu0 %v4586
        %v4809 = vpop.f32.mrb[0].mxu0
        %v4810 = vadd.f32 %v4660, %v4809
        %v4811 = vpop.f32.mrb[0].mxu0
        %v4812 = vadd.f32 %v4664, %v4811
        %4813 = vmatprep.mubr.f32.mxu0 0.0
        %4814 = vmatmul.mubr.f32.gmra.mrb[0].mxu0 %v4587
        %v4815 = vpop.f32.mrb[0].mxu0
        %v4816 = vadd.f32 %v4660, %v4815
        %v4817 = vpop.f32.mrb[0].mxu0
        %v4818 = vadd.f32 %v4664, %v4817
        %4819 = vmatprep.mubr.f32.mxu0 0.0
        %4820 = vmatmul.mubr.f32.gmra.mrb[0].mxu0 %v4588
        %v4821 = vpop.f32.mrb[0].mxu0
        %v4822 = vadd.f32 %v4660, %v4821
        %v4823 = vpop.f32.mrb[0].mxu0
        %v4824 = vadd.f32 %v4664, %v4823
        %4825 = vmatprep.mubr.f32.mxu0 0.0
        %4826 = vmatmul.mubr.f32.gmra.mrb[0].mxu0 %v4589
        %v4827 = vpop.f32.mrb[0].mxu0
        %v4828 = vadd.f32 %v4660, %v4827
        %v4829 = vpop.f32.mrb[0].mxu0
        %v4830 = vadd.f32 %v4664, %v4829
        %4831 = vmatprep.mubr.f32.mxu0 0.0
        %4832 = vmatmul.mubr.f32.gmra.mrb[0].mxu0 %v4590
        %v4833 = vpop.f32.mrb[0].mxu0
        %v4834 = vadd.f32 %v4660, %v4833
        %v4835 = vpop.f32.mrb[0].mxu0
        %v4836 = vadd.f32 %v4664, %v4835
        %4837 = vdwg.mxu0
        %4838 = vmatprep.subr.mxu0 %v4594
        %4839 = vmatpush1.msra.mxu0 %v4593
        %4840 = vmatprep.subr.mxu0 %v4598
        %4841 = vmatpush1.msra.mxu0 %v4597
        %4842 = vmatprep.subr.mxu0 %v4602
        %4843 = vmatpush1.msra.mxu0 %v4601
        %4844 = vmatprep.subr.mxu0 %v4606
        %4845 = vmatpush1.msra.mxu0 %v4605
        %4846 = vmatprep.subr.mxu0 %v4610
        %4847 = vmatpush1.msra.mxu0 %v4609
        %4848 = vmatprep.subr.mxu0 %v4614
        %4849 = vmatpush1.msra.mxu0 %v4613
        %4850 = vmatprep.subr.mxu0 %v4618
        %4851 = vmatpush1.msra.mxu0 %v4617
        %4852 = vmatprep.subr.mxu0 %v4622
        %4853 = vmatpush1.msra.mxu0 %v4621
        %4854 = vmatprep.subr.mxu0 %v4626
        %4855 = vmatpush1.msra.mxu0 %v4625
        %4856 = vmatprep.subr.mxu0 %v4630
        %4857 = vmatpush1.msra.mxu0 %v4629
        %4858 = vmatprep.subr.mxu0 %v4634
        %4859 = vmatpush1.msra.mxu0 %v4633
        %4860 = vmatprep.subr.mxu0 %v4638
        %4861 = vmatpush1.msra.mxu0 %v4637
        %4862 = vmatprep.subr.mxu0 %v4642
        %4863 = vmatpush1.msra.mxu0 %v4641
        %4864 = vmatprep.subr.mxu0 %v4646
        %4865 = vmatpush1.msra.mxu0 %v4645
        %4866 = vmatprep.subr.mxu0 %v4650
        %4867 = vmatpush1.msra.mxu0 %v4649
        %4868 = vmatprep.subr.mxu0 %v4654
        %4869 = vmatpush1.msra.mxu0 %v4653
        %4870 = vmatprep.subr.mxu0 0.0
        %4871 = vmatpush1.msra.mxu0 0.0
        %4872 = vmatprep.subr.mxu0 0.0
        %4873 = vmatpush1.msra.mxu0 0.0
        %4874 = vmatprep.subr.mxu0 0.0
        %4875 = vmatpush1.msra.mxu0 0.0
        %4876 = vmatprep.subr.mxu0 0.0
        %4877 = vmatpush1.msra.mxu0 0.0
        %4878 = vmatprep.subr.mxu0 0.0
        %4879 = vmatpush1.msra.mxu0 0.0
        %4880 = vmatprep.subr.mxu0 0.0
        %4881 = vmatpush1.msra.mxu0 0.0
        %4882 = vmatprep.subr.mxu0 0.0
        %4883 = vmatpush1.msra.mxu0 0.0
        %4884 = vmatprep.subr.mxu0 0.0
        %4885 = vmatpush1.msra.mxu0 0.0
        %4886 = vmatprep.subr.mxu0 0.0
        %4887 = vmatpush1.msra.mxu0 0.0
        %4888 = vmatprep.subr.mxu0 0.0
        %4889 = vmatpush1.msra.mxu0 0.0
        %4890 = vmatprep.subr.mxu0 0.0
        %4891 = vmatpush1.msra.mxu0 0.0
        %4892 = vmatprep.subr.mxu0 0.0
        %4893 = vmatpush1.msra.mxu0 0.0
        %4894 = vmatprep.subr.mxu0 0.0
        %4895 = vmatpush1.msra.mxu0 0.0
        %4896 = vmatprep.subr.mxu0 0.0
        %4897 = vmatpush1.msra.mxu0 0.0
        %4898 = vmatprep.subr.mxu0 0.0
        %4899 = vmatpush1.msra.mxu0 0.0
        %4900 = vmatprep.subr.mxu0 0.0
        %4901 = vmatpush1.msra.mxu0 0.0
        %4902 = vmatprep.mubr.f32.mxu0 0.0
        %4903 = vmatmul.mubr.f32.gmra.mrb[0].mxu0 %v4575
        %v4904 = vpop.f32.mrb[0].mxu0
        %v4905 = vadd.f32 %v4668, %v4904
        %v4906 = vpop.f32.mrb[0].mxu0
        %v4907 = vadd.f32 %v4672, %v4906
        %4908 = vmatprep.mubr.f32.mxu0 0.0
        %4909 = vmatmul.mubr.f32.gmra.mrb[0].mxu0 %v4576
        %v4910 = vpop.f32.mrb[0].mxu0
        %v4911 = vadd.f32 %v4668, %v4910
        %v4912 = vpop.f32.mrb[0].mxu0
        %v4913 = vadd.f32 %v4672, %v4912
        %4914 = vmatprep.mubr.f32.mxu0 0.0
        %4915 = vmatmul.mubr.f32.gmra.mrb[0].mxu0 %v4577
        %v4916 = vpop.f32.mrb[0].mxu0
        %v4917 = vadd.f32 %v4668, %v4916
        %v4918 = vpop.f32.mrb[0].mxu0
        %v4919 = vadd.f32 %v4672, %v4918
        %4920 = vmatprep.mubr.f32.mxu0 0.0
        %4921 = vmatmul.mubr.f32.gmra.mrb[0].mxu0 %v4578
        %v4922 = vpop.f32.mrb[0].mxu0
        %v4923 = vadd.f32 %v4668, %v4922
        %v4924 = vpop.f32.mrb[0].mxu0
        %v4925 = vadd.f32 %v4672, %v4924
        %4926 = vmatprep.mubr.f32.mxu0 0.0
        %4927 = vmatmul.mubr.f32.gmra.mrb[0].mxu0 %v4579
        %v4928 = vpop.f32.mrb[0].mxu0
        %v4929 = vadd.f32 %v4668, %v4928
        %v4930 = vpop.f32.mrb[0].mxu0
        %v4931 = vadd.f32 %v4672, %v4930
        %4932 = vmatprep.mubr.f32.mxu0 0.0
        %4933 = vmatmul.mubr.f32.gmra.mrb[0].mxu0 %v4580
        %v4934 = vpop.f32.mrb[0].mxu0
        %v4935 = vadd.f32 %v4668, %v4934
        %v4936 = vpop.f32.mrb[0].mxu0
        %v4937 = vadd.f32 %v4672, %v4936
        %4938 = vmatprep.mubr.f32.mxu0 0.0
        %4939 = vmatmul.mubr.f32.gmra.mrb[0].mxu0 %v4581
        %v4940 = vpop.f32.mrb[0].mxu0
        %v4941 = vadd.f32 %v4668, %v4940
        %v4942 = vpop.f32.mrb[0].mxu0
        %v4943 = vadd.f32 %v4672, %v4942
        %4944 = vmatprep.mubr.f32.mxu0 0.0
        %4945 = vmatmul.mubr.f32.gmra.mrb[0].mxu0 %v4582
        %v4946 = vpop.f32.mrb[0].mxu0
        %v4947 = vadd.f32 %v4668, %v4946
        %v4948 = vpop.f32.mrb[0].mxu0
        %v4949 = vadd.f32 %v4672, %v4948
        %4950 = vmatprep.mubr.f32.mxu0 0.0
        %4951 = vmatmul.mubr.f32.gmra.mrb[0].mxu0 %v4583
        %v4952 = vpop.f32.mrb[0].mxu0
        %v4953 = vadd.f32 %v4668, %v4952
        %v4954 = vpop.f32.mrb[0].mxu0
        %v4955 = vadd.f32 %v4672, %v4954
        %4956 = vmatprep.mubr.f32.mxu0 0.0
        %4957 = vmatmul.mubr.f32.gmra.mrb[0].mxu0 %v4584
        %v4958 = vpop.f32.mrb[0].mxu0
        %v4959 = vadd.f32 %v4668, %v4958
        %v4960 = vpop.f32.mrb[0].mxu0
        %v4961 = vadd.f32 %v4672, %v4960
        %4962 = vmatprep.mubr.f32.mxu0 0.0
        %4963 = vmatmul.mubr.f32.gmra.mrb[0].mxu0 %v4585
        %v4964 = vpop.f32.mrb[0].mxu0
        %v4965 = vadd.f32 %v4668, %v4964
        %v4966 = vpop.f32.mrb[0].mxu0
        %v4967 = vadd.f32 %v4672, %v4966
        %4968 = vmatprep.mubr.f32.mxu0 0.0
        %4969 = vmatmul.mubr.f32.gmra.mrb[0].mxu0 %v4586
        %v4970 = vpop.f32.mrb[0].mxu0
        %v4971 = vadd.f32 %v4668, %v4970
        %v4972 = vpop.f32.mrb[0].mxu0
        %v4973 = vadd.f32 %v4672, %v4972
        %4974 = vmatprep.mubr.f32.mxu0 0.0
        %4975 = vmatmul.mubr.f32.gmra.mrb[0].mxu0 %v4587
        %v4976 = vpop.f32.mrb[0].mxu0
        %v4977 = vadd.f32 %v4668, %v4976
        %v4978 = vpop.f32.mrb[0].mxu0
        %v4979 = vadd.f32 %v4672, %v4978
        %4980 = vmatprep.mubr.f32.mxu0 0.0
        %4981 = vmatmul.mubr.f32.gmra.mrb[0].mxu0 %v4588
        %v4982 = vpop.f32.mrb[0].mxu0
        %v4983 = vadd.f32 %v4668, %v4982
        %v4984 = vpop.f32.mrb[0].mxu0
        %v4985 = vadd.f32 %v4672, %v4984
        %4986 = vmatprep.mubr.f32.mxu0 0.0
        %4987 = vmatmul.mubr.f32.gmra.mrb[0].mxu0 %v4589
        %v4988 = vpop.f32.mrb[0].mxu0
        %v4989 = vadd.f32 %v4668, %v4988
        %v4990 = vpop.f32.mrb[0].mxu0
        %v4991 = vadd.f32 %v4672, %v4990
        %4992 = vmatprep.mubr.f32.mxu0 0.0
        %4993 = vmatmul.mubr.f32.gmra.mrb[0].mxu0 %v4590
        %v4994 = vpop.f32.mrb[0].mxu0
        %v4995 = vadd.f32 %v4668, %v4994
        %v4996 = vpop.f32.mrb[0].mxu0
        %v4997 = vadd.f32 %v4672, %v4996
        %4998 = vdwg.mxu0
        %v4999 = vmul.f32 %v4744, 0.5
        %v5000 = vmul.f32 %v4746, 0.5
        %v5001 = vmul.f32 %v4905, 0.5
        %v5002 = vmul.f32 %v4907, 0.5
        %v5003 = vmul.f32 %v4750, 0.5
        %v5004 = vmul.f32 %v4752, 0.5
        %v5005 = vmul.f32 %v4911, 0.5
        %v5006 = vmul.f32 %v4913, 0.5
        %v5007 = vmul.f32 %v4756, 0.5
        %v5008 = vmul.f32 %v4758, 0.5
        %v5009 = vmul.f32 %v4917, 0.5
        %v5010 = vmul.f32 %v4919, 0.5
        %v5011 = vmul.f32 %v4762, 0.5
        %v5012 = vmul.f32 %v4764, 0.5
        %v5013 = vmul.f32 %v4923, 0.5
        %v5014 = vmul.f32 %v4925, 0.5
        %v5015 = vmul.f32 %v4768, 0.5
        %v5016 = vmul.f32 %v4770, 0.5
        %v5017 = vmul.f32 %v4929, 0.5
        %v5018 = vmul.f32 %v4931, 0.5
        %v5019 = vmul.f32 %v4774, 0.5
        %v5020 = vmul.f32 %v4776, 0.5
        %v5021 = vmul.f32 %v4935, 0.5
        %v5022 = vmul.f32 %v4937, 0.5
        %v5023 = vmul.f32 %v4780, 0.5
        %v5024 = vmul.f32 %v4782, 0.5
        %v5025 = vmul.f32 %v4941, 0.5
        %v5026 = vmul.f32 %v4943, 0.5
        %v5027 = vmul.f32 %v4786, 0.5
        %v5028 = vmul.f32 %v4788, 0.5
        %v5029 = vmul.f32 %v4947, 0.5
        %v5030 = vmul.f32 %v4949, 0.5
        %v5031 = vmul.f32 %v4792, 0.5
        %v5032 = vmul.f32 %v4794, 0.5
        %v5033 = vmul.f32 %v4953, 0.5
        %v5034 = vmul.f32 %v4955, 0.5
        %v5035 = vmul.f32 %v4798, 0.5
        %v5036 = vmul.f32 %v4800, 0.5
        %v5037 = vmul.f32 %v4959, 0.5
        %v5038 = vmul.f32 %v4961, 0.5
        %v5039 = vmul.f32 %v4804, 0.5
        %v5040 = vmul.f32 %v4806, 0.5
        %v5041 = vmul.f32 %v4965, 0.5
        %v5042 = vmul.f32 %v4967, 0.5
        %v5043 = vmul.f32 %v4810, 0.5
        %v5044 = vmul.f32 %v4812, 0.5
        %v5045 = vmul.f32 %v4971, 0.5
        %v5046 = vmul.f32 %v4973, 0.5
        %v5047 = vmul.f32 %v4816, 0.5
        %v5048 = vmul.f32 %v4818, 0.5
        %v5049 = vmul.f32 %v4977, 0.5
        %v5050 = vmul.f32 %v4979, 0.5
        %v5051 = vmul.f32 %v4822, 0.5
        %v5052 = vmul.f32 %v4824, 0.5
        %v5053 = vmul.f32 %v4983, 0.5
        %v5054 = vmul.f32 %v4985, 0.5
        %v5055 = vmul.f32 %v4828, 0.5
        %v5056 = vmul.f32 %v4830, 0.5
        %v5057 = vmul.f32 %v4989, 0.5
        %v5058 = vmul.f32 %v4991, 0.5
        %v5059 = vmul.f32 %v4834, 0.5
        %v5060 = vmul.f32 %v4836, 0.5
        %v5061 = vmul.f32 %v4995, 0.5
        %v5062 = vmul.f32 %v4997, 0.5
        %v5063 = vmul.f32 %v4744, 0.044715
        %v5064 = vmul.f32 %v4746, 0.044715
        %v5065 = vmul.f32 %v4905, 0.044715
        %v5066 = vmul.f32 %v4907, 0.044715
        %v5067 = vmul.f32 %v4750, 0.044715
        %v5068 = vmul.f32 %v4752, 0.044715
        %v5069 = vmul.f32 %v4911, 0.044715
        %v5070 = vmul.f32 %v4913, 0.044715
        %v5071 = vmul.f32 %v4756, 0.044715
        %v5072 = vmul.f32 %v4758, 0.044715
        %v5073 = vmul.f32 %v4917, 0.044715
        %v5074 = vmul.f32 %v4919, 0.044715
        %v5075 = vmul.f32 %v4762, 0.044715
        %v5076 = vmul.f32 %v4764, 0.044715
        %v5077 = vmul.f32 %v4923, 0.044715
        %v5078 = vmul.f32 %v4925, 0.044715
        %v5079 = vmul.f32 %v4768, 0.044715
        %v5080 = vmul.f32 %v4770, 0.044715
        %v5081 = vmul.f32 %v4929, 0.044715
        %v5082 = vmul.f32 %v4931, 0.044715
        %v5083 = vmul.f32 %v4774, 0.044715
        %v5084 = vmul.f32 %v4776, 0.044715
        %v5085 = vmul.f32 %v4935, 0.044715
        %v5086 = vmul.f32 %v4937, 0.044715
        %v5087 = vmul.f32 %v4780, 0.044715
        %v5088 = vmul.f32 %v4782, 0.044715
        %v5089 = vmul.f32 %v4941, 0.044715
        %v5090 = vmul.f32 %v4943, 0.044715
        %v5091 = vmul.f32 %v4786, 0.044715
        %v5092 = vmul.f32 %v4788, 0.044715
        %v5093 = vmul.f32 %v4947, 0.044715
        %v5094 = vmul.f32 %v4949, 0.044715
        %v5095 = vmul.f32 %v4792, 0.044715
        %v5096 = vmul.f32 %v4794, 0.044715
        %v5097 = vmul.f32 %v4953, 0.044715
        %v5098 = vmul.f32 %v4955, 0.044715
        %v5099 = vmul.f32 %v4798, 0.044715
        %v5100 = vmul.f32 %v4800, 0.044715
        %v5101 = vmul.f32 %v4959, 0.044715
        %v5102 = vmul.f32 %v4961, 0.044715
        %v5103 = vmul.f32 %v4804, 0.044715
        %v5104 = vmul.f32 %v4806, 0.044715
        %v5105 = vmul.f32 %v4965, 0.044715
        %v5106 = vmul.f32 %v4967, 0.044715
        %v5107 = vmul.f32 %v4810, 0.044715
        %v5108 = vmul.f32 %v4812, 0.044715
        %v5109 = vmul.f32 %v4971, 0.044715
        %v5110 = vmul.f32 %v4973, 0.044715
        %v5111 = vmul.f32 %v4816, 0.044715
        %v5112 = vmul.f32 %v4818, 0.044715
        %v5113 = vmul.f32 %v4977, 0.044715
        %v5114 = vmul.f32 %v4979, 0.044715
        %v5115 = vmul.f32 %v4822, 0.044715
        %v5116 = vmul.f32 %v4824, 0.044715
        %v5117 = vmul.f32 %v4983, 0.044715
        %v5118 = vmul.f32 %v4985, 0.044715
        %v5119 = vmul.f32 %v4828, 0.044715
        %v5120 = vmul.f32 %v4830, 0.044715
        %v5121 = vmul.f32 %v4989, 0.044715
        %v5122 = vmul.f32 %v4991, 0.044715
        %v5123 = vmul.f32 %v4834, 0.044715
        %v5124 = vmul.f32 %v4836, 0.044715
        %v5125 = vmul.f32 %v4995, 0.044715
        %v5126 = vmul.f32 %v4997, 0.044715
        %v5127 = vmul.f32 %v5063, %v4744
        %v5128 = vmul.f32 %v5064, %v4746
        %v5129 = vmul.f32 %v5065, %v4905
        %v5130 = vmul.f32 %v5066, %v4907
        %v5131 = vmul.f32 %v5067, %v4750
        %v5132 = vmul.f32 %v5068, %v4752
        %v5133 = vmul.f32 %v5069, %v4911
        %v5134 = vmul.f32 %v5070, %v4913
        %v5135 = vmul.f32 %v5071, %v4756
        %v5136 = vmul.f32 %v5072, %v4758
        %v5137 = vmul.f32 %v5073, %v4917
        %v5138 = vmul.f32 %v5074, %v4919
        %v5139 = vmul.f32 %v5075, %v4762
        %v5140 = vmul.f32 %v5076, %v4764
        %v5141 = vmul.f32 %v5077, %v4923
        %v5142 = vmul.f32 %v5078, %v4925
        %v5143 = vmul.f32 %v5079, %v4768
        %v5144 = vmul.f32 %v5080, %v4770
        %v5145 = vmul.f32 %v5081, %v4929
        %v5146 = vmul.f32 %v5082, %v4931
        %v5147 = vmul.f32 %v5083, %v4774
        %v5148 = vmul.f32 %v5084, %v4776
        %v5149 = vmul.f32 %v5085, %v4935
        %v5150 = vmul.f32 %v5086, %v4937
        %v5151 = vmul.f32 %v5087, %v4780
        %v5152 = vmul.f32 %v5088, %v4782
        %v5153 = vmul.f32 %v5089, %v4941
        %v5154 = vmul.f32 %v5090, %v4943
        %v5155 = vmul.f32 %v5091, %v4786
        %v5156 = vmul.f32 %v5092, %v4788
        %v5157 = vmul.f32 %v5093, %v4947
        %v5158 = vmul.f32 %v5094, %v4949
        %v5159 = vmul.f32 %v5095, %v4792
        %v5160 = vmul.f32 %v5096, %v4794
        %v5161 = vmul.f32 %v5097, %v4953
        %v5162 = vmul.f32 %v5098, %v4955
        %v5163 = vmul.f32 %v5099, %v4798
        %v5164 = vmul.f32 %v5100, %v4800
        %v5165 = vmul.f32 %v5101, %v4959
        %v5166 = vmul.f32 %v5102, %v4961
        %v5167 = vmul.f32 %v5103, %v4804
        %v5168 = vmul.f32 %v5104, %v4806
        %v5169 = vmul.f32 %v5105, %v4965
        %v5170 = vmul.f32 %v5106, %v4967
        %v5171 = vmul.f32 %v5107, %v4810
        %v5172 = vmul.f32 %v5108, %v4812
        %v5173 = vmul.f32 %v5109, %v4971
        %v5174 = vmul.f32 %v5110, %v4973
        %v5175 = vmul.f32 %v5111, %v4816
        %v5176 = vmul.f32 %v5112, %v4818
        %v5177 = vmul.f32 %v5113, %v4977
        %v5178 = vmul.f32 %v5114, %v4979
        %v5179 = vmul.f32 %v5115, %v4822
        %v5180 = vmul.f32 %v5116, %v4824
        %v5181 = vmul.f32 %v5117, %v4983
        %v5182 = vmul.f32 %v5118, %v4985
        %v5183 = vmul.f32 %v5119, %v4828
        %v5184 = vmul.f32 %v5120, %v4830
        %v5185 = vmul.f32 %v5121, %v4989
        %v5186 = vmul.f32 %v5122, %v4991
        %v5187 = vmul.f32 %v5123, %v4834
        %v5188 = vmul.f32 %v5124, %v4836
        %v5189 = vmul.f32 %v5125, %v4995
        %v5190 = vmul.f32 %v5126, %v4997
        %v5191 = vmul.f32 %v5127, %v4744
        %v5192 = vmul.f32 %v5128, %v4746
        %v5193 = vmul.f32 %v5129, %v4905
        %v5194 = vmul.f32 %v5130, %v4907
        %v5195 = vmul.f32 %v5131, %v4750
        %v5196 = vmul.f32 %v5132, %v4752
        %v5197 = vmul.f32 %v5133, %v4911
        %v5198 = vmul.f32 %v5134, %v4913
        %v5199 = vmul.f32 %v5135, %v4756
        %v5200 = vmul.f32 %v5136, %v4758
        %v5201 = vmul.f32 %v5137, %v4917
        %v5202 = vmul.f32 %v5138, %v4919
        %v5203 = vmul.f32 %v5139, %v4762
        %v5204 = vmul.f32 %v5140, %v4764
        %v5205 = vmul.f32 %v5141, %v4923
        %v5206 = vmul.f32 %v5142, %v4925
        %v5207 = vmul.f32 %v5143, %v4768
        %v5208 = vmul.f32 %v5144, %v4770
        %v5209 = vmul.f32 %v5145, %v4929
        %v5210 = vmul.f32 %v5146, %v4931
        %v5211 = vmul.f32 %v5147, %v4774
        %v5212 = vmul.f32 %v5148, %v4776
        %v5213 = vmul.f32 %v5149, %v4935
        %v5214 = vmul.f32 %v5150, %v4937
        %v5215 = vmul.f32 %v5151, %v4780
        %v5216 = vmul.f32 %v5152, %v4782
        %v5217 = vmul.f32 %v5153, %v4941
        %v5218 = vmul.f32 %v5154, %v4943
        %v5219 = vmul.f32 %v5155, %v4786
        %v5220 = vmul.f32 %v5156, %v4788
        %v5221 = vmul.f32 %v5157, %v4947
        %v5222 = vmul.f32 %v5158, %v4949
        %v5223 = vmul.f32 %v5159, %v4792
        %v5224 = vmul.f32 %v5160, %v4794
        %v5225 = vmul.f32 %v5161, %v4953
        %v5226 = vmul.f32 %v5162, %v4955
        %v5227 = vmul.f32 %v5163, %v4798
        %v5228 = vmul.f32 %v5164, %v4800
        %v5229 = vmul.f32 %v5165, %v4959
        %v5230 = vmul.f32 %v5166, %v4961
        %v5231 = vmul.f32 %v5167, %v4804
        %v5232 = vmul.f32 %v5168, %v4806
        %v5233 = vmul.f32 %v5169, %v4965
        %v5234 = vmul.f32 %v5170, %v4967
        %v5235 = vmul.f32 %v5171, %v4810
        %v5236 = vmul.f32 %v5172, %v4812
        %v5237 = vmul.f32 %v5173, %v4971
        %v5238 = vmul.f32 %v5174, %v4973
        %v5239 = vmul.f32 %v5175, %v4816
        %v5240 = vmul.f32 %v5176, %v4818
        %v5241 = vmul.f32 %v5177, %v4977
        %v5242 = vmul.f32 %v5178, %v4979
        %v5243 = vmul.f32 %v5179, %v4822
        %v5244 = vmul.f32 %v5180, %v4824
        %v5245 = vmul.f32 %v5181, %v4983
        %v5246 = vmul.f32 %v5182, %v4985
        %v5247 = vmul.f32 %v5183, %v4828
        %v5248 = vmul.f32 %v5184, %v4830
        %v5249 = vmul.f32 %v5185, %v4989
        %v5250 = vmul.f32 %v5186, %v4991
        %v5251 = vmul.f32 %v5187, %v4834
        %v5252 = vmul.f32 %v5188, %v4836
        %v5253 = vmul.f32 %v5189, %v4995
        %v5254 = vmul.f32 %v5190, %v4997
        %v5255 = vadd.f32 %v4744, %v5191
        %v5256 = vadd.f32 %v4746, %v5192
        %v5257 = vadd.f32 %v4905, %v5193
        %v5258 = vadd.f32 %v4907, %v5194
        %v5259 = vadd.f32 %v4750, %v5195
        %v5260 = vadd.f32 %v4752, %v5196
        %v5261 = vadd.f32 %v4911, %v5197
        %v5262 = vadd.f32 %v4913, %v5198
        %v5263 = vadd.f32 %v4756, %v5199
        %v5264 = vadd.f32 %v4758, %v5200
        %v5265 = vadd.f32 %v4917, %v5201
        %v5266 = vadd.f32 %v4919, %v5202
        %v5267 = vadd.f32 %v4762, %v5203
        %v5268 = vadd.f32 %v4764, %v5204
        %v5269 = vadd.f32 %v4923, %v5205
        %v5270 = vadd.f32 %v4925, %v5206
        %v5271 = vadd.f32 %v4768, %v5207
        %v5272 = vadd.f32 %v4770, %v5208
        %v5273 = vadd.f32 %v4929, %v5209
        %v5274 = vadd.f32 %v4931, %v5210
        %v5275 = vadd.f32 %v4774, %v5211
        %v5276 = vadd.f32 %v4776, %v5212
        %v5277 = vadd.f32 %v4935, %v5213
        %v5278 = vadd.f32 %v4937, %v5214
        %v5279 = vadd.f32 %v4780, %v5215
        %v5280 = vadd.f32 %v4782, %v5216
        %v5281 = vadd.f32 %v4941, %v5217
        %v5282 = vadd.f32 %v4943, %v5218
        %v5283 = vadd.f32 %v4786, %v5219
        %v5284 = vadd.f32 %v4788, %v5220
        %v5285 = vadd.f32 %v4947, %v5221
        %v5286 = vadd.f32 %v4949, %v5222
        %v5287 = vadd.f32 %v4792, %v5223
        %v5288 = vadd.f32 %v4794, %v5224
        %v5289 = vadd.f32 %v4953, %v5225
        %v5290 = vadd.f32 %v4955, %v5226
        %v5291 = vadd.f32 %v4798, %v5227
        %v5292 = vadd.f32 %v4800, %v5228
        %v5293 = vadd.f32 %v4959, %v5229
        %v5294 = vadd.f32 %v4961, %v5230
        %v5295 = vadd.f32 %v4804, %v5231
        %v5296 = vadd.f32 %v4806, %v5232
        %v5297 = vadd.f32 %v4965, %v5233
        %v5298 = vadd.f32 %v4967, %v5234
        %v5299 = vadd.f32 %v4810, %v5235
        %v5300 = vadd.f32 %v4812, %v5236
        %v5301 = vadd.f32 %v4971, %v5237
        %v5302 = vadd.f32 %v4973, %v5238
        %v5303 = vadd.f32 %v4816, %v5239
        %v5304 = vadd.f32 %v4818, %v5240
        %v5305 = vadd.f32 %v4977, %v5241
        %v5306 = vadd.f32 %v4979, %v5242
        %v5307 = vadd.f32 %v4822, %v5243
        %v5308 = vadd.f32 %v4824, %v5244
        %v5309 = vadd.f32 %v4983, %v5245
        %v5310 = vadd.f32 %v4985, %v5246
        %v5311 = vadd.f32 %v4828, %v5247
        %v5312 = vadd.f32 %v4830, %v5248
        %v5313 = vadd.f32 %v4989, %v5249
        %v5314 = vadd.f32 %v4991, %v5250
        %v5315 = vadd.f32 %v4834, %v5251
        %v5316 = vadd.f32 %v4836, %v5252
        %v5317 = vadd.f32 %v4995, %v5253
        %v5318 = vadd.f32 %v4997, %v5254
        %v5319 = vmul.f32 %v5255, 0.7978846
        %v5320 = vmul.f32 %v5256, 0.7978846
        %v5321 = vmul.f32 %v5257, 0.7978846
        %v5322 = vmul.f32 %v5258, 0.7978846
        %v5323 = vmul.f32 %v5259, 0.7978846
        %v5324 = vmul.f32 %v5260, 0.7978846
        %v5325 = vmul.f32 %v5261, 0.7978846
        %v5326 = vmul.f32 %v5262, 0.7978846
        %v5327 = vmul.f32 %v5263, 0.7978846
        %v5328 = vmul.f32 %v5264, 0.7978846
        %v5329 = vmul.f32 %v5265, 0.7978846
        %v5330 = vmul.f32 %v5266, 0.7978846
        %v5331 = vmul.f32 %v5267, 0.7978846
        %v5332 = vmul.f32 %v5268, 0.7978846
        %v5333 = vmul.f32 %v5269, 0.7978846
        %v5334 = vmul.f32 %v5270, 0.7978846
        %v5335 = vmul.f32 %v5271, 0.7978846
        %v5336 = vmul.f32 %v5272, 0.7978846
        %v5337 = vmul.f32 %v5273, 0.7978846
        %v5338 = vmul.f32 %v5274, 0.7978846
        %v5339 = vmul.f32 %v5275, 0.7978846
        %v5340 = vmul.f32 %v5276, 0.7978846
        %v5341 = vmul.f32 %v5277, 0.7978846
        %v5342 = vmul.f32 %v5278, 0.7978846
        %v5343 = vmul.f32 %v5279, 0.7978846
        %v5344 = vmul.f32 %v5280, 0.7978846
        %v5345 = vmul.f32 %v5281, 0.7978846
        %v5346 = vmul.f32 %v5282, 0.7978846
        %v5347 = vmul.f32 %v5283, 0.7978846
        %v5348 = vmul.f32 %v5284, 0.7978846
        %v5349 = vmul.f32 %v5285, 0.7978846
        %v5350 = vmul.f32 %v5286, 0.7978846
        %v5351 = vmul.f32 %v5287, 0.7978846
        %v5352 = vmul.f32 %v5288, 0.7978846
        %v5353 = vmul.f32 %v5289, 0.7978846
        %v5354 = vmul.f32 %v5290, 0.7978846
        %v5355 = vmul.f32 %v5291, 0.7978846
        %v5356 = vmul.f32 %v5292, 0.7978846
        %v5357 = vmul.f32 %v5293, 0.7978846
        %v5358 = vmul.f32 %v5294, 0.7978846
        %v5359 = vmul.f32 %v5295, 0.7978846
        %v5360 = vmul.f32 %v5296, 0.7978846
        %v5361 = vmul.f32 %v5297, 0.7978846
        %v5362 = vmul.f32 %v5298, 0.7978846
        %v5363 = vmul.f32 %v5299, 0.7978846
        %v5364 = vmul.f32 %v5300, 0.7978846
        %v5365 = vmul.f32 %v5301, 0.7978846
        %v5366 = vmul.f32 %v5302, 0.7978846
        %v5367 = vmul.f32 %v5303, 0.7978846
        %v5368 = vmul.f32 %v5304, 0.7978846
        %v5369 = vmul.f32 %v5305, 0.7978846
        %v5370 = vmul.f32 %v5306, 0.7978846
        %v5371 = vmul.f32 %v5307, 0.7978846
        %v5372 = vmul.f32 %v5308, 0.7978846
        %v5373 = vmul.f32 %v5309, 0.7978846
        %v5374 = vmul.f32 %v5310, 0.7978846
        %v5375 = vmul.f32 %v5311, 0.7978846
        %v5376 = vmul.f32 %v5312, 0.7978846
        %v5377 = vmul.f32 %v5313, 0.7978846
        %v5378 = vmul.f32 %v5314, 0.7978846
        %v5379 = vmul.f32 %v5315, 0.7978846
        %v5380 = vmul.f32 %v5316, 0.7978846
        %v5381 = vmul.f32 %v5317, 0.7978846
        %v5382 = vmul.f32 %v5318, 0.7978846
        %v5383 = vtanh.pop %v5319
        %v5384 = vtanh.pop %v5320
        %v5385 = vtanh.pop %v5321
        %v5386 = vtanh.pop %v5322
        %v5387 = vtanh.pop %v5323
        %v5388 = vtanh.pop %v5324
        %v5389 = vtanh.pop %v5325
        %v5390 = vtanh.pop %v5326
        %v5391 = vtanh.pop %v5327
        %v5392 = vtanh.pop %v5328
        %v5393 = vtanh.pop %v5329
        %v5394 = vtanh.pop %v5330
        %v5395 = vtanh.pop %v5331
        %v5396 = vtanh.pop %v5332
        %v5397 = vtanh.pop %v5333
        %v5398 = vtanh.pop %v5334
        %v5399 = vtanh.pop %v5335
        %v5400 = vtanh.pop %v5336
        %v5401 = vtanh.pop %v5337
        %v5402 = vtanh.pop %v5338
        %v5403 = vtanh.pop %v5339
        %v5404 = vtanh.pop %v5340
        %v5405 = vtanh.pop %v5341
        %v5406 = vtanh.pop %v5342
        %v5407 = vtanh.pop %v5343
        %v5408 = vtanh.pop %v5344
        %v5409 = vtanh.pop %v5345
        %v5410 = vtanh.pop %v5346
        %v5411 = vtanh.pop %v5347
        %v5412 = vtanh.pop %v5348
        %v5413 = vtanh.pop %v5349
        %v5414 = vtanh.pop %v5350
        %v5415 = vtanh.pop %v5351
        %v5416 = vtanh.pop %v5352
        %v5417 = vtanh.pop %v5353
        %v5418 = vtanh.pop %v5354
        %v5419 = vtanh.pop %v5355
        %v5420 = vtanh.pop %v5356
        %v5421 = vtanh.pop %v5357
        %v5422 = vtanh.pop %v5358
        %v5423 = vtanh.pop %v5359
        %v5424 = vtanh.pop %v5360
        %v5425 = vtanh.pop %v5361
        %v5426 = vtanh.pop %v5362
        %v5427 = vtanh.pop %v5363
        %v5428 = vtanh.pop %v5364
        %v5429 = vtanh.pop %v5365
        %v5430 = vtanh.pop %v5366
        %v5431 = vtanh.pop %v5367
        %v5432 = vtanh.pop %v5368
        %v5433 = vtanh.pop %v5369
        %v5434 = vtanh.pop %v5370
        %v5435 = vtanh.pop %v5371
        %v5436 = vtanh.pop %v5372
        %v5437 = vtanh.pop %v5373
        %v5438 = vtanh.pop %v5374
        %v5439 = vtanh.pop %v5375
        %v5440 = vtanh.pop %v5376
        %v5441 = vtanh.pop %v5377
        %v5442 = vtanh.pop %v5378
        %v5443 = vtanh.pop %v5379
        %v5444 = vtanh.pop %v5380
        %v5445 = vtanh.pop %v5381
        %v5446 = vtanh.pop %v5382
        %v5447 = vadd.f32 %v5383, 1.0
        %v5448 = vadd.f32 %v5384, 1.0
        %v5449 = vadd.f32 %v5385, 1.0
        %v5450 = vadd.f32 %v5386, 1.0
        %v5451 = vadd.f32 %v5387, 1.0
        %v5452 = vadd.f32 %v5388, 1.0
        %v5453 = vadd.f32 %v5389, 1.0
        %v5454 = vadd.f32 %v5390, 1.0
        %v5455 = vadd.f32 %v5391, 1.0
        %v5456 = vadd.f32 %v5392, 1.0
        %v5457 = vadd.f32 %v5393, 1.0
        %v5458 = vadd.f32 %v5394, 1.0
        %v5459 = vadd.f32 %v5395, 1.0
        %v5460 = vadd.f32 %v5396, 1.0
        %v5461 = vadd.f32 %v5397, 1.0
        %v5462 = vadd.f32 %v5398, 1.0
        %v5463 = vadd.f32 %v5399, 1.0
        %v5464 = vadd.f32 %v5400, 1.0
        %v5465 = vadd.f32 %v5401, 1.0
        %v5466 = vadd.f32 %v5402, 1.0
        %v5467 = vadd.f32 %v5403, 1.0
        %v5468 = vadd.f32 %v5404, 1.0
        %v5469 = vadd.f32 %v5405, 1.0
        %v5470 = vadd.f32 %v5406, 1.0
        %v5471 = vadd.f32 %v5407, 1.0
        %v5472 = vadd.f32 %v5408, 1.0
        %v5473 = vadd.f32 %v5409, 1.0
        %v5474 = vadd.f32 %v5410, 1.0
        %v5475 = vadd.f32 %v5411, 1.0
        %v5476 = vadd.f32 %v5412, 1.0
        %v5477 = vadd.f32 %v5413, 1.0
        %v5478 = vadd.f32 %v5414, 1.0
        %v5479 = vadd.f32 %v5415, 1.0
        %v5480 = vadd.f32 %v5416, 1.0
        %v5481 = vadd.f32 %v5417, 1.0
        %v5482 = vadd.f32 %v5418, 1.0
        %v5483 = vadd.f32 %v5419, 1.0
        %v5484 = vadd.f32 %v5420, 1.0
        %v5485 = vadd.f32 %v5421, 1.0
        %v5486 = vadd.f32 %v5422, 1.0
        %v5487 = vadd.f32 %v5423, 1.0
        %v5488 = vadd.f32 %v5424, 1.0
        %v5489 = vadd.f32 %v5425, 1.0
        %v5490 = vadd.f32 %v5426, 1.0
        %v5491 = vadd.f32 %v5427, 1.0
        %v5492 = vadd.f32 %v5428, 1.0
        %v5493 = vadd.f32 %v5429, 1.0
        %v5494 = vadd.f32 %v5430, 1.0
        %v5495 = vadd.f32 %v5431, 1.0
        %v5496 = vadd.f32 %v5432, 1.0
        %v5497 = vadd.f32 %v5433, 1.0
        %v5498 = vadd.f32 %v5434, 1.0
        %v5499 = vadd.f32 %v5435, 1.0
        %v5500 = vadd.f32 %v5436, 1.0
        %v5501 = vadd.f32 %v5437, 1.0
        %v5502 = vadd.f32 %v5438, 1.0
        %v5503 = vadd.f32 %v5439, 1.0
        %v5504 = vadd.f32 %v5440, 1.0
        %v5505 = vadd.f32 %v5441, 1.0
        %v5506 = vadd.f32 %v5442, 1.0
        %v5507 = vadd.f32 %v5443, 1.0
        %v5508 = vadd.f32 %v5444, 1.0
        %v5509 = vadd.f32 %v5445, 1.0
        %v5510 = vadd.f32 %v5446, 1.0
        %v5511 = vmul.f32 %v4999, %v5447
        %v5512 = vmul.f32 %v5000, %v5448
        %v5513 = vmul.f32 %v5001, %v5449
        %v5514 = vmul.f32 %v5002, %v5450
        %v5515 = vmul.f32 %v5003, %v5451
        %v5516 = vmul.f32 %v5004, %v5452
        %v5517 = vmul.f32 %v5005, %v5453
        %v5518 = vmul.f32 %v5006, %v5454
        %v5519 = vmul.f32 %v5007, %v5455
        %v5520 = vmul.f32 %v5008, %v5456
        %v5521 = vmul.f32 %v5009, %v5457
        %v5522 = vmul.f32 %v5010, %v5458
        %v5523 = vmul.f32 %v5011, %v5459
        %v5524 = vmul.f32 %v5012, %v5460
        %v5525 = vmul.f32 %v5013, %v5461
        %v5526 = vmul.f32 %v5014, %v5462
        %v5527 = vmul.f32 %v5015, %v5463
        %v5528 = vmul.f32 %v5016, %v5464
        %v5529 = vmul.f32 %v5017, %v5465
        %v5530 = vmul.f32 %v5018, %v5466
        %v5531 = vmul.f32 %v5019, %v5467
        %v5532 = vmul.f32 %v5020, %v5468
        %v5533 = vmul.f32 %v5021, %v5469
        %v5534 = vmul.f32 %v5022, %v5470
        %v5535 = vmul.f32 %v5023, %v5471
        %v5536 = vmul.f32 %v5024, %v5472
        %v5537 = vmul.f32 %v5025, %v5473
        %v5538 = vmul.f32 %v5026, %v5474
        %v5539 = vmul.f32 %v5027, %v5475
        %v5540 = vmul.f32 %v5028, %v5476
        %v5541 = vmul.f32 %v5029, %v5477
        %v5542 = vmul.f32 %v5030, %v5478
        %v5543 = vmul.f32 %v5031, %v5479
        %v5544 = vmul.f32 %v5032, %v5480
        %v5545 = vmul.f32 %v5033, %v5481
        %v5546 = vmul.f32 %v5034, %v5482
        %v5547 = vmul.f32 %v5035, %v5483
        %v5548 = vmul.f32 %v5036, %v5484
        %v5549 = vmul.f32 %v5037, %v5485
        %v5550 = vmul.f32 %v5038, %v5486
        %v5551 = vmul.f32 %v5039, %v5487
        %v5552 = vmul.f32 %v5040, %v5488
        %v5553 = vmul.f32 %v5041, %v5489
        %v5554 = vmul.f32 %v5042, %v5490
        %v5555 = vmul.f32 %v5043, %v5491
        %v5556 = vmul.f32 %v5044, %v5492
        %v5557 = vmul.f32 %v5045, %v5493
        %v5558 = vmul.f32 %v5046, %v5494
        %v5559 = vmul.f32 %v5047, %v5495
        %v5560 = vmul.f32 %v5048, %v5496
        %v5561 = vmul.f32 %v5049, %v5497
        %v5562 = vmul.f32 %v5050, %v5498
        %v5563 = vmul.f32 %v5051, %v5499
        %v5564 = vmul.f32 %v5052, %v5500
        %v5565 = vmul.f32 %v5053, %v5501
        %v5566 = vmul.f32 %v5054, %v5502
        %v5567 = vmul.f32 %v5055, %v5503
        %v5568 = vmul.f32 %v5056, %v5504
        %v5569 = vmul.f32 %v5057, %v5505
        %v5570 = vmul.f32 %v5058, %v5506
        %v5571 = vmul.f32 %v5059, %v5507
        %v5572 = vmul.f32 %v5060, %v5508
        %v5573 = vmul.f32 %v5061, %v5509
        %v5574 = vmul.f32 %v5062, %v5510
        %v5575 = vld [vmem:[#allocation13] sm:$0xff]
        %v5576 = vld [vmem:[#allocation13 + $0x8] sm:$0xff]
        %v5577 = vld [vmem:[#allocation13 + $0x10] sm:$0xff]
        %v5578 = vld [vmem:[#allocation13 + $0x18] sm:$0xff]
        %v5579 = vld [vmem:[#allocation13 + $0x20] sm:$0xff]
        %v5580 = vld [vmem:[#allocation13 + $0x28] sm:$0xff]
        %v5581 = vld [vmem:[#allocation13 + $0x30] sm:$0xff]
        %v5582 = vld [vmem:[#allocation13 + $0x38] sm:$0xff]
        %v5583 = vld [vmem:[#allocation13 + $0x40] sm:$0xff]
        %v5584 = vld [vmem:[#allocation13 + $0x48] sm:$0xff]
        %v5585 = vld [vmem:[#allocation13 + $0x50] sm:$0xff]
        %v5586 = vld [vmem:[#allocation13 + $0x58] sm:$0xff]
        %v5587 = vld [vmem:[#allocation13 + $0x60] sm:$0xff]
        %v5588 = vld [vmem:[#allocation13 + $0x68] sm:$0xff]
        %v5589 = vld [vmem:[#allocation13 + $0x70] sm:$0xff]
        %v5590 = vld [vmem:[#allocation13 + $0x78] sm:$0xff]
        %v5591 = vld [vmem:[#allocation13 + $0x80] sm:$0xff]
        %v5592 = vld [vmem:[#allocation13 + $0x88] sm:$0xff]
        %v5593 = vld [vmem:[#allocation13 + $0x90] sm:$0xff]
        %v5594 = vld [vmem:[#allocation13 + $0x98] sm:$0xff]
        %v5595 = vld [vmem:[#allocation13 + $0xa0] sm:$0xff]
        %v5596 = vld [vmem:[#allocation13 + $0xa8] sm:$0xff]
        %v5597 = vld [vmem:[#allocation13 + $0xb0] sm:$0xff]
        %v5598 = vld [vmem:[#allocation13 + $0xb8] sm:$0xff]
        %v5599 = vld [vmem:[#allocation13 + $0xc0] sm:$0xff]
        %v5600 = vld [vmem:[#allocation13 + $0xc8] sm:$0xff]
        %v5601 = vld [vmem:[#allocation13 + $0xd0] sm:$0xff]
        %v5602 = vld [vmem:[#allocation13 + $0xd8] sm:$0xff]
        %v5603 = vld [vmem:[#allocation13 + $0xe0] sm:$0xff]
        %v5604 = vld [vmem:[#allocation13 + $0xe8] sm:$0xff]
        %v5605 = vld [vmem:[#allocation13 + $0xf0] sm:$0xff]
        %v5606 = vld [vmem:[#allocation13 + $0xf8] sm:$0xff]
        %v5607 = vld [vmem:[#allocation13 + $0x100] sm:$0xff]
        %v5608 = vld [vmem:[#allocation13 + $0x108] sm:$0xff]
        %v5609 = vld [vmem:[#allocation13 + $0x110] sm:$0xff]
        %v5610 = vld [vmem:[#allocation13 + $0x118] sm:$0xff]
        %v5611 = vld [vmem:[#allocation13 + $0x120] sm:$0xff]
        %v5612 = vld [vmem:[#allocation13 + $0x128] sm:$0xff]
        %v5613 = vld [vmem:[#allocation13 + $0x130] sm:$0xff]
        %v5614 = vld [vmem:[#allocation13 + $0x138] sm:$0xff]
        %v5615 = vld [vmem:[#allocation13 + $0x140] sm:$0xff]
        %v5616 = vld [vmem:[#allocation13 + $0x148] sm:$0xff]
        %v5617 = vld [vmem:[#allocation13 + $0x150] sm:$0xff]
        %v5618 = vld [vmem:[#allocation13 + $0x158] sm:$0xff]
        %v5619 = vld [vmem:[#allocation13 + $0x160] sm:$0xff]
        %v5620 = vld [vmem:[#allocation13 + $0x168] sm:$0xff]
        %v5621 = vld [vmem:[#allocation13 + $0x170] sm:$0xff]
        %v5622 = vld [vmem:[#allocation13 + $0x178] sm:$0xff]
        %v5623 = vld [vmem:[#allocation13 + $0x180] sm:$0xff]
        %v5624 = vld [vmem:[#allocation13 + $0x188] sm:$0xff]
        %v5625 = vld [vmem:[#allocation13 + $0x190] sm:$0xff]
        %v5626 = vld [vmem:[#allocation13 + $0x198] sm:$0xff]
        %v5627 = vld [vmem:[#allocation13 + $0x1a0] sm:$0xff]
        %v5628 = vld [vmem:[#allocation13 + $0x1a8] sm:$0xff]
        %v5629 = vld [vmem:[#allocation13 + $0x1b0] sm:$0xff]
        %v5630 = vld [vmem:[#allocation13 + $0x1b8] sm:$0xff]
        %v5631 = vld [vmem:[#allocation13 + $0x1c0] sm:$0xff]
        %v5632 = vld [vmem:[#allocation13 + $0x1c8] sm:$0xff]
        %v5633 = vld [vmem:[#allocation13 + $0x1d0] sm:$0xff]
        %v5634 = vld [vmem:[#allocation13 + $0x1d8] sm:$0xff]
        %v5635 = vld [vmem:[#allocation13 + $0x1e0] sm:$0xff]
        %v5636 = vld [vmem:[#allocation13 + $0x1e8] sm:$0xff]
        %v5637 = vld [vmem:[#allocation13 + $0x1f0] sm:$0xff]
        %v5638 = vld [vmem:[#allocation13 + $0x1f8] sm:$0xff]
        %v5639 = vld [vmem:[%s16] sm:$0x1]
        %v5641 = vlaneseq
        %v5642 = vshrl.u32 %v5641, 7
        %v5643 = vsub.s32 0, %v5642
        %v5644 = vrot.slane %v5639, %v5643
        %5646 = vmatprep.subr.mxu0 0.0
        %5647 = vmatpush1.msra.mxu0 %v5575
        %5648 = vmatprep.subr.mxu0 0.0
        %5649 = vmatpush1.msra.mxu0 %v5576
        %5650 = vmatprep.subr.mxu0 0.0
        %5651 = vmatpush1.msra.mxu0 %v5577
        %5652 = vmatprep.subr.mxu0 0.0
        %5653 = vmatpush1.msra.mxu0 %v5578
        %5654 = vmatprep.subr.mxu0 0.0
        %5655 = vmatpush1.msra.mxu0 %v5579
        %5656 = vmatprep.subr.mxu0 0.0
        %5657 = vmatpush1.msra.mxu0 %v5580
        %5658 = vmatprep.subr.mxu0 0.0
        %5659 = vmatpush1.msra.mxu0 %v5581
        %5660 = vmatprep.subr.mxu0 0.0
        %5661 = vmatpush1.msra.mxu0 %v5582
        %5662 = vmatprep.subr.mxu0 0.0
        %5663 = vmatpush1.msra.mxu0 %v5583
        %5664 = vmatprep.subr.mxu0 0.0
        %5665 = vmatpush1.msra.mxu0 %v5584
        %5666 = vmatprep.subr.mxu0 0.0
        %5667 = vmatpush1.msra.mxu0 %v5585
        %5668 = vmatprep.subr.mxu0 0.0
        %5669 = vmatpush1.msra.mxu0 %v5586
        %5670 = vmatprep.subr.mxu0 0.0
        %5671 = vmatpush1.msra.mxu0 %v5587
        %5672 = vmatprep.subr.mxu0 0.0
        %5673 = vmatpush1.msra.mxu0 %v5588
        %5674 = vmatprep.subr.mxu0 0.0
        %5675 = vmatpush1.msra.mxu0 %v5589
        %5676 = vmatprep.subr.mxu0 0.0
        %5677 = vmatpush1.msra.mxu0 %v5590
        %5678 = vmatprep.subr.mxu0 0.0
        %5679 = vmatpush1.msra.mxu0 %v5591
        %5680 = vmatprep.subr.mxu0 0.0
        %5681 = vmatpush1.msra.mxu0 %v5592
        %5682 = vmatprep.subr.mxu0 0.0
        %5683 = vmatpush1.msra.mxu0 %v5593
        %5684 = vmatprep.subr.mxu0 0.0
        %5685 = vmatpush1.msra.mxu0 %v5594
        %5686 = vmatprep.subr.mxu0 0.0
        %5687 = vmatpush1.msra.mxu0 %v5595
        %5688 = vmatprep.subr.mxu0 0.0
        %5689 = vmatpush1.msra.mxu0 %v5596
        %5690 = vmatprep.subr.mxu0 0.0
        %5691 = vmatpush1.msra.mxu0 %v5597
        %5692 = vmatprep.subr.mxu0 0.0
        %5693 = vmatpush1.msra.mxu0 %v5598
        %5694 = vmatprep.subr.mxu0 0.0
        %5695 = vmatpush1.msra.mxu0 %v5599
        %5696 = vmatprep.subr.mxu0 0.0
        %5697 = vmatpush1.msra.mxu0 %v5600
        %5698 = vmatprep.subr.mxu0 0.0
        %5699 = vmatpush1.msra.mxu0 %v5601
        %5700 = vmatprep.subr.mxu0 0.0
        %5701 = vmatpush1.msra.mxu0 %v5602
        %5702 = vmatprep.subr.mxu0 0.0
        %5703 = vmatpush1.msra.mxu0 %v5603
        %5704 = vmatprep.subr.mxu0 0.0
        %5705 = vmatpush1.msra.mxu0 %v5604
        %5706 = vmatprep.subr.mxu0 0.0
        %5707 = vmatpush1.msra.mxu0 %v5605
        %5708 = vmatprep.subr.mxu0 0.0
        %5709 = vmatpush1.msra.mxu0 %v5606
        %5710 = vmatprep.mubr.f32.mxu0 %v5512
        %5711 = vmatmul.mubr.f32.gmra.mrb[0].mxu0 %v5511
        %v5712 = vpop.f32.mrb[0].mxu0
        %v5713 = vadd.f32 %v5644, %v5712
        %v5714 = vpop.f32.mrb[0].mxu0
        %5715 = vmatprep.mubr.f32.mxu0 %v5516
        %5716 = vmatmul.mubr.f32.gmra.mrb[0].mxu0 %v5515
        %v5717 = vpop.f32.mrb[0].mxu0
        %v5718 = vadd.f32 %v5644, %v5717
        %v5719 = vpop.f32.mrb[0].mxu0
        %5720 = vmatprep.mubr.f32.mxu0 %v5520
        %5721 = vmatmul.mubr.f32.gmra.mrb[0].mxu0 %v5519
        %v5722 = vpop.f32.mrb[0].mxu0
        %v5723 = vadd.f32 %v5644, %v5722
        %v5724 = vpop.f32.mrb[0].mxu0
        %5725 = vmatprep.mubr.f32.mxu0 %v5524
        %5726 = vmatmul.mubr.f32.gmra.mrb[0].mxu0 %v5523
        %v5727 = vpop.f32.mrb[0].mxu0
        %v5728 = vadd.f32 %v5644, %v5727
        %v5729 = vpop.f32.mrb[0].mxu0
        %5730 = vmatprep.mubr.f32.mxu0 %v5528
        %5731 = vmatmul.mubr.f32.gmra.mrb[0].mxu0 %v5527
        %v5732 = vpop.f32.mrb[0].mxu0
        %v5733 = vadd.f32 %v5644, %v5732
        %v5734 = vpop.f32.mrb[0].mxu0
        %5735 = vmatprep.mubr.f32.mxu0 %v5532
        %5736 = vmatmul.mubr.f32.gmra.mrb[0].mxu0 %v5531
        %v5737 = vpop.f32.mrb[0].mxu0
        %v5738 = vadd.f32 %v5644, %v5737
        %v5739 = vpop.f32.mrb[0].mxu0
        %5740 = vmatprep.mubr.f32.mxu0 %v5536
        %5741 = vmatmul.mubr.f32.gmra.mrb[0].mxu0 %v5535
        %v5742 = vpop.f32.mrb[0].mxu0
        %v5743 = vadd.f32 %v5644, %v5742
        %v5744 = vpop.f32.mrb[0].mxu0
        %5745 = vmatprep.mubr.f32.mxu0 %v5540
        %5746 = vmatmul.mubr.f32.gmra.mrb[0].mxu0 %v5539
        %v5747 = vpop.f32.mrb[0].mxu0
        %v5748 = vadd.f32 %v5644, %v5747
        %v5749 = vpop.f32.mrb[0].mxu0
        %5750 = vmatprep.mubr.f32.mxu0 %v5544
        %5751 = vmatmul.mubr.f32.gmra.mrb[0].mxu0 %v5543
        %v5752 = vpop.f32.mrb[0].mxu0
        %v5753 = vadd.f32 %v5644, %v5752
        %v5754 = vpop.f32.mrb[0].mxu0
        %5755 = vmatprep.mubr.f32.mxu0 %v5548
        %5756 = vmatmul.mubr.f32.gmra.mrb[0].mxu0 %v5547
        %v5757 = vpop.f32.mrb[0].mxu0
        %v5758 = vadd.f32 %v5644, %v5757
        %v5759 = vpop.f32.mrb[0].mxu0
        %5760 = vmatprep.mubr.f32.mxu0 %v5552
        %5761 = vmatmul.mubr.f32.gmra.mrb[0].mxu0 %v5551
        %v5762 = vpop.f32.mrb[0].mxu0
        %v5763 = vadd.f32 %v5644, %v5762
        %v5764 = vpop.f32.mrb[0].mxu0
        %5765 = vmatprep.mubr.f32.mxu0 %v5556
        %5766 = vmatmul.mubr.f32.gmra.mrb[0].mxu0 %v5555
        %v5767 = vpop.f32.mrb[0].mxu0
        %v5768 = vadd.f32 %v5644, %v5767
        %v5769 = vpop.f32.mrb[0].mxu0
        %5770 = vmatprep.mubr.f32.mxu0 %v5560
        %5771 = vmatmul.mubr.f32.gmra.mrb[0].mxu0 %v5559
        %v5772 = vpop.f32.mrb[0].mxu0
        %v5773 = vadd.f32 %v5644, %v5772
        %v5774 = vpop.f32.mrb[0].mxu0
        %5775 = vmatprep.mubr.f32.mxu0 %v5564
        %5776 = vmatmul.mubr.f32.gmra.mrb[0].mxu0 %v5563
        %v5777 = vpop.f32.mrb[0].mxu0
        %v5778 = vadd.f32 %v5644, %v5777
        %v5779 = vpop.f32.mrb[0].mxu0
        %5780 = vmatprep.mubr.f32.mxu0 %v5568
        %5781 = vmatmul.mubr.f32.gmra.mrb[0].mxu0 %v5567
        %v5782 = vpop.f32.mrb[0].mxu0
        %v5783 = vadd.f32 %v5644, %v5782
        %v5784 = vpop.f32.mrb[0].mxu0
        %5785 = vmatprep.mubr.f32.mxu0 %v5572
        %5786 = vmatmul.mubr.f32.gmra.mrb[0].mxu0 %v5571
        %v5787 = vpop.f32.mrb[0].mxu0
        %v5788 = vadd.f32 %v5644, %v5787
        %v5789 = vpop.f32.mrb[0].mxu0
        %5790 = vdwg.mxu0
        %5791 = vmatprep.subr.mxu0 0.0
        %5792 = vmatpush1.msra.mxu0 %v5607
        %5793 = vmatprep.subr.mxu0 0.0
        %5794 = vmatpush1.msra.mxu0 %v5608
        %5795 = vmatprep.subr.mxu0 0.0
        %5796 = vmatpush1.msra.mxu0 %v5609
        %5797 = vmatprep.subr.mxu0 0.0
        %5798 = vmatpush1.msra.mxu0 %v5610
        %5799 = vmatprep.subr.mxu0 0.0
        %5800 = vmatpush1.msra.mxu0 %v5611
        %5801 = vmatprep.subr.mxu0 0.0
        %5802 = vmatpush1.msra.mxu0 %v5612
        %5803 = vmatprep.subr.mxu0 0.0
        %5804 = vmatpush1.msra.mxu0 %v5613
        %5805 = vmatprep.subr.mxu0 0.0
        %5806 = vmatpush1.msra.mxu0 %v5614
        %5807 = vmatprep.subr.mxu0 0.0
        %5808 = vmatpush1.msra.mxu0 %v5615
        %5809 = vmatprep.subr.mxu0 0.0
        %5810 = vmatpush1.msra.mxu0 %v5616
        %5811 = vmatprep.subr.mxu0 0.0
        %5812 = vmatpush1.msra.mxu0 %v5617
        %5813 = vmatprep.subr.mxu0 0.0
        %5814 = vmatpush1.msra.mxu0 %v5618
        %5815 = vmatprep.subr.mxu0 0.0
        %5816 = vmatpush1.msra.mxu0 %v5619
        %5817 = vmatprep.subr.mxu0 0.0
        %5818 = vmatpush1.msra.mxu0 %v5620
        %5819 = vmatprep.subr.mxu0 0.0
        %5820 = vmatpush1.msra.mxu0 %v5621
        %5821 = vmatprep.subr.mxu0 0.0
        %5822 = vmatpush1.msra.mxu0 %v5622
        %5823 = vmatprep.subr.mxu0 0.0
        %5824 = vmatpush1.msra.mxu0 %v5623
        %5825 = vmatprep.subr.mxu0 0.0
        %5826 = vmatpush1.msra.mxu0 %v5624
        %5827 = vmatprep.subr.mxu0 0.0
        %5828 = vmatpush1.msra.mxu0 %v5625
        %5829 = vmatprep.subr.mxu0 0.0
        %5830 = vmatpush1.msra.mxu0 %v5626
        %5831 = vmatprep.subr.mxu0 0.0
        %5832 = vmatpush1.msra.mxu0 %v5627
        %5833 = vmatprep.subr.mxu0 0.0
        %5834 = vmatpush1.msra.mxu0 %v5628
        %5835 = vmatprep.subr.mxu0 0.0
        %5836 = vmatpush1.msra.mxu0 %v5629
        %5837 = vmatprep.subr.mxu0 0.0
        %5838 = vmatpush1.msra.mxu0 %v5630
        %5839 = vmatprep.subr.mxu0 0.0
        %5840 = vmatpush1.msra.mxu0 %v5631
        %5841 = vmatprep.subr.mxu0 0.0
        %5842 = vmatpush1.msra.mxu0 %v5632
        %5843 = vmatprep.subr.mxu0 0.0
        %5844 = vmatpush1.msra.mxu0 %v5633
        %5845 = vmatprep.subr.mxu0 0.0
        %5846 = vmatpush1.msra.mxu0 %v5634
        %5847 = vmatprep.subr.mxu0 0.0
        %5848 = vmatpush1.msra.mxu0 %v5635
        %5849 = vmatprep.subr.mxu0 0.0
        %5850 = vmatpush1.msra.mxu0 %v5636
        %5851 = vmatprep.subr.mxu0 0.0
        %5852 = vmatpush1.msra.mxu0 %v5637
        %5853 = vmatprep.subr.mxu0 0.0
        %5854 = vmatpush1.msra.mxu0 %v5638
        %5855 = vmatprep.mubr.f32.mxu0 %v5514
        %5856 = vmatmul.mubr.f32.gmra.mrb[0].mxu0 %v5513
        %v5857 = vpop.f32.mrb[0].mxu0
        %v5858 = vadd.f32 %v5713, %v5857
        %v5859 = vpop.f32.mrb[0].mxu0
        %5860 = vmatprep.mubr.f32.mxu0 %v5518
        %5861 = vmatmul.mubr.f32.gmra.mrb[0].mxu0 %v5517
        %v5862 = vpop.f32.mrb[0].mxu0
        %v5863 = vadd.f32 %v5718, %v5862
        %v5864 = vpop.f32.mrb[0].mxu0
        %5865 = vmatprep.mubr.f32.mxu0 %v5522
        %5866 = vmatmul.mubr.f32.gmra.mrb[0].mxu0 %v5521
        %v5867 = vpop.f32.mrb[0].mxu0
        %v5868 = vadd.f32 %v5723, %v5867
        %v5869 = vpop.f32.mrb[0].mxu0
        %5870 = vmatprep.mubr.f32.mxu0 %v5526
        %5871 = vmatmul.mubr.f32.gmra.mrb[0].mxu0 %v5525
        %v5872 = vpop.f32.mrb[0].mxu0
        %v5873 = vadd.f32 %v5728, %v5872
        %v5874 = vpop.f32.mrb[0].mxu0
        %5875 = vmatprep.mubr.f32.mxu0 %v5530
        %5876 = vmatmul.mubr.f32.gmra.mrb[0].mxu0 %v5529
        %v5877 = vpop.f32.mrb[0].mxu0
        %v5878 = vadd.f32 %v5733, %v5877
        %v5879 = vpop.f32.mrb[0].mxu0
        %5880 = vmatprep.mubr.f32.mxu0 %v5534
        %5881 = vmatmul.mubr.f32.gmra.mrb[0].mxu0 %v5533
        %v5882 = vpop.f32.mrb[0].mxu0
        %v5883 = vadd.f32 %v5738, %v5882
        %v5884 = vpop.f32.mrb[0].mxu0
        %5885 = vmatprep.mubr.f32.mxu0 %v5538
        %5886 = vmatmul.mubr.f32.gmra.mrb[0].mxu0 %v5537
        %v5887 = vpop.f32.mrb[0].mxu0
        %v5888 = vadd.f32 %v5743, %v5887
        %v5889 = vpop.f32.mrb[0].mxu0
        %5890 = vmatprep.mubr.f32.mxu0 %v5542
        %5891 = vmatmul.mubr.f32.gmra.mrb[0].mxu0 %v5541
        %v5892 = vpop.f32.mrb[0].mxu0
        %v5893 = vadd.f32 %v5748, %v5892
        %v5894 = vpop.f32.mrb[0].mxu0
        %5895 = vmatprep.mubr.f32.mxu0 %v5546
        %5896 = vmatmul.mubr.f32.gmra.mrb[0].mxu0 %v5545
        %v5897 = vpop.f32.mrb[0].mxu0
        %v5898 = vadd.f32 %v5753, %v5897
        %v5899 = vpop.f32.mrb[0].mxu0
        %5900 = vmatprep.mubr.f32.mxu0 %v5550
        %5901 = vmatmul.mubr.f32.gmra.mrb[0].mxu0 %v5549
        %v5902 = vpop.f32.mrb[0].mxu0
        %v5903 = vadd.f32 %v5758, %v5902
        %v5904 = vpop.f32.mrb[0].mxu0
        %5905 = vmatprep.mubr.f32.mxu0 %v5554
        %5906 = vmatmul.mubr.f32.gmra.mrb[0].mxu0 %v5553
        %v5907 = vpop.f32.mrb[0].mxu0
        %v5908 = vadd.f32 %v5763, %v5907
        %v5909 = vpop.f32.mrb[0].mxu0
        %5910 = vmatprep.mubr.f32.mxu0 %v5558
        %5911 = vmatmul.mubr.f32.gmra.mrb[0].mxu0 %v5557
        %v5912 = vpop.f32.mrb[0].mxu0
        %v5913 = vadd.f32 %v5768, %v5912
        %v5914 = vpop.f32.mrb[0].mxu0
        %5915 = vmatprep.mubr.f32.mxu0 %v5562
        %5916 = vmatmul.mubr.f32.gmra.mrb[0].mxu0 %v5561
        %v5917 = vpop.f32.mrb[0].mxu0
        %v5918 = vadd.f32 %v5773, %v5917
        %v5919 = vpop.f32.mrb[0].mxu0
        %5920 = vmatprep.mubr.f32.mxu0 %v5566
        %5921 = vmatmul.mubr.f32.gmra.mrb[0].mxu0 %v5565
        %v5922 = vpop.f32.mrb[0].mxu0
        %v5923 = vadd.f32 %v5778, %v5922
        %v5924 = vpop.f32.mrb[0].mxu0
        %5925 = vmatprep.mubr.f32.mxu0 %v5570
        %5926 = vmatmul.mubr.f32.gmra.mrb[0].mxu0 %v5569
        %v5927 = vpop.f32.mrb[0].mxu0
        %v5928 = vadd.f32 %v5783, %v5927
        %v5929 = vpop.f32.mrb[0].mxu0
        %5930 = vmatprep.mubr.f32.mxu0 %v5574
        %5931 = vmatmul.mubr.f32.gmra.mrb[0].mxu0 %v5573
        %v5932 = vpop.f32.mrb[0].mxu0
        %v5933 = vadd.f32 %v5788, %v5932
        %v5934 = vpop.f32.mrb[0].mxu0
        %5935 = vdwg.mxu0
        %v5936 = vadd.f32 %v4353, %v5858
        %v5937 = vadd.f32 %v4354, %v5863
        %v5938 = vadd.f32 %v4355, %v5868
        %v5939 = vadd.f32 %v4356, %v5873
        %v5940 = vadd.f32 %v4357, %v5878
        %v5941 = vadd.f32 %v4358, %v5883
        %v5942 = vadd.f32 %v4359, %v5888
        %v5943 = vadd.f32 %v4360, %v5893
        %v5944 = vadd.f32 %v4361, %v5898
        %v5945 = vadd.f32 %v4362, %v5903
        %v5946 = vadd.f32 %v4363, %v5908
        %v5947 = vadd.f32 %v4364, %v5913
        %v5948 = vadd.f32 %v4365, %v5918
        %v5949 = vadd.f32 %v4366, %v5923
        %v5950 = vadd.f32 %v4367, %v5928
        %v5951 = vadd.f32 %v4368, %v5933
        %5952 = vst [vmem:[%s684] sm:$0xff] %v5936
        %5953 = vst [vmem:[%s684 + $0x8] sm:$0xff] %v5937
        %5954 = vst [vmem:[%s684 + $0x10] sm:$0xff] %v5938
        %5955 = vst [vmem:[%s684 + $0x18] sm:$0xff] %v5939
        %5956 = vst [vmem:[%s684 + $0x20] sm:$0xff] %v5940
        %5957 = vst [vmem:[%s684 + $0x28] sm:$0xff] %v5941
        %5958 = vst [vmem:[%s684 + $0x30] sm:$0xff] %v5942
        %5959 = vst [vmem:[%s684 + $0x38] sm:$0xff] %v5943
        %5960 = vst [vmem:[%s684 + $0x40] sm:$0xff] %v5944
        %5961 = vst [vmem:[%s684 + $0x48] sm:$0xff] %v5945
        %5962 = vst [vmem:[%s684 + $0x50] sm:$0xff] %v5946
        %5963 = vst [vmem:[%s684 + $0x58] sm:$0xff] %v5947
        %5964 = vst [vmem:[%s684 + $0x60] sm:$0xff] %v5948
        %5965 = vst [vmem:[%s684 + $0x68] sm:$0xff] %v5949
        %5966 = vst [vmem:[%s684 + $0x70] sm:$0xff] %v5950
        %5967 = vst [vmem:[%s684 + $0x78] sm:$0xff] %v5951
        %s5968 = sand.u32 %s412, 1
        %s5969 = scalar_lea.sflag [#allocation4], %s5968
        %s5970 = sand.u32 %s412, 1
        %s5971 = smul.addr %s5970, 128
        %s5972 = scalar_lea.vmem [#allocation14], %s5971
        %s5973 = sand.u32 %s438, 1
        %s5974 = scalar_lea.sflag [#allocation16], %s5973
        %s5975 = sand.u32 %s438, 1
        %s5976 = smul.addr %s5975, 512
        %s5977 = scalar_lea.vmem [#allocation15], %s5976
        // Predicated region
        $region117: #{tpu_custom_call.1} parent=87 // pred_check
          %p5978 = pneg %p422
        $region118: #{tpu_custom_call.1} parent=87 // pred_check_branch
          %5980 = sbr.rel (%p5978) target = $region120
        $region119: #{tpu_custom_call.1} parent=87 // pred_region
          %s5982 = ssub.s32 2048, 2048
          %5983 = vsyncadd %s5969, %s5982
          %s5984 = smul.addr %s42, 16
          %s5985 = smul.addr %s5984, 128
          %s5986 = scalar_lea.hbm %s17, %s5985
          %s5987 = sshll.u32 %s5972, 4
          %s5988 = int_to_ptr.vmem [resolvable:$true] %s5987
          %5993 = dma.vmem_to_hbm [thread:$0]  %s5988, 2048, %s5986, %s5969, 128, 128, 8
        $region120: #{tpu_custom_call.1} parent=87 // pred_fallthru
          _
        // Predicated region
        $region121: #{tpu_custom_call.1} parent=87 // pred_check
          %p5994 = pneg %p448
        $region122: #{tpu_custom_call.1} parent=87 // pred_check_branch
          %5996 = sbr.rel (%p5994) target = $region124
        $region123: #{tpu_custom_call.1} parent=87 // pred_region
          %s5998 = ssub.s32 8192, 8192
          %5999 = vsyncadd %s5974, %s5998
          %s6000 = smul.addr %s42, 64
          %s6001 = smul.addr %s6000, 128
          %s6002 = scalar_lea.hbm %s18, %s6001
          %s6003 = sshll.u32 %s5977, 4
          %s6004 = int_to_ptr.vmem [resolvable:$true] %s6003
          %6009 = dma.vmem_to_hbm [thread:$0]  %s6004, 8192, %s6002, %s5974, 128, 128, 8
        $region124: #{tpu_custom_call.1} parent=87 // pred_fallthru
          _
      $region88: #{tpu_custom_call.1} parent=5 // pred_fallthru
        _
      %p6010 = scmp.le.s32.totalorder 2, %s37
      // Predicated region
      $region125: #{tpu_custom_call.1} parent=5 // pred_check
        %p6011 = pneg %p6010
      $region126: #{tpu_custom_call.1} parent=5 // pred_check_branch
        %6013 = sbr.rel (%p6011) target = $region128
      $region127: #{tpu_custom_call.1} parent=5 // pred_region
        %s6014 = ssub.s32 %s37, 2
        // Predicated region
        $region129: #{tpu_custom_call.1} parent=127 // pred_check
          %p6015 = pneg %p428
        $region130: #{tpu_custom_call.1} parent=127 // pred_check_branch
          %6017 = sbr.rel (%p6015) target = $region132
        $region131: #{tpu_custom_call.1} parent=127 // pred_region
          %s6018 = sand.u32 %s413, 1
          %s6019 = scalar_lea.sflag [#allocation4], %s6018
          %s6020 = sand.u32 %s413, 1
          %s6021 = smul.addr %s6020, 128
          %s6022 = scalar_lea.vmem [#allocation14], %s6021
          %6023 = dma.done %s6019, 2048
        $region132: #{tpu_custom_call.1} parent=127 // pred_fallthru
          _
        // Predicated region
        $region133: #{tpu_custom_call.1} parent=127 // pred_check
          %p6024 = pneg %p454
        $region134: #{tpu_custom_call.1} parent=127 // pred_check_branch
          %6026 = sbr.rel (%p6024) target = $region136
        $region135: #{tpu_custom_call.1} parent=127 // pred_region
          %s6027 = sand.u32 %s439, 1
          %s6028 = scalar_lea.sflag [#allocation16], %s6027
          %s6029 = sand.u32 %s439, 1
          %s6030 = smul.addr %s6029, 512
          %s6031 = scalar_lea.vmem [#allocation15], %s6030
          %6032 = dma.done %s6028, 8192
        $region136: #{tpu_custom_call.1} parent=127 // pred_fallthru
          _
      $region128: #{tpu_custom_call.1} parent=5 // pred_fallthru
        _
    $region6: #{tpu_custom_call.1} parent=1 // loop_footer
      %s41 = sadd.s32 1, %s37
    $region7: #{tpu_custom_call.1} parent=1 // loop_footer_branch
      %36 = sbr.rel target = $region3
    $region8: #{tpu_custom_call.1} parent=1 // loop_exit
      _
    %6033 = vsyncpa [#allocation3], 1
    %s6034 = scalar_lea.sflag [#allocation3], 1
    %6035 = vsyncpa %s6034, 1
    %6036 = vsyncpa [#allocation6], 1
    %6037 = vsyncpa [#allocation9], 1
    %6038 = vsyncpa [#allocation12], 1
    %6039 = vsyncpa [#allocation4], 1
    %s6040 = scalar_lea.sflag [#allocation4], 1
    %6041 = vsyncpa %s6040, 1
    %6042 = vsyncpa [#allocation16], 1
    %s6043 = scalar_lea.sflag [#allocation16], 1
    %6044 = vsyncpa %s6043, 1

</llo_original>
